<compile_context>
chip_gen: v7x
topology: tpu7x:2x2x1
jax: 0.10.0
libtpu: 0.0.40
codegen_flags: <defaults>
</compile_context>

<pallas_src>
import functools

import jax
import jax.numpy as jnp
from jax import lax
from jax.experimental import pallas as pl
from jax.experimental.pallas import tpu as pltpu


def _cdiv(a, b):
    return (a + b - 1) // b


def _round_up(a, b):
    return _cdiv(a, b) * b


def _build_patch(src_ref, pat_ref, nrows, Wp, C, cdt):
    """pat[(r, w), (kh*3+kw)*C + c] = src[r + kh, w + kw - 1, c]  (zero outside [0, Wp)).

    src_ref has nrows + 2 rows (1-row halo above and below the nrows domain).
    Row shifts are free outer-axis slices; column shifts use pltpu.roll on the
    sublane axis (XLU) with the wrapped border column masked to zero.
    """
    full = src_ref[...]                                    # (nrows + 2, Wp, C) f32
    for kw in range(3):
        if kw == 1:
            shifted = full
        else:
            shift = 1 if kw == 0 else Wp - 1               # +1 / -1 pixel (mod Wp)
            shifted = pltpu.roll(full, shift, 1)
            border = 0 if kw == 0 else Wp - 1
            col = lax.broadcasted_iota(jnp.int32, shifted.shape, 1)
            shifted = jnp.where(col == border, jnp.zeros_like(shifted), shifted)
        for kh in range(3):
            tap = kh * 3 + kw
            pat_ref[0:nrows, :, tap * C:(tap + 1) * C] = (
                shifted[kh:kh + nrows].astype(cdt))


def _resblock_kernel(x_ref, halo_ref, w1_ref, b1_ref, w2_ref, b2_ref, o_ref,
                     xs_ref, ms_ref, pat_ref, *,
                     TH, Wp, C, real_w, res_scale, last_zero_row, cdt):
    # x_ref   : (1, TH, Wp, C)     this tile's rows (image rows i*TH .. i*TH+TH-1)
    # halo_ref: (1, 1, 4, Wp, C)   image rows i*TH-2, i*TH-1, i*TH+TH, i*TH+TH+1
    #                              (zero where outside the padded image)
    # w1/w2   : (9C, C)            (kh, kw, ci) folded onto the contraction axis
    # b1/b2   : (1, C)             f32
    # xs_ref  : (TH+4, Wp, C) f32  row-padded input tile (row s = image row i*TH-2+s)
    # ms_ref  : (TH+2, Wp, C) f32  conv1 output (row m = image row i*TH-1+m)
    # pat_ref : (TH+2, Wp, 9C)     im2col patch scratch (reused by both convs)
    i = pl.program_id(1)
    R = TH + 2

    # ---- stage the row-padded input tile (3 aligned outer-axis stores) ----
    xs_ref[0:2] = halo_ref[0, 0, 0:2]
    xs_ref[2:TH + 2] = x_ref[0]
    xs_ref[TH + 2:TH + 4] = halo_ref[0, 0, 2:4]

    # ---- conv1 over rows [-1, TH] (includes the +/-1 row halo conv2 needs) ----
    _build_patch(xs_ref, pat_ref, R, Wp, C, cdt)
    acc1 = jnp.dot(pat_ref[...].reshape(R * Wp, 9 * C), w1_ref[...],
                   preferred_element_type=jnp.float32) + b1_ref[...]
    mid = jnp.where(acc1 >= 0, acc1, 0.1 * acc1)           # LeakyReLU(0.1), f32
    ms_ref[...] = mid.reshape(R, Wp, C)

    # conv2's zero padding must sit at the true image border, not conv1(pad):
    if real_w < Wp:                                        # right image border (W pad)
        ms_ref[:, real_w:Wp, :] = jnp.zeros((R, Wp - real_w, C), jnp.float32)

    @pl.when(i == 0)                                       # image row -1
    def _():
        ms_ref[0:1] = jnp.zeros((1, Wp, C), jnp.float32)

    @pl.when(i == pl.num_programs(1) - 1)                  # image row H
    def _():
        ms_ref[last_zero_row:last_zero_row + 1] = jnp.zeros((1, Wp, C),
                                                            jnp.float32)

    # ---- conv2 over the TH output rows of this tile ----
    _build_patch(ms_ref, pat_ref, TH, Wp, C, cdt)
    acc2 = jnp.dot(pat_ref[0:TH].reshape(TH * Wp, 9 * C), w2_ref[...],
                   preferred_element_type=jnp.float32) + b2_ref[...]

    # ---- residual add and store ----
    o_ref[0] = (x_ref[0] + (res_scale * acc2).reshape(TH, Wp, C)).astype(o_ref.dtype)


def _vmem_capacity():
    try:
        return int(pltpu.get_tpu_info().vmem_capacity_bytes)
    except Exception:
        return 64 * 1024 * 1024          # conservative (v7x-sized) fallback


def _pick_tile_rows(Wp, C, cdt_bytes, budget):
    """Largest TH (multiple of 8) whose per-step VMEM footprint fits the budget."""
    row = Wp * C
    per_row = (4 * row * 4               # in + out blocks, double-buffered, f32
               + row * 4                 # xs staging (f32)
               + row * 4                 # ms staging (f32)
               + 9 * row * cdt_bytes     # im2col patch scratch
               + 8 * row * 4)            # matmul operands / rolled temporaries
    fixed = (2 * 4 * row * 4             # halo blocks, double-buffered
             + 2 * 9 * C * C * cdt_bytes + 2 * C * 4
             + (4 << 20))                # Mosaic internal scratch slack
    th = (budget - fixed) // max(per_row, 1)
    th = int(max(8, min(th, 512)))
    return (th // 8) * 8


def residual_block_nobn(x_nchw, w1, b1, w2, b2, res_scale=1.0, *,
                        tile_rows=None, compute_dtype=jnp.bfloat16):
    """x_nchw: (N, C, H, W) f32.  w: (3, 3, Cin, Cout).  b: (Cout,)."""
    N, C, H, W = x_nchw.shape
    Wp = _round_up(W, 8)
    cdt = compute_dtype
    cdt_bytes = jnp.dtype(cdt).itemsize

    # per-generation VMEM budget (64 MiB on v7x, 128 MiB on v5e/v6e)
    vmem_cap = _vmem_capacity()
    budget = int(vmem_cap * 0.55)

    if tile_rows is None:
        TH = _pick_tile_rows(Wp, C, cdt_bytes, budget)
    else:
        TH = max(8, _round_up(int(tile_rows), 8))
    TH = min(TH, _round_up(H, 8))
    if N * _cdiv(H, TH) < 2 and H > 8:
        # keep >= 2 grid steps so both v7x TensorCores get work
        TH = _round_up(_cdiv(H, 2), 8)

    n_tiles = _cdiv(H, TH)
    H_pad = n_tiles * TH
    # ms row (in the last tile) that corresponds to image row H -> must be zero
    last_zero_row = H - (n_tiles - 1) * TH + 1

    # NCHW -> NHWC (+ zero pad H to a multiple of TH, W to a multiple of 8).
    xh = jnp.transpose(x_nchw, (0, 2, 3, 1))
    if H_pad != H or Wp != W:
        xh = jnp.pad(xh, ((0, 0), (0, H_pad - H), (0, Wp - W), (0, 0)))

    # halo side input (4 rows per tile), built with static slices (no gather):
    #   rows i*TH-2, i*TH-1 (from the previous tile) and i*TH+TH, i*TH+TH+1
    #   (from the next tile); zeros outside the padded image.
    xr = xh.reshape(N, n_tiles, TH, Wp, C)
    z2 = jnp.zeros((N, 1, 2, Wp, C), xh.dtype)
    top = jnp.concatenate([z2, xr[:, :n_tiles - 1, TH - 2:TH]], axis=1)
    bot = jnp.concatenate([xr[:, 1:, 0:2], z2], axis=1)
    halo = jnp.concatenate([top, bot], axis=2)             # (N, n_tiles, 4, Wp, C)

    # weights: (kh, kw, ci, co) -> (9C, C) so each conv is one K=9C matmul.
    w1f = w1.reshape(9 * C, C).astype(cdt)
    w2f = w2.reshape(9 * C, C).astype(cdt)
    b1r = b1.reshape(1, C).astype(jnp.float32)
    b2r = b2.reshape(1, C).astype(jnp.float32)

    # explicit VMEM limit computed from the actual buffer sizes (with headroom)
    row = Wp * C
    est = (4 * TH * row * 4
           + 2 * 4 * row * 4
           + (TH + 4) * row * 4
           + (TH + 2) * row * 4
           + (TH + 2) * Wp * 9 * C * cdt_bytes
           + 2 * 9 * C * C * cdt_bytes + 2 * C * 4
           + 8 * TH * row * 4)
    vmem_limit = int(min(vmem_cap * 0.9, max(est * 1.6, 48 * 1024 * 1024)))

    kernel = functools.partial(
        _resblock_kernel, TH=TH, Wp=Wp, C=C, real_w=W,
        res_scale=float(res_scale), last_zero_row=int(last_zero_row), cdt=cdt)

    out = pl.pallas_call(
        kernel,
        out_shape=jax.ShapeDtypeStruct((N, H_pad, Wp, C), x_nchw.dtype),
        grid_spec=pltpu.PrefetchScalarGridSpec(
            num_scalar_prefetch=0,
            grid=(N, n_tiles),
            in_specs=[
                pl.BlockSpec((1, TH, Wp, C), lambda n, i: (n, i, 0, 0)),
                pl.BlockSpec((1, 1, 4, Wp, C), lambda n, i: (n, i, 0, 0, 0)),
                pl.BlockSpec((9 * C, C), lambda n, i: (0, 0)),
                pl.BlockSpec((1, C), lambda n, i: (0, 0)),
                pl.BlockSpec((9 * C, C), lambda n, i: (0, 0)),
                pl.BlockSpec((1, C), lambda n, i: (0, 0)),
            ],
            out_specs=pl.BlockSpec((1, TH, Wp, C), lambda n, i: (n, i, 0, 0)),
            scratch_shapes=[
                pltpu.VMEM((TH + 4, Wp, C), jnp.float32),    # row-padded input
                pltpu.VMEM((TH + 2, Wp, C), jnp.float32),    # conv1 output
                pltpu.VMEM((TH + 2, Wp, 9 * C), cdt),        # im2col patch
            ],
        ),
        compiler_params=pltpu.CompilerParams(
            dimension_semantics=("parallel", "parallel"),
            vmem_limit_bytes=vmem_limit),
    )(xh, halo, w1f, b1r, w2f, b2r)

    out = out[:, :H, :W, :]
    return jnp.transpose(out, (0, 3, 1, 2))                 # back to NCHW


def init_conv_params(key, nf, scale=0.1):
    """Kaiming normal (fan_in, a=0) * scale, zero bias — matches initialize_weights."""
    fan_in = nf * 3 * 3
    std = (2.0 / fan_in) ** 0.5
    # weight layout used here: (kh, kw, Cin, Cout)
    w = jax.random.normal(key, (3, 3, nf, nf), jnp.float32) * std * scale
    b = jnp.zeros((nf,), jnp.float32)
    return w, b


def _reference(x_nchw, w1, b1, w2, b2, res_scale=1.0):
    # lax conv reference (NCHW, OIHW) for correctness checking.
    w1_oihw = jnp.transpose(w1, (3, 2, 0, 1))
    w2_oihw = jnp.transpose(w2, (3, 2, 0, 1))
    dn = lax.conv_dimension_numbers(x_nchw.shape, w1_oihw.shape,
                                    ("NCHW", "OIHW", "NCHW"))
    y = lax.conv_general_dilated(x_nchw, w1_oihw, (1, 1), ((1, 1), (1, 1)),
                                 dimension_numbers=dn)
    y = y + b1.reshape(1, -1, 1, 1)
    y = jnp.where(y >= 0, y, 0.1 * y)
    y = lax.conv_general_dilated(y, w2_oihw, (1, 1), ((1, 1), (1, 1)),
                                 dimension_numbers=dn)
    y = y + b2.reshape(1, -1, 1, 1)
    return x_nchw + res_scale * y


if __name__ == "__main__":
    # required small shape: x = (2, 4, 16, 16)
    nf, N, H, W = 4, 2, 16, 16
    res_scale = 1.0

    key = jax.random.PRNGKey(0)
    kx, k1, k2 = jax.random.split(key, 3)
    x = jax.random.normal(kx, (N, nf, H, W), jnp.float32)
    w1, b1 = init_conv_params(k1, nf, scale=0.1)
    w2, b2 = init_conv_params(k2, nf, scale=0.1)

    ref = jax.block_until_ready(_reference(x, w1, b1, w2, b2, res_scale))

    # default path: bf16 MXU operands, f32 staging/accumulation
    out = jax.block_until_ready(
        residual_block_nobn(x, w1, b1, w2, b2, res_scale))
    assert out.shape == (N, nf, H, W)
    assert float(jnp.max(jnp.abs(out - ref))) < 5e-3

    # f32 compute path: tight tolerance against the lax.conv reference
    out32 = jax.block_until_ready(
        residual_block_nobn(x, w1, b1, w2, b2, res_scale,
                            compute_dtype=jnp.float32))
    assert float(jnp.max(jnp.abs(out32 - ref))) < 1e-4

    # multi-row-tile + inter-tile halo path (N=1 -> tiler keeps >= 2 row tiles)
    nf2, N2, H2, W2 = 8, 1, 32, 24
    k3, k4, k5 = jax.random.split(jax.random.PRNGKey(1), 3)
    x2 = jax.random.normal(k3, (N2, nf2, H2, W2), jnp.float32)
    w1b, b1b = init_conv_params(k4, nf2, scale=0.1)
    w2b, b2b = init_conv_params(k5, nf2, scale=0.1)
    out2 = jax.block_until_ready(
        residual_block_nobn(x2, w1b, b1b, w2b, b2b, 0.5,
                            compute_dtype=jnp.float32))
    ref2 = jax.block_until_ready(_reference(x2, w1b, b1b, w2b, b2b, 0.5))
    assert float(jnp.max(jnp.abs(out2 - ref2))) < 1e-4

    # short (zero-padded) last row tile: H % tile_rows != 0
    nf3, N3, H3, W3 = 4, 1, 20, 16
    k6, k7, k8 = jax.random.split(jax.random.PRNGKey(2), 3)
    x3 = jax.random.normal(k6, (N3, nf3, H3, W3), jnp.float32)
    w1c, b1c = init_conv_params(k7, nf3, scale=0.1)
    w2c, b2c = init_conv_params(k8, nf3, scale=0.1)
    out3 = jax.block_until_ready(
        residual_block_nobn(x3, w1c, b1c, w2c, b2c, 1.0,
                            tile_rows=8, compute_dtype=jnp.float32))
    ref3 = jax.block_until_ready(_reference(x3, w1c, b1c, w2c, b2c, 1.0))
    assert float(jnp.max(jnp.abs(out3 - ref3))) < 1e-4

    print("KERNEL_OK")
</pallas_src>

<mosaic_0001>
module attributes {stable_mosaic.version = 11 : i64} {
  func.func @_resblock_kernel(%arg0: i32, %arg1: i32, %arg2: memref<1x16x16x4xf32, #tpu.memory_space<vmem>>, %arg3: memref<1x1x4x16x4xf32, #tpu.memory_space<vmem>>, %arg4: memref<36x4xbf16, #tpu.memory_space<vmem>>, %arg5: memref<1x4xf32, #tpu.memory_space<vmem>>, %arg6: memref<36x4xbf16, #tpu.memory_space<vmem>>, %arg7: memref<1x4xf32, #tpu.memory_space<vmem>>, %arg8: memref<1x16x16x4xf32, #tpu.memory_space<vmem>>, %arg9: memref<20x16x4xf32, #tpu.memory_space<vmem>>, %arg10: memref<18x16x4xf32, #tpu.memory_space<vmem>>, %arg11: memref<18x16x36xbf16, #tpu.memory_space<vmem>>) attributes {dimension_semantics = [#tpu.dimension_semantics<parallel>, #tpu.dimension_semantics<parallel>], iteration_bounds = array<i64: 2, 1>, scalar_prefetch = 0 : i64, scratch_operands = 3 : i64, tpu.core_type = #tpu.core_type<tc>, window_params = [{transform_indices = @transform_0, window_bounds = array<i64: 1, 16, 16, 4>}, {transform_indices = @transform_1, window_bounds = array<i64: 1, 1, 4, 16, 4>}, {pipeline_mode = #tpu.pipeline_mode<synchronous>, transform_indices = @transform_2, window_bounds = array<i64: 36, 4>}, {pipeline_mode = #tpu.pipeline_mode<synchronous>, transform_indices = @transform_3, window_bounds = array<i64: 1, 4>}, {pipeline_mode = #tpu.pipeline_mode<synchronous>, transform_indices = @transform_4, window_bounds = array<i64: 36, 4>}, {pipeline_mode = #tpu.pipeline_mode<synchronous>, transform_indices = @transform_5, window_bounds = array<i64: 1, 4>}, {transform_indices = @transform_6, window_bounds = array<i64: 1, 16, 16, 4>}]} {
    %c0 = arith.constant 0 : index
    %c0_0 = arith.constant 0 : index
    %c0_1 = arith.constant 0 : index
    %c0_2 = arith.constant 0 : index
    %c0_3 = arith.constant 0 : index
    %0 = vector.load %arg3[%c0, %c0_0, %c0_1, %c0_2, %c0_3] : memref<1x1x4x16x4xf32, #tpu.memory_space<vmem>>, vector<1x1x2x16x4xf32>
    %1 = vector.shape_cast %0 : vector<1x1x2x16x4xf32> to vector<2x16x4xf32>
    %c0_4 = arith.constant 0 : index
    %c0_5 = arith.constant 0 : index
    %c0_6 = arith.constant 0 : index
    %2 = vector.load %arg9[%c0_4, %c0_5, %c0_6] : memref<20x16x4xf32, #tpu.memory_space<vmem>>, vector<2x16x4xf32>
    tpu.vector_store %arg9[%c0_4, %c0_5, %c0_6], %1 {strides = array<i32>} : memref<20x16x4xf32, #tpu.memory_space<vmem>>, vector<2x16x4xf32>,
    %c0_7 = arith.constant 0 : index
    %c0_8 = arith.constant 0 : index
    %c0_9 = arith.constant 0 : index
    %c0_10 = arith.constant 0 : index
    %3 = vector.load %arg2[%c0_7, %c0_8, %c0_9, %c0_10] : memref<1x16x16x4xf32, #tpu.memory_space<vmem>>, vector<1x16x16x4xf32>
    %4 = vector.shape_cast %3 : vector<1x16x16x4xf32> to vector<16x16x4xf32>
    %c2 = arith.constant 2 : index
    %c0_11 = arith.constant 0 : index
    %c0_12 = arith.constant 0 : index
    %5 = vector.load %arg9[%c2, %c0_11, %c0_12] : memref<20x16x4xf32, #tpu.memory_space<vmem>>, vector<16x16x4xf32>
    tpu.vector_store %arg9[%c2, %c0_11, %c0_12], %4 {strides = array<i32>} : memref<20x16x4xf32, #tpu.memory_space<vmem>>, vector<16x16x4xf32>,
    %c0_13 = arith.constant 0 : index
    %c0_14 = arith.constant 0 : index
    %c2_15 = arith.constant 2 : index
    %c0_16 = arith.constant 0 : index
    %c0_17 = arith.constant 0 : index
    %6 = vector.load %arg3[%c0_13, %c0_14, %c2_15, %c0_16, %c0_17] : memref<1x1x4x16x4xf32, #tpu.memory_space<vmem>>, vector<1x1x2x16x4xf32>
    %7 = vector.shape_cast %6 : vector<1x1x2x16x4xf32> to vector<2x16x4xf32>
    %c18 = arith.constant 18 : index
    %c0_18 = arith.constant 0 : index
    %c0_19 = arith.constant 0 : index
    %8 = vector.load %arg9[%c18, %c0_18, %c0_19] : memref<20x16x4xf32, #tpu.memory_space<vmem>>, vector<2x16x4xf32>
    tpu.vector_store %arg9[%c18, %c0_18, %c0_19], %7 {strides = array<i32>} : memref<20x16x4xf32, #tpu.memory_space<vmem>>, vector<2x16x4xf32>,
    %c0_20 = arith.constant 0 : index
    %c0_21 = arith.constant 0 : index
    %c0_22 = arith.constant 0 : index
    %9 = vector.load %arg9[%c0_20, %c0_21, %c0_22] : memref<20x16x4xf32, #tpu.memory_space<vmem>>, vector<20x16x4xf32>
    %c1_i32 = arith.constant 1 : i32
    %10 = tpu.dynamic_rotate %9 by %c1_i32 dim 1 : vector<20x16x4xf32>, i32 -> vector<20x16x4xf32>
    %11 = tpu.iota {dimensions = array<i32: 1>} : vector<20x16x4xi32>
    %c0_i32 = arith.constant 0 : i32
    %12 = vector.broadcast %c0_i32 : i32 to vector<20x16x4xi32>
    %13 = arith.cmpi eq, %11, %12 : vector<20x16x4xi32>
    %cst = arith.constant 0.000000e+00 : f32
    %14 = vector.broadcast %cst : f32 to vector<20x16x4xf32>
    %15 = arith.select %13, %14, %10 : vector<20x16x4xi1>, vector<20x16x4xf32>
    %16 = vector.extract_strided_slice %15 {offsets = [0, 0, 0], sizes = [18, 16, 4], strides = [1, 1, 1]} : vector<20x16x4xf32> to vector<18x16x4xf32>
    %17 = arith.truncf %16 : vector<18x16x4xf32> to vector<18x16x4xbf16>
    %c0_23 = arith.constant 0 : index
    %c0_24 = arith.constant 0 : index
    %c0_25 = arith.constant 0 : index
    %18 = vector.load %arg11[%c0_23, %c0_24, %c0_25] : memref<18x16x36xbf16, #tpu.memory_space<vmem>>, vector<18x16x4xbf16>
    tpu.vector_store %arg11[%c0_23, %c0_24, %c0_25], %17 {strides = array<i32>} : memref<18x16x36xbf16, #tpu.memory_space<vmem>>, vector<18x16x4xbf16>,
    %19 = vector.extract_strided_slice %15 {offsets = [1, 0, 0], sizes = [18, 16, 4], strides = [1, 1, 1]} : vector<20x16x4xf32> to vector<18x16x4xf32>
    %20 = arith.truncf %19 : vector<18x16x4xf32> to vector<18x16x4xbf16>
    %c0_26 = arith.constant 0 : index
    %c0_27 = arith.constant 0 : index
    %c12 = arith.constant 12 : index
    %21 = vector.load %arg11[%c0_26, %c0_27, %c12] : memref<18x16x36xbf16, #tpu.memory_space<vmem>>, vector<18x16x4xbf16>
    tpu.vector_store %arg11[%c0_26, %c0_27, %c12], %20 {strides = array<i32>} : memref<18x16x36xbf16, #tpu.memory_space<vmem>>, vector<18x16x4xbf16>,
    %22 = vector.extract_strided_slice %15 {offsets = [2, 0, 0], sizes = [18, 16, 4], strides = [1, 1, 1]} : vector<20x16x4xf32> to vector<18x16x4xf32>
    %23 = arith.truncf %22 : vector<18x16x4xf32> to vector<18x16x4xbf16>
    %c0_28 = arith.constant 0 : index
    %c0_29 = arith.constant 0 : index
    %c24 = arith.constant 24 : index
    %24 = vector.load %arg11[%c0_28, %c0_29, %c24] : memref<18x16x36xbf16, #tpu.memory_space<vmem>>, vector<18x16x4xbf16>
    tpu.vector_store %arg11[%c0_28, %c0_29, %c24], %23 {strides = array<i32>} : memref<18x16x36xbf16, #tpu.memory_space<vmem>>, vector<18x16x4xbf16>,
    %25 = vector.extract_strided_slice %9 {offsets = [0, 0, 0], sizes = [18, 16, 4], strides = [1, 1, 1]} : vector<20x16x4xf32> to vector<18x16x4xf32>
    %26 = arith.truncf %25 : vector<18x16x4xf32> to vector<18x16x4xbf16>
    %c0_30 = arith.constant 0 : index
    %c0_31 = arith.constant 0 : index
    %c4 = arith.constant 4 : index
    %27 = vector.load %arg11[%c0_30, %c0_31, %c4] : memref<18x16x36xbf16, #tpu.memory_space<vmem>>, vector<18x16x4xbf16>
    tpu.vector_store %arg11[%c0_30, %c0_31, %c4], %26 {strides = array<i32>} : memref<18x16x36xbf16, #tpu.memory_space<vmem>>, vector<18x16x4xbf16>,
    %28 = vector.extract_strided_slice %9 {offsets = [1, 0, 0], sizes = [18, 16, 4], strides = [1, 1, 1]} : vector<20x16x4xf32> to vector<18x16x4xf32>
    %29 = arith.truncf %28 : vector<18x16x4xf32> to vector<18x16x4xbf16>
    %c0_32 = arith.constant 0 : index
    %c0_33 = arith.constant 0 : index
    %c16 = arith.constant 16 : index
    %30 = vector.load %arg11[%c0_32, %c0_33, %c16] : memref<18x16x36xbf16, #tpu.memory_space<vmem>>, vector<18x16x4xbf16>
    tpu.vector_store %arg11[%c0_32, %c0_33, %c16], %29 {strides = array<i32>} : memref<18x16x36xbf16, #tpu.memory_space<vmem>>, vector<18x16x4xbf16>,
    %31 = vector.extract_strided_slice %9 {offsets = [2, 0, 0], sizes = [18, 16, 4], strides = [1, 1, 1]} : vector<20x16x4xf32> to vector<18x16x4xf32>
    %32 = arith.truncf %31 : vector<18x16x4xf32> to vector<18x16x4xbf16>
    %c0_34 = arith.constant 0 : index
    %c0_35 = arith.constant 0 : index
    %c28 = arith.constant 28 : index
    %33 = vector.load %arg11[%c0_34, %c0_35, %c28] : memref<18x16x36xbf16, #tpu.memory_space<vmem>>, vector<18x16x4xbf16>
    tpu.vector_store %arg11[%c0_34, %c0_35, %c28], %32 {strides = array<i32>} : memref<18x16x36xbf16, #tpu.memory_space<vmem>>, vector<18x16x4xbf16>,
    %c15_i32 = arith.constant 15 : i32
    %34 = tpu.dynamic_rotate %9 by %c15_i32 dim 1 : vector<20x16x4xf32>, i32 -> vector<20x16x4xf32>
    %35 = tpu.iota {dimensions = array<i32: 1>} : vector<20x16x4xi32>
    %c15_i32_36 = arith.constant 15 : i32
    %36 = vector.broadcast %c15_i32_36 : i32 to vector<20x16x4xi32>
    %37 = arith.cmpi eq, %35, %36 : vector<20x16x4xi32>
    %cst_37 = arith.constant 0.000000e+00 : f32
    %38 = vector.broadcast %cst_37 : f32 to vector<20x16x4xf32>
    %39 = arith.select %37, %38, %34 : vector<20x16x4xi1>, vector<20x16x4xf32>
    %40 = vector.extract_strided_slice %39 {offsets = [0, 0, 0], sizes = [18, 16, 4], strides = [1, 1, 1]} : vector<20x16x4xf32> to vector<18x16x4xf32>
    %41 = arith.truncf %40 : vector<18x16x4xf32> to vector<18x16x4xbf16>
    %c0_38 = arith.constant 0 : index
    %c0_39 = arith.constant 0 : index
    %c8 = arith.constant 8 : index
    %42 = vector.load %arg11[%c0_38, %c0_39, %c8] : memref<18x16x36xbf16, #tpu.memory_space<vmem>>, vector<18x16x4xbf16>
    tpu.vector_store %arg11[%c0_38, %c0_39, %c8], %41 {strides = array<i32>} : memref<18x16x36xbf16, #tpu.memory_space<vmem>>, vector<18x16x4xbf16>,
    %43 = vector.extract_strided_slice %39 {offsets = [1, 0, 0], sizes = [18, 16, 4], strides = [1, 1, 1]} : vector<20x16x4xf32> to vector<18x16x4xf32>
    %44 = arith.truncf %43 : vector<18x16x4xf32> to vector<18x16x4xbf16>
    %c0_40 = arith.constant 0 : index
    %c0_41 = arith.constant 0 : index
    %c20 = arith.constant 20 : index
    %45 = vector.load %arg11[%c0_40, %c0_41, %c20] : memref<18x16x36xbf16, #tpu.memory_space<vmem>>, vector<18x16x4xbf16>
    tpu.vector_store %arg11[%c0_40, %c0_41, %c20], %44 {strides = array<i32>} : memref<18x16x36xbf16, #tpu.memory_space<vmem>>, vector<18x16x4xbf16>,
    %46 = vector.extract_strided_slice %39 {offsets = [2, 0, 0], sizes = [18, 16, 4], strides = [1, 1, 1]} : vector<20x16x4xf32> to vector<18x16x4xf32>
    %47 = arith.truncf %46 : vector<18x16x4xf32> to vector<18x16x4xbf16>
    %c0_42 = arith.constant 0 : index
    %c0_43 = arith.constant 0 : index
    %c32 = arith.constant 32 : index
    %48 = vector.load %arg11[%c0_42, %c0_43, %c32] : memref<18x16x36xbf16, #tpu.memory_space<vmem>>, vector<18x16x4xbf16>
    tpu.vector_store %arg11[%c0_42, %c0_43, %c32], %47 {strides = array<i32>} : memref<18x16x36xbf16, #tpu.memory_space<vmem>>, vector<18x16x4xbf16>,
    %c0_44 = arith.constant 0 : index
    %c0_45 = arith.constant 0 : index
    %c0_46 = arith.constant 0 : index
    %49 = vector.load %arg11[%c0_44, %c0_45, %c0_46] : memref<18x16x36xbf16, #tpu.memory_space<vmem>>, vector<18x16x36xbf16>
    %50 = vector.shape_cast %49 : vector<18x16x36xbf16> to vector<288x36xbf16>
    %c0_47 = arith.constant 0 : index
    %c0_48 = arith.constant 0 : index
    %51 = vector.load %arg4[%c0_47, %c0_48] : memref<36x4xbf16, #tpu.memory_space<vmem>>, vector<36x4xbf16>
    %cst_49 = arith.constant dense<0.000000e+00> : vector<288x4xf32>
    %52 = tpu.matmul %50, %51, %cst_49 {dimension_numbers = #tpu.dot_dimension_numbers<[1], [0], [0], [1], [0, 0, 1, 1], [], []>} : vector<288x36xbf16>, vector<36x4xbf16>, vector<288x4xf32> -> vector<288x4xf32>
    %c0_50 = arith.constant 0 : index
    %c0_51 = arith.constant 0 : index
    %53 = vector.load %arg5[%c0_50, %c0_51] : memref<1x4xf32, #tpu.memory_space<vmem>>, vector<1x4xf32>
    %54 = vector.broadcast %53 : vector<1x4xf32> to vector<288x4xf32>
    %55 = arith.addf %52, %54 : vector<288x4xf32>
    %cst_52 = arith.constant 0.000000e+00 : f32
    %56 = vector.broadcast %cst_52 : f32 to vector<288x4xf32>
    %57 = arith.cmpf oge, %55, %56 : vector<288x4xf32>
    %cst_53 = arith.constant 1.000000e-01 : f32
    %58 = vector.broadcast %cst_53 : f32 to vector<288x4xf32>
    %59 = arith.mulf %58, %55 : vector<288x4xf32>
    %60 = arith.select %57, %55, %59 : vector<288x4xi1>, vector<288x4xf32>
    %61 = vector.shape_cast %60 : vector<288x4xf32> to vector<18x16x4xf32>
    %c0_54 = arith.constant 0 : index
    %c0_55 = arith.constant 0 : index
    %c0_56 = arith.constant 0 : index
    %62 = vector.load %arg10[%c0_54, %c0_55, %c0_56] : memref<18x16x4xf32, #tpu.memory_space<vmem>>, vector<18x16x4xf32>
    tpu.vector_store %arg10[%c0_54, %c0_55, %c0_56], %61 {strides = array<i32>} : memref<18x16x4xf32, #tpu.memory_space<vmem>>, vector<18x16x4xf32>,
    %c0_i32_57 = arith.constant 0 : i32
    %63 = arith.cmpi eq, %arg1, %c0_i32_57 : i32
    %64 = arith.extui %63 : i1 to i32
    %c0_i32_58 = arith.constant 0 : i32
    %65 = arith.cmpi ne, %64, %c0_i32_58 : i32
    scf.if %65 {
      %cst_114 = arith.constant 0.000000e+00 : f32
      %125 = vector.broadcast %cst_114 : f32 to vector<1x16x4xf32>
      %c0_115 = arith.constant 0 : index
      %c0_116 = arith.constant 0 : index
      %c0_117 = arith.constant 0 : index
      %126 = vector.load %arg10[%c0_115, %c0_116, %c0_117] : memref<18x16x4xf32, #tpu.memory_space<vmem>>, vector<1x16x4xf32>
      tpu.vector_store %arg10[%c0_115, %c0_116, %c0_117], %125 {strides = array<i32>} : memref<18x16x4xf32, #tpu.memory_space<vmem>>, vector<1x16x4xf32>,
    } else {
    }
    %c0_i32_59 = arith.constant 0 : i32
    %66 = arith.cmpi eq, %arg1, %c0_i32_59 : i32
    %67 = arith.extui %66 : i1 to i32
    %c0_i32_60 = arith.constant 0 : i32
    %68 = arith.cmpi ne, %67, %c0_i32_60 : i32
    scf.if %68 {
      %cst_114 = arith.constant 0.000000e+00 : f32
      %125 = vector.broadcast %cst_114 : f32 to vector<1x16x4xf32>
      %c17 = arith.constant 17 : index
      %c0_115 = arith.constant 0 : index
      %c0_116 = arith.constant 0 : index
      %126 = vector.load %arg10[%c17, %c0_115, %c0_116] : memref<18x16x4xf32, #tpu.memory_space<vmem>>, vector<1x16x4xf32>
      tpu.vector_store %arg10[%c17, %c0_115, %c0_116], %125 {strides = array<i32>} : memref<18x16x4xf32, #tpu.memory_space<vmem>>, vector<1x16x4xf32>,
    } else {
    }
    %c0_61 = arith.constant 0 : index
    %c0_62 = arith.constant 0 : index
    %c0_63 = arith.constant 0 : index
    %69 = vector.load %arg10[%c0_61, %c0_62, %c0_63] : memref<18x16x4xf32, #tpu.memory_space<vmem>>, vector<18x16x4xf32>
    %c1_i32_64 = arith.constant 1 : i32
    %70 = tpu.dynamic_rotate %69 by %c1_i32_64 dim 1 : vector<18x16x4xf32>, i32 -> vector<18x16x4xf32>
    %71 = tpu.iota {dimensions = array<i32: 1>} : vector<18x16x4xi32>
    %c0_i32_65 = arith.constant 0 : i32
    %72 = vector.broadcast %c0_i32_65 : i32 to vector<18x16x4xi32>
    %73 = arith.cmpi eq, %71, %72 : vector<18x16x4xi32>
    %cst_66 = arith.constant 0.000000e+00 : f32
    %74 = vector.broadcast %cst_66 : f32 to vector<18x16x4xf32>
    %75 = arith.select %73, %74, %70 : vector<18x16x4xi1>, vector<18x16x4xf32>
    %76 = vector.extract_strided_slice %75 {offsets = [0, 0, 0], sizes = [16, 16, 4], strides = [1, 1, 1]} : vector<18x16x4xf32> to vector<16x16x4xf32>
    %77 = arith.truncf %76 : vector<16x16x4xf32> to vector<16x16x4xbf16>
    %c0_67 = arith.constant 0 : index
    %c0_68 = arith.constant 0 : index
    %c0_69 = arith.constant 0 : index
    %78 = vector.load %arg11[%c0_67, %c0_68, %c0_69] : memref<18x16x36xbf16, #tpu.memory_space<vmem>>, vector<16x16x4xbf16>
    tpu.vector_store %arg11[%c0_67, %c0_68, %c0_69], %77 {strides = array<i32>} : memref<18x16x36xbf16, #tpu.memory_space<vmem>>, vector<16x16x4xbf16>,
    %79 = vector.extract_strided_slice %75 {offsets = [1, 0, 0], sizes = [16, 16, 4], strides = [1, 1, 1]} : vector<18x16x4xf32> to vector<16x16x4xf32>
    %80 = arith.truncf %79 : vector<16x16x4xf32> to vector<16x16x4xbf16>
    %c0_70 = arith.constant 0 : index
    %c0_71 = arith.constant 0 : index
    %c12_72 = arith.constant 12 : index
    %81 = vector.load %arg11[%c0_70, %c0_71, %c12_72] : memref<18x16x36xbf16, #tpu.memory_space<vmem>>, vector<16x16x4xbf16>
    tpu.vector_store %arg11[%c0_70, %c0_71, %c12_72], %80 {strides = array<i32>} : memref<18x16x36xbf16, #tpu.memory_space<vmem>>, vector<16x16x4xbf16>,
    %82 = vector.extract_strided_slice %75 {offsets = [2, 0, 0], sizes = [16, 16, 4], strides = [1, 1, 1]} : vector<18x16x4xf32> to vector<16x16x4xf32>
    %83 = arith.truncf %82 : vector<16x16x4xf32> to vector<16x16x4xbf16>
    %c0_73 = arith.constant 0 : index
    %c0_74 = arith.constant 0 : index
    %c24_75 = arith.constant 24 : index
    %84 = vector.load %arg11[%c0_73, %c0_74, %c24_75] : memref<18x16x36xbf16, #tpu.memory_space<vmem>>, vector<16x16x4xbf16>
    tpu.vector_store %arg11[%c0_73, %c0_74, %c24_75], %83 {strides = array<i32>} : memref<18x16x36xbf16, #tpu.memory_space<vmem>>, vector<16x16x4xbf16>,
    %85 = vector.extract_strided_slice %69 {offsets = [0, 0, 0], sizes = [16, 16, 4], strides = [1, 1, 1]} : vector<18x16x4xf32> to vector<16x16x4xf32>
    %86 = arith.truncf %85 : vector<16x16x4xf32> to vector<16x16x4xbf16>
    %c0_76 = arith.constant 0 : index
    %c0_77 = arith.constant 0 : index
    %c4_78 = arith.constant 4 : index
    %87 = vector.load %arg11[%c0_76, %c0_77, %c4_78] : memref<18x16x36xbf16, #tpu.memory_space<vmem>>, vector<16x16x4xbf16>
    tpu.vector_store %arg11[%c0_76, %c0_77, %c4_78], %86 {strides = array<i32>} : memref<18x16x36xbf16, #tpu.memory_space<vmem>>, vector<16x16x4xbf16>,
    %88 = vector.extract_strided_slice %69 {offsets = [1, 0, 0], sizes = [16, 16, 4], strides = [1, 1, 1]} : vector<18x16x4xf32> to vector<16x16x4xf32>
    %89 = arith.truncf %88 : vector<16x16x4xf32> to vector<16x16x4xbf16>
    %c0_79 = arith.constant 0 : index
    %c0_80 = arith.constant 0 : index
    %c16_81 = arith.constant 16 : index
    %90 = vector.load %arg11[%c0_79, %c0_80, %c16_81] : memref<18x16x36xbf16, #tpu.memory_space<vmem>>, vector<16x16x4xbf16>
    tpu.vector_store %arg11[%c0_79, %c0_80, %c16_81], %89 {strides = array<i32>} : memref<18x16x36xbf16, #tpu.memory_space<vmem>>, vector<16x16x4xbf16>,
    %91 = vector.extract_strided_slice %69 {offsets = [2, 0, 0], sizes = [16, 16, 4], strides = [1, 1, 1]} : vector<18x16x4xf32> to vector<16x16x4xf32>
    %92 = arith.truncf %91 : vector<16x16x4xf32> to vector<16x16x4xbf16>
    %c0_82 = arith.constant 0 : index
    %c0_83 = arith.constant 0 : index
    %c28_84 = arith.constant 28 : index
    %93 = vector.load %arg11[%c0_82, %c0_83, %c28_84] : memref<18x16x36xbf16, #tpu.memory_space<vmem>>, vector<16x16x4xbf16>
    tpu.vector_store %arg11[%c0_82, %c0_83, %c28_84], %92 {strides = array<i32>} : memref<18x16x36xbf16, #tpu.memory_space<vmem>>, vector<16x16x4xbf16>,
    %c15_i32_85 = arith.constant 15 : i32
    %94 = tpu.dynamic_rotate %69 by %c15_i32_85 dim 1 : vector<18x16x4xf32>, i32 -> vector<18x16x4xf32>
    %95 = tpu.iota {dimensions = array<i32: 1>} : vector<18x16x4xi32>
    %c15_i32_86 = arith.constant 15 : i32
    %96 = vector.broadcast %c15_i32_86 : i32 to vector<18x16x4xi32>
    %97 = arith.cmpi eq, %95, %96 : vector<18x16x4xi32>
    %cst_87 = arith.constant 0.000000e+00 : f32
    %98 = vector.broadcast %cst_87 : f32 to vector<18x16x4xf32>
    %99 = arith.select %97, %98, %94 : vector<18x16x4xi1>, vector<18x16x4xf32>
    %100 = vector.extract_strided_slice %99 {offsets = [0, 0, 0], sizes = [16, 16, 4], strides = [1, 1, 1]} : vector<18x16x4xf32> to vector<16x16x4xf32>
    %101 = arith.truncf %100 : vector<16x16x4xf32> to vector<16x16x4xbf16>
    %c0_88 = arith.constant 0 : index
    %c0_89 = arith.constant 0 : index
    %c8_90 = arith.constant 8 : index
    %102 = vector.load %arg11[%c0_88, %c0_89, %c8_90] : memref<18x16x36xbf16, #tpu.memory_space<vmem>>, vector<16x16x4xbf16>
    tpu.vector_store %arg11[%c0_88, %c0_89, %c8_90], %101 {strides = array<i32>} : memref<18x16x36xbf16, #tpu.memory_space<vmem>>, vector<16x16x4xbf16>,
    %103 = vector.extract_strided_slice %99 {offsets = [1, 0, 0], sizes = [16, 16, 4], strides = [1, 1, 1]} : vector<18x16x4xf32> to vector<16x16x4xf32>
    %104 = arith.truncf %103 : vector<16x16x4xf32> to vector<16x16x4xbf16>
    %c0_91 = arith.constant 0 : index
    %c0_92 = arith.constant 0 : index
    %c20_93 = arith.constant 20 : index
    %105 = vector.load %arg11[%c0_91, %c0_92, %c20_93] : memref<18x16x36xbf16, #tpu.memory_space<vmem>>, vector<16x16x4xbf16>
    tpu.vector_store %arg11[%c0_91, %c0_92, %c20_93], %104 {strides = array<i32>} : memref<18x16x36xbf16, #tpu.memory_space<vmem>>, vector<16x16x4xbf16>,
    %106 = vector.extract_strided_slice %99 {offsets = [2, 0, 0], sizes = [16, 16, 4], strides = [1, 1, 1]} : vector<18x16x4xf32> to vector<16x16x4xf32>
    %107 = arith.truncf %106 : vector<16x16x4xf32> to vector<16x16x4xbf16>
    %c0_94 = arith.constant 0 : index
    %c0_95 = arith.constant 0 : index
    %c32_96 = arith.constant 32 : index
    %108 = vector.load %arg11[%c0_94, %c0_95, %c32_96] : memref<18x16x36xbf16, #tpu.memory_space<vmem>>, vector<16x16x4xbf16>
    tpu.vector_store %arg11[%c0_94, %c0_95, %c32_96], %107 {strides = array<i32>} : memref<18x16x36xbf16, #tpu.memory_space<vmem>>, vector<16x16x4xbf16>,
    %c0_97 = arith.constant 0 : index
    %c0_98 = arith.constant 0 : index
    %c0_99 = arith.constant 0 : index
    %109 = vector.load %arg11[%c0_97, %c0_98, %c0_99] : memref<18x16x36xbf16, #tpu.memory_space<vmem>>, vector<16x16x36xbf16>
    %110 = vector.shape_cast %109 : vector<16x16x36xbf16> to vector<256x36xbf16>
    %c0_100 = arith.constant 0 : index
    %c0_101 = arith.constant 0 : index
    %111 = vector.load %arg6[%c0_100, %c0_101] : memref<36x4xbf16, #tpu.memory_space<vmem>>, vector<36x4xbf16>
    %cst_102 = arith.constant dense<0.000000e+00> : vector<256x4xf32>
    %112 = tpu.matmul %110, %111, %cst_102 {dimension_numbers = #tpu.dot_dimension_numbers<[1], [0], [0], [1], [0, 0, 1, 1], [], []>} : vector<256x36xbf16>, vector<36x4xbf16>, vector<256x4xf32> -> vector<256x4xf32>
    %c0_103 = arith.constant 0 : index
    %c0_104 = arith.constant 0 : index
    %113 = vector.load %arg7[%c0_103, %c0_104] : memref<1x4xf32, #tpu.memory_space<vmem>>, vector<1x4xf32>
    %114 = vector.broadcast %113 : vector<1x4xf32> to vector<256x4xf32>
    %115 = arith.addf %112, %114 : vector<256x4xf32>
    %c0_105 = arith.constant 0 : index
    %c0_106 = arith.constant 0 : index
    %c0_107 = arith.constant 0 : index
    %c0_108 = arith.constant 0 : index
    %116 = vector.load %arg2[%c0_105, %c0_106, %c0_107, %c0_108] : memref<1x16x16x4xf32, #tpu.memory_space<vmem>>, vector<1x16x16x4xf32>
    %117 = vector.shape_cast %116 : vector<1x16x16x4xf32> to vector<16x16x4xf32>
    %cst_109 = arith.constant 1.000000e+00 : f32
    %118 = vector.broadcast %cst_109 : f32 to vector<256x4xf32>
    %119 = arith.mulf %118, %115 : vector<256x4xf32>
    %120 = vector.shape_cast %119 : vector<256x4xf32> to vector<16x16x4xf32>
    %121 = arith.addf %117, %120 : vector<16x16x4xf32>
    %c0_110 = arith.constant 0 : index
    %c0_111 = arith.constant 0 : index
    %c0_112 = arith.constant 0 : index
    %c0_113 = arith.constant 0 : index
    %122 = vector.load %arg8[%c0_110, %c0_111, %c0_112, %c0_113] : memref<1x16x16x4xf32, #tpu.memory_space<vmem>>, vector<1x16x16x4xf32>
    %123 = vector.shape_cast %122 : vector<1x16x16x4xf32> to vector<16x16x4xf32>
    %124 = vector.shape_cast %121 : vector<16x16x4xf32> to vector<1x16x16x4xf32>
    tpu.vector_store %arg8[%c0_110, %c0_111, %c0_112, %c0_113], %124 {strides = array<i32>} : memref<1x16x16x4xf32, #tpu.memory_space<vmem>>, vector<1x16x16x4xf32>,
    return
  }
  func.func @transform_0(%arg0: i32, %arg1: i32) -> (i32, i32, i32, i32) {
    %c0_i32 = arith.constant 0 : i32
    %c0_i32_0 = arith.constant 0 : i32
    %c0_i32_1 = arith.constant 0 : i32
    return %arg0, %arg1, %c0_i32, %c0_i32_0 : i32, i32, i32, i32
  }
  func.func @transform_1(%arg0: i32, %arg1: i32) -> (i32, i32, i32, i32, i32) {
    %c0_i32 = arith.constant 0 : i32
    %c0_i32_0 = arith.constant 0 : i32
    %c0_i32_1 = arith.constant 0 : i32
    %c0_i32_2 = arith.constant 0 : i32
    return %arg0, %arg1, %c0_i32, %c0_i32_0, %c0_i32_1 : i32, i32, i32, i32, i32
  }
  func.func @transform_2(%arg0: i32, %arg1: i32) -> (i32, i32) {
    %c0_i32 = arith.constant 0 : i32
    %c0_i32_0 = arith.constant 0 : i32
    %c0_i32_1 = arith.constant 0 : i32
    return %c0_i32, %c0_i32_0 : i32, i32
  }
  func.func @transform_3(%arg0: i32, %arg1: i32) -> (i32, i32) {
    %c0_i32 = arith.constant 0 : i32
    %c0_i32_0 = arith.constant 0 : i32
    %c0_i32_1 = arith.constant 0 : i32
    return %c0_i32, %c0_i32_0 : i32, i32
  }
  func.func @transform_4(%arg0: i32, %arg1: i32) -> (i32, i32) {
    %c0_i32 = arith.constant 0 : i32
    %c0_i32_0 = arith.constant 0 : i32
    %c0_i32_1 = arith.constant 0 : i32
    return %c0_i32, %c0_i32_0 : i32, i32
  }
  func.func @transform_5(%arg0: i32, %arg1: i32) -> (i32, i32) {
    %c0_i32 = arith.constant 0 : i32
    %c0_i32_0 = arith.constant 0 : i32
    %c0_i32_1 = arith.constant 0 : i32
    return %c0_i32, %c0_i32_0 : i32, i32
  }
  func.func @transform_6(%arg0: i32, %arg1: i32) -> (i32, i32, i32, i32) {
    %c0_i32 = arith.constant 0 : i32
    %c0_i32_0 = arith.constant 0 : i32
    %c0_i32_1 = arith.constant 0 : i32
    return %arg0, %arg1, %c0_i32, %c0_i32_0 : i32, i32, i32, i32
  }
}

</mosaic_0001>

<llo_original>
// kernel: tpu_custom_call.1
$region0: #{tpu_custom_call.1}
  #allocation0 [shape = 'u32[]', space=smem, size = 0x4, offset = 0x4, fixed_abs, tag = 'smem constant byte address 0x4 - core index']
  #allocation1 [shape = 'u32[144,128]{1,0:T(1,128)}', space=vmem, size = 0x12000, scoped, tag = 'internal scratch']
  #allocation2 [shape = 'f32[20,16,4]{2,1,0:T(8,128)}', space=vmem, size = 0x28000, scoped, tag = 'scratch operand']
  #allocation3 [shape = 'f32[18,16,4]{2,1,0:T(8,128)}', space=vmem, size = 0x24000, scoped, tag = 'scratch operand']
  #allocation4 [shape = 'bf16[18,16,36]{2,1,0:T(16,128)(2,1)}', space=vmem, size = 0x12000, scoped, tag = 'scratch operand']
  %s0 = inlined_call_operand.vmem [shape: f32[2,16,16,4], index: 0, kind: input, shape index: {}]
  %s1 = inlined_call_operand.vmem [shape: f32[2,1,4,16,4], index: 1, kind: input, shape index: {}]
  %s2 = inlined_call_operand.vmem [shape: bf16[36,4], index: 2, kind: input, shape index: {}]
  %s3 = inlined_call_operand.vmem [shape: f32[1,4], index: 3, kind: input, shape index: {}]
  %s4 = inlined_call_operand.vmem [shape: bf16[36,4], index: 4, kind: input, shape index: {}]
  %s5 = inlined_call_operand.vmem [shape: f32[1,4], index: 5, kind: input, shape index: {}]
  %s6 = inlined_call_operand.vmem [shape: f32[2,16,16,4], index: 6, kind: output, shape index: {}]
  %s7 = sld [smem:[#allocation0]]
  $region61: #{tpu_custom_call.1} parent=0
    _
  %s9 = ssub.s32 1, %s7
  %s10 = scalar_select 0, %s9, %s7
  loop: start=0, step=1, limit=4
  $region2: #{tpu_custom_call.1} parent=0 // loop_pre_header
    _
  $region3: #{tpu_custom_call.1} parent=0 // loop_header
    %s12 = sphi 0, %s16
    %p13 = scmp.ge.s32.totalorder %s12, 4
    %s19 = sphi 0, %s31
    %s20 = sphi 0, %s27
    %s21 = sphi 0, %s19
    %s22 = sphi 0, %s20
    %s23 = sphi 0, %s21
    %s24 = sphi 0, %s22
    %s36 = sphi 0, %s38
    %s39 = sphi 0, %s36
    %s40 = sphi 0, %s39
    %s56 = sphi 0, %s40
    %s64 = sphi 0, %s66
    %s67 = sphi 0, %s64
    %s68 = sphi 0, %s67
    %s84 = sphi 0, %s68
    %s88 = sphi 0, %s88
    %s90 = sphi 0, %s88
    %s91 = sphi 0, %s90
    %s105 = sphi 0, %s91
    %s109 = sphi 0, %s109
    %s111 = sphi 0, %s109
    %s112 = sphi 0, %s111
    %s126 = sphi 0, %s112
    %s130 = sphi 0, %s130
    %s132 = sphi 0, %s130
    %s133 = sphi 0, %s132
    %s147 = sphi 0, %s133
    %s151 = sphi 0, %s151
    %s153 = sphi 0, %s151
    %s154 = sphi 0, %s153
    %s168 = sphi 0, %s154
    %s176 = sphi 0, %s178
    %s179 = sphi 0, %s176
    %s180 = sphi 0, %s179
    %s196 = sphi 0, %s180
  $region4: #{tpu_custom_call.1} parent=0 // loop_header_branch
    %15 = sbr.rel (%p13) target = $region8
  $region5: #{tpu_custom_call.1} parent=0 // loop_body
    %s17 = ssub.s32 %s12, 1
    %s18 = ssub.s32 %s12, 2
    %s25 = sadd.s32 1, %s20
    %p26 = scmp.ge.s32.totalorder %s25, 1
    %s27 = scalar_select %p26, 0, %s25
    %s28 = sadd.s32 1, %s19
    %s29 = scalar_select %p26, %s28, %s19
    %p30 = scmp.ge.s32.totalorder %s29, 2
    %s31 = scalar_select %p30, 0, %s29
    %s32 = ssub.s32 %s19, %s31
    %s33 = ssub.s32 %s20, %s27
    %s34 = sor.u32 %s32, %s33
    %p35 = scmp.eq.s32.totalorder %s34, 0
    %s37 = sadd.s32 %s36, 1
    %s38 = scalar_select %p35, %s36, %s37
    %p41 = pneg %p35
    %p42 = scmp.eq.s32.totalorder %s12, 1
    %p43 = por %p41, %p42
    %p44 = scmp.ne.s32.totalorder %s36, %s39
    %p45 = scmp.eq.s32.totalorder %s12, 0
    %p46 = por %p44, %p45
    %p47 = scmp.ne.s32.totalorder %s36, %s39
    %p48 = scmp.eq.s32.totalorder %s17, 1
    %p49 = por %p47, %p48
    %p50 = scmp.ne.s32.totalorder %s39, %s40
    %p51 = scmp.eq.s32.totalorder %s17, 0
    %p52 = por %p50, %p51
    %p53 = scmp.ne.s32.totalorder %s39, %s40
    %p54 = scmp.eq.s32.totalorder %s18, 1
    %p55 = por %p53, %p54
    %p57 = scmp.ne.s32.totalorder %s40, %s56
    %p58 = scmp.eq.s32.totalorder %s18, 0
    %p59 = por %p57, %p58
    %s60 = ssub.s32 %s19, %s31
    %s61 = ssub.s32 %s20, %s27
    %s62 = sor.u32 %s60, %s61
    %p63 = scmp.eq.s32.totalorder %s62, 0
    %s65 = sadd.s32 %s64, 1
    %s66 = scalar_select %p63, %s64, %s65
    %p69 = pneg %p63
    %p70 = scmp.eq.s32.totalorder %s12, 1
    %p71 = por %p69, %p70
    %p72 = scmp.ne.s32.totalorder %s64, %s67
    %p73 = scmp.eq.s32.totalorder %s12, 0
    %p74 = por %p72, %p73
    %p75 = scmp.ne.s32.totalorder %s64, %s67
    %p76 = scmp.eq.s32.totalorder %s17, 1
    %p77 = por %p75, %p76
    %p78 = scmp.ne.s32.totalorder %s67, %s68
    %p79 = scmp.eq.s32.totalorder %s17, 0
    %p80 = por %p78, %p79
    %p81 = scmp.ne.s32.totalorder %s67, %s68
    %p82 = scmp.eq.s32.totalorder %s18, 1
    %p83 = por %p81, %p82
    %p85 = scmp.ne.s32.totalorder %s68, %s84
    %p86 = scmp.eq.s32.totalorder %s18, 0
    %p87 = por %p85, %p86
    %s89 = sadd.s32 %s88, 1
    %p92 = scmp.eq.s32.totalorder %s12, 1
    %p93 = scmp.ne.s32.totalorder %s88, %s90
    %p94 = scmp.eq.s32.totalorder %s12, 0
    %p95 = por %p93, %p94
    %p96 = scmp.ne.s32.totalorder %s88, %s90
    %p97 = scmp.eq.s32.totalorder %s17, 1
    %p98 = por %p96, %p97
    %p99 = scmp.ne.s32.totalorder %s90, %s91
    %p100 = scmp.eq.s32.totalorder %s17, 0
    %p101 = por %p99, %p100
    %p102 = scmp.ne.s32.totalorder %s90, %s91
    %p103 = scmp.eq.s32.totalorder %s18, 1
    %p104 = por %p102, %p103
    %p106 = scmp.ne.s32.totalorder %s91, %s105
    %p107 = scmp.eq.s32.totalorder %s18, 0
    %p108 = por %p106, %p107
    %s110 = sadd.s32 %s109, 1
    %p113 = scmp.eq.s32.totalorder %s12, 1
    %p114 = scmp.ne.s32.totalorder %s109, %s111
    %p115 = scmp.eq.s32.totalorder %s12, 0
    %p116 = por %p114, %p115
    %p117 = scmp.ne.s32.totalorder %s109, %s111
    %p118 = scmp.eq.s32.totalorder %s17, 1
    %p119 = por %p117, %p118
    %p120 = scmp.ne.s32.totalorder %s111, %s112
    %p121 = scmp.eq.s32.totalorder %s17, 0
    %p122 = por %p120, %p121
    %p123 = scmp.ne.s32.totalorder %s111, %s112
    %p124 = scmp.eq.s32.totalorder %s18, 1
    %p125 = por %p123, %p124
    %p127 = scmp.ne.s32.totalorder %s112, %s126
    %p128 = scmp.eq.s32.totalorder %s18, 0
    %p129 = por %p127, %p128
    %s131 = sadd.s32 %s130, 1
    %p134 = scmp.eq.s32.totalorder %s12, 1
    %p135 = scmp.ne.s32.totalorder %s130, %s132
    %p136 = scmp.eq.s32.totalorder %s12, 0
    %p137 = por %p135, %p136
    %p138 = scmp.ne.s32.totalorder %s130, %s132
    %p139 = scmp.eq.s32.totalorder %s17, 1
    %p140 = por %p138, %p139
    %p141 = scmp.ne.s32.totalorder %s132, %s133
    %p142 = scmp.eq.s32.totalorder %s17, 0
    %p143 = por %p141, %p142
    %p144 = scmp.ne.s32.totalorder %s132, %s133
    %p145 = scmp.eq.s32.totalorder %s18, 1
    %p146 = por %p144, %p145
    %p148 = scmp.ne.s32.totalorder %s133, %s147
    %p149 = scmp.eq.s32.totalorder %s18, 0
    %p150 = por %p148, %p149
    %s152 = sadd.s32 %s151, 1
    %p155 = scmp.eq.s32.totalorder %s12, 1
    %p156 = scmp.ne.s32.totalorder %s151, %s153
    %p157 = scmp.eq.s32.totalorder %s12, 0
    %p158 = por %p156, %p157
    %p159 = scmp.ne.s32.totalorder %s151, %s153
    %p160 = scmp.eq.s32.totalorder %s17, 1
    %p161 = por %p159, %p160
    %p162 = scmp.ne.s32.totalorder %s153, %s154
    %p163 = scmp.eq.s32.totalorder %s17, 0
    %p164 = por %p162, %p163
    %p165 = scmp.ne.s32.totalorder %s153, %s154
    %p166 = scmp.eq.s32.totalorder %s18, 1
    %p167 = por %p165, %p166
    %p169 = scmp.ne.s32.totalorder %s154, %s168
    %p170 = scmp.eq.s32.totalorder %s18, 0
    %p171 = por %p169, %p170
    %s172 = ssub.s32 %s19, %s31
    %s173 = ssub.s32 %s20, %s27
    %s174 = sor.u32 %s172, %s173
    %p175 = scmp.eq.s32.totalorder %s174, 0
    %s177 = sadd.s32 %s176, 1
    %s178 = scalar_select %p175, %s176, %s177
    %p181 = pneg %p175
    %p182 = scmp.eq.s32.totalorder %s12, 1
    %p183 = por %p181, %p182
    %p184 = scmp.ne.s32.totalorder %s176, %s179
    %p185 = scmp.eq.s32.totalorder %s12, 0
    %p186 = por %p184, %p185
    %p187 = scmp.ne.s32.totalorder %s176, %s179
    %p188 = scmp.eq.s32.totalorder %s17, 1
    %p189 = por %p187, %p188
    %p190 = scmp.ne.s32.totalorder %s179, %s180
    %p191 = scmp.eq.s32.totalorder %s17, 0
    %p192 = por %p190, %p191
    %p193 = scmp.ne.s32.totalorder %s179, %s180
    %p194 = scmp.eq.s32.totalorder %s18, 1
    %p195 = por %p193, %p194
    %p197 = scmp.ne.s32.totalorder %s180, %s196
    %p198 = scmp.eq.s32.totalorder %s18, 0
    %p199 = por %p197, %p198
    %p200 = scmp.le.s32.totalorder 1, %s12
    %p201 = scmp.lt.s32.totalorder %s12, 3
    %p202 = pnand %p200, %p201
    %p203 = pneg %p202
    // Predicated region
    $region9: #{tpu_custom_call.1} parent=5 // pred_check
      _
    $region10: #{tpu_custom_call.1} parent=5 // pred_check_branch
      %205 = sbr.rel (%p202) target = $region12
    $region11: #{tpu_custom_call.1} parent=5 // pred_region
      %s206 = ssub.s32 %s12, 1
      // Predicated region
      $region13: #{tpu_custom_call.1} parent=11 // pred_check
        %p207 = pneg %p101
      $region14: #{tpu_custom_call.1} parent=11 // pred_check_branch
        %209 = sbr.rel (%p207) target = $region16
      $region15: #{tpu_custom_call.1} parent=11 // pred_region
        _
      $region16: #{tpu_custom_call.1} parent=11 // pred_fallthru
        _
      // Predicated region
      $region17: #{tpu_custom_call.1} parent=11 // pred_check
        %p210 = pneg %p122
      $region18: #{tpu_custom_call.1} parent=11 // pred_check_branch
        %212 = sbr.rel (%p210) target = $region20
      $region19: #{tpu_custom_call.1} parent=11 // pred_region
        _
      $region20: #{tpu_custom_call.1} parent=11 // pred_fallthru
        _
      // Predicated region
      $region21: #{tpu_custom_call.1} parent=11 // pred_check
        %p213 = pneg %p143
      $region22: #{tpu_custom_call.1} parent=11 // pred_check_branch
        %215 = sbr.rel (%p213) target = $region24
      $region23: #{tpu_custom_call.1} parent=11 // pred_region
        _
      $region24: #{tpu_custom_call.1} parent=11 // pred_fallthru
        _
      // Predicated region
      $region25: #{tpu_custom_call.1} parent=11 // pred_check
        %p216 = pneg %p164
      $region26: #{tpu_custom_call.1} parent=11 // pred_check_branch
        %218 = sbr.rel (%p216) target = $region28
      $region27: #{tpu_custom_call.1} parent=11 // pred_region
        _
      $region28: #{tpu_custom_call.1} parent=11 // pred_fallthru
        _
    $region12: #{tpu_custom_call.1} parent=5 // pred_fallthru
      _
    %p219 = scmp.lt.s32.totalorder %s12, 2
    // Predicated region
    $region29: #{tpu_custom_call.1} parent=5 // pred_check
      %p220 = pneg %p219
    $region30: #{tpu_custom_call.1} parent=5 // pred_check_branch
      %222 = sbr.rel (%p220) target = $region32
    $region31: #{tpu_custom_call.1} parent=5 // pred_region
      // Predicated region
      $region33: #{tpu_custom_call.1} parent=31 // pred_check
        %p223 = pneg %p46
      $region34: #{tpu_custom_call.1} parent=31 // pred_check_branch
        %225 = sbr.rel (%p223) target = $region36
      $region35: #{tpu_custom_call.1} parent=31 // pred_region
        %s226 = smul.u32 16, %s20
        %p227 = scmp.lt.s32.totalorder %s19, 1
        %s228 = scalar_select %p227, %s19, 1
        %p229 = scmp.lt.s32.totalorder %s226, 15
        %s230 = scalar_select %p229, %s226, 15
        %s231 = smul.addr %s230, 2
        %s232 = smul.addr %s228, 32
        %s233 = sadd.s32 %s231, %s232
        %s234 = smul.addr %s233, 8
        %s235 = scalar_lea.vmem %s0, %s234
        %s236 = smul.u32 16, %s20
      $region36: #{tpu_custom_call.1} parent=31 // pred_fallthru
        _
      // Predicated region
      $region37: #{tpu_custom_call.1} parent=31 // pred_check
        %p237 = pneg %p74
      $region38: #{tpu_custom_call.1} parent=31 // pred_check_branch
        %239 = sbr.rel (%p237) target = $region40
      $region39: #{tpu_custom_call.1} parent=31 // pred_region
        %p240 = scmp.lt.s32.totalorder %s19, 1
        %s241 = scalar_select %p240, %s19, 1
        %p242 = scmp.lt.s32.totalorder %s20, 0
        %s243 = scalar_select %p242, %s20, 0
        %s244 = smul.addr %s243, 8
        %s245 = smul.addr %s241, 8
        %s246 = sadd.s32 %s244, %s245
        %s247 = smul.addr %s246, 8
        %s248 = scalar_lea.vmem %s1, %s247
      $region40: #{tpu_custom_call.1} parent=31 // pred_fallthru
        _
    $region32: #{tpu_custom_call.1} parent=5 // pred_fallthru
      _
    %p249 = scmp.le.s32.totalorder 1, %s12
    %p250 = scmp.lt.s32.totalorder %s12, 3
    %p251 = pnand %p249, %p250
    %p252 = pneg %p251
    // Predicated region
    $region41: #{tpu_custom_call.1} parent=5 // pred_check
      _
    $region42: #{tpu_custom_call.1} parent=5 // pred_check_branch
      %254 = sbr.rel (%p251) target = $region44
    $region43: #{tpu_custom_call.1} parent=5 // pred_region
      %s255 = ssub.s32 %s12, 1
      %s256 = smul.u32 16, %s22
      %p257 = scmp.lt.s32.totalorder %s21, 1
      %s258 = scalar_select %p257, %s21, 1
      %p259 = scmp.lt.s32.totalorder %s256, 15
      %s260 = scalar_select %p259, %s256, 15
      %s261 = smul.addr %s260, 2
      %s262 = smul.addr %s258, 32
      %s263 = sadd.s32 %s261, %s262
      %s264 = smul.addr %s263, 8
      %s265 = scalar_lea.vmem %s0, %s264
      %p266 = pneg %p52
      %p267 = pneg %p49
      %p268 = scmp.lt.s32.totalorder %s21, 1
      %s269 = scalar_select %p268, %s21, 1
      %p270 = scmp.lt.s32.totalorder %s22, 0
      %s271 = scalar_select %p270, %s22, 0
      %s272 = smul.addr %s271, 8
      %s273 = smul.addr %s269, 8
      %s274 = sadd.s32 %s272, %s273
      %s275 = smul.addr %s274, 8
      %s276 = scalar_lea.vmem %s1, %s275
      %p277 = pneg %p80
      %p278 = pneg %p77
      %p279 = pneg %p101
      %p280 = pneg %p98
      %p281 = pneg %p122
      %p282 = pneg %p119
      %p283 = pneg %p143
      %p284 = pneg %p140
      %p285 = pneg %p164
      %p286 = pneg %p161
      %p287 = pneg %p192
      %p288 = pneg %p189
      %s289 = smul.u32 16, %s22
      %p290 = scmp.lt.s32.totalorder %s21, 1
      %s291 = scalar_select %p290, %s21, 1
      %p292 = scmp.lt.s32.totalorder %s289, 15
      %s293 = scalar_select %p292, %s289, 15
      %s294 = smul.addr %s293, 2
      %s295 = smul.addr %s291, 32
      %s296 = sadd.s32 %s294, %s295
      %s297 = smul.addr %s296, 8
      %s298 = scalar_lea.vmem %s6, %s297
      %s299 = smul.u32 16, %s22
      %p300 = scmp.lt.s32.totalorder %s21, 1
      %s301 = scalar_select %p300, %s21, 1
      %p302 = scmp.lt.s32.totalorder %s299, 15
      %s303 = scalar_select %p302, %s299, 15
      %s304 = smul.addr %s303, 2
      %s305 = smul.addr %s301, 32
      %s306 = sadd.s32 %s304, %s305
      %s307 = smul.addr %s306, 8
      %s308 = scalar_lea.vmem %s0, %s307
      %s309 = smul.u32 16, %s22
      %p310 = scmp.lt.s32.totalorder %s21, 1
      %s311 = scalar_select %p310, %s21, 1
      %p312 = scmp.lt.s32.totalorder %s22, 0
      %s313 = scalar_select %p312, %s22, 0
      %s314 = smul.addr %s313, 8
      %s315 = smul.addr %s311, 8
      %s316 = sadd.s32 %s314, %s315
      %s317 = smul.addr %s316, 8
      %s318 = scalar_lea.vmem %s1, %s317
      %s319 = smul.u32 16, %s22
      %p320 = scmp.lt.s32.totalorder %s21, 1
      %s321 = scalar_select %p320, %s21, 1
      %p322 = scmp.lt.s32.totalorder %s319, 15
      %s323 = scalar_select %p322, %s319, 15
      %s324 = smul.addr %s323, 2
      %s325 = smul.addr %s321, 32
      %s326 = sadd.s32 %s324, %s325
      %s327 = smul.addr %s326, 8
      %s328 = scalar_lea.vmem %s6, %s327
      %s329 = smul.u32 16, %s22
      %v331 = vld [vmem:[%s318] sm:$0xff]
      %v332 = vld [vmem:[%s318 + $0x8] sm:$0xff]
      %v333 = vld [vmem:[%s318 + $0x10] sm:$0xff]
      %v334 = vld [vmem:[%s318 + $0x18] sm:$0xff]
      %vm335 = vcmask 31744
      %336 = vst.msk [vmem:[#allocation2] sm:$0xff] %vm335, %v331
      %337 = vst.msk [vmem:[#allocation2 + $0x8] sm:$0xff] %vm335, %v332
      %338 = vst.msk [vmem:[#allocation2 + $0x10] sm:$0xff] %vm335, %v333
      %339 = vst.msk [vmem:[#allocation2 + $0x18] sm:$0xff] %vm335, %v334
      %v340 = vld [vmem:[%s308] sm:$0xff]
      %v341 = vld [vmem:[%s308 + $0x8] sm:$0xff]
      %v342 = vld [vmem:[%s308 + $0x10] sm:$0xff]
      %v343 = vld [vmem:[%s308 + $0x18] sm:$0xff]
      %v344 = vld [vmem:[%s308 + $0x20] sm:$0xff]
      %v345 = vld [vmem:[%s308 + $0x28] sm:$0xff]
      %v346 = vld [vmem:[%s308 + $0x30] sm:$0xff]
      %v347 = vld [vmem:[%s308 + $0x38] sm:$0xff]
      %v348 = vld [vmem:[%s308 + $0x40] sm:$0xff]
      %v349 = vld [vmem:[%s308 + $0x48] sm:$0xff]
      %v350 = vld [vmem:[%s308 + $0x50] sm:$0xff]
      %v351 = vld [vmem:[%s308 + $0x58] sm:$0xff]
      %v352 = vld [vmem:[%s308 + $0x60] sm:$0xff]
      %v353 = vld [vmem:[%s308 + $0x68] sm:$0xff]
      %v354 = vld [vmem:[%s308 + $0x70] sm:$0xff]
      %v355 = vld [vmem:[%s308 + $0x78] sm:$0xff]
      %v356 = vld [vmem:[%s308 + $0x80] sm:$0xff]
      %v357 = vld [vmem:[%s308 + $0x88] sm:$0xff]
      %v358 = vld [vmem:[%s308 + $0x90] sm:$0xff]
      %v359 = vld [vmem:[%s308 + $0x98] sm:$0xff]
      %v360 = vld [vmem:[%s308 + $0xa0] sm:$0xff]
      %v361 = vld [vmem:[%s308 + $0xa8] sm:$0xff]
      %v362 = vld [vmem:[%s308 + $0xb0] sm:$0xff]
      %v363 = vld [vmem:[%s308 + $0xb8] sm:$0xff]
      %v364 = vld [vmem:[%s308 + $0xc0] sm:$0xff]
      %v365 = vld [vmem:[%s308 + $0xc8] sm:$0xff]
      %v366 = vld [vmem:[%s308 + $0xd0] sm:$0xff]
      %v367 = vld [vmem:[%s308 + $0xd8] sm:$0xff]
      %v368 = vld [vmem:[%s308 + $0xe0] sm:$0xff]
      %v369 = vld [vmem:[%s308 + $0xe8] sm:$0xff]
      %v370 = vld [vmem:[%s308 + $0xf0] sm:$0xff]
      %v371 = vld [vmem:[%s308 + $0xf8] sm:$0xff]
      %s372 = scalar_lea.vmem [#allocation2], 32
      %373 = vst.msk [vmem:[%s372] sm:$0xff] %vm335, %v340
      %374 = vst.msk [vmem:[%s372 + $0x8] sm:$0xff] %vm335, %v341
      %375 = vst.msk [vmem:[%s372 + $0x10] sm:$0xff] %vm335, %v342
      %376 = vst.msk [vmem:[%s372 + $0x18] sm:$0xff] %vm335, %v343
      %377 = vst.msk [vmem:[%s372 + $0x20] sm:$0xff] %vm335, %v344
      %378 = vst.msk [vmem:[%s372 + $0x28] sm:$0xff] %vm335, %v345
      %379 = vst.msk [vmem:[%s372 + $0x30] sm:$0xff] %vm335, %v346
      %380 = vst.msk [vmem:[%s372 + $0x38] sm:$0xff] %vm335, %v347
      %381 = vst.msk [vmem:[%s372 + $0x40] sm:$0xff] %vm335, %v348
      %382 = vst.msk [vmem:[%s372 + $0x48] sm:$0xff] %vm335, %v349
      %383 = vst.msk [vmem:[%s372 + $0x50] sm:$0xff] %vm335, %v350
      %384 = vst.msk [vmem:[%s372 + $0x58] sm:$0xff] %vm335, %v351
      %385 = vst.msk [vmem:[%s372 + $0x60] sm:$0xff] %vm335, %v352
      %386 = vst.msk [vmem:[%s372 + $0x68] sm:$0xff] %vm335, %v353
      %387 = vst.msk [vmem:[%s372 + $0x70] sm:$0xff] %vm335, %v354
      %388 = vst.msk [vmem:[%s372 + $0x78] sm:$0xff] %vm335, %v355
      %389 = vst.msk [vmem:[%s372 + $0x80] sm:$0xff] %vm335, %v356
      %390 = vst.msk [vmem:[%s372 + $0x88] sm:$0xff] %vm335, %v357
      %391 = vst.msk [vmem:[%s372 + $0x90] sm:$0xff] %vm335, %v358
      %392 = vst.msk [vmem:[%s372 + $0x98] sm:$0xff] %vm335, %v359
      %393 = vst.msk [vmem:[%s372 + $0xa0] sm:$0xff] %vm335, %v360
      %394 = vst.msk [vmem:[%s372 + $0xa8] sm:$0xff] %vm335, %v361
      %395 = vst.msk [vmem:[%s372 + $0xb0] sm:$0xff] %vm335, %v362
      %396 = vst.msk [vmem:[%s372 + $0xb8] sm:$0xff] %vm335, %v363
      %397 = vst.msk [vmem:[%s372 + $0xc0] sm:$0xff] %vm335, %v364
      %398 = vst.msk [vmem:[%s372 + $0xc8] sm:$0xff] %vm335, %v365
      %399 = vst.msk [vmem:[%s372 + $0xd0] sm:$0xff] %vm335, %v366
      %400 = vst.msk [vmem:[%s372 + $0xd8] sm:$0xff] %vm335, %v367
      %401 = vst.msk [vmem:[%s372 + $0xe0] sm:$0xff] %vm335, %v368
      %402 = vst.msk [vmem:[%s372 + $0xe8] sm:$0xff] %vm335, %v369
      %403 = vst.msk [vmem:[%s372 + $0xf0] sm:$0xff] %vm335, %v370
      %404 = vst.msk [vmem:[%s372 + $0xf8] sm:$0xff] %vm335, %v371
      %s405 = scalar_lea.vmem %s318, 32
      %v406 = vld [vmem:[%s405] sm:$0xff]
      %v407 = vld [vmem:[%s405 + $0x8] sm:$0xff]
      %v408 = vld [vmem:[%s405 + $0x10] sm:$0xff]
      %v409 = vld [vmem:[%s405 + $0x18] sm:$0xff]
      %s410 = scalar_lea.vmem [#allocation2], 288
      %411 = vst.msk [vmem:[%s410] sm:$0xff] %vm335, %v406
      %412 = vst.msk [vmem:[%s410 + $0x8] sm:$0xff] %vm335, %v407
      %413 = vst.msk [vmem:[%s410 + $0x10] sm:$0xff] %vm335, %v408
      %414 = vst.msk [vmem:[%s410 + $0x18] sm:$0xff] %vm335, %v409
      %v415 = vld [vmem:[#allocation2] sm:$0xff]
      %v416 = vld [vmem:[#allocation2 + $0x8] sm:$0xff]
      %v417 = vld [vmem:[#allocation2 + $0x10] sm:$0xff]
      %v418 = vld [vmem:[#allocation2 + $0x18] sm:$0xff]
      %v419 = vld [vmem:[#allocation2 + $0x20] sm:$0xff]
      %v420 = vld [vmem:[#allocation2 + $0x28] sm:$0xff]
      %v421 = vld [vmem:[#allocation2 + $0x30] sm:$0xff]
      %v422 = vld [vmem:[#allocation2 + $0x38] sm:$0xff]
      %v423 = vld [vmem:[#allocation2 + $0x40] sm:$0xff]
      %v424 = vld [vmem:[#allocation2 + $0x48] sm:$0xff]
      %v425 = vld [vmem:[#allocation2 + $0x50] sm:$0xff]
      %v426 = vld [vmem:[#allocation2 + $0x58] sm:$0xff]
      %v427 = vld [vmem:[#allocation2 + $0x60] sm:$0xff]
      %v428 = vld [vmem:[#allocation2 + $0x68] sm:$0xff]
      %v429 = vld [vmem:[#allocation2 + $0x70] sm:$0xff]
      %v430 = vld [vmem:[#allocation2 + $0x78] sm:$0xff]
      %v431 = vld [vmem:[#allocation2 + $0x80] sm:$0xff]
      %v432 = vld [vmem:[#allocation2 + $0x88] sm:$0xff]
      %v433 = vld [vmem:[#allocation2 + $0x90] sm:$0xff]
      %v434 = vld [vmem:[#allocation2 + $0x98] sm:$0xff]
      %v435 = vld [vmem:[#allocation2 + $0xa0] sm:$0xff]
      %v436 = vld [vmem:[#allocation2 + $0xa8] sm:$0xff]
      %v437 = vld [vmem:[#allocation2 + $0xb0] sm:$0xff]
      %v438 = vld [vmem:[#allocation2 + $0xb8] sm:$0xff]
      %v439 = vld [vmem:[#allocation2 + $0xc0] sm:$0xff]
      %v440 = vld [vmem:[#allocation2 + $0xc8] sm:$0xff]
      %v441 = vld [vmem:[#allocation2 + $0xd0] sm:$0xff]
      %v442 = vld [vmem:[#allocation2 + $0xd8] sm:$0xff]
      %v443 = vld [vmem:[#allocation2 + $0xe0] sm:$0xff]
      %v444 = vld [vmem:[#allocation2 + $0xe8] sm:$0xff]
      %v445 = vld [vmem:[#allocation2 + $0xf0] sm:$0xff]
      %v446 = vld [vmem:[#allocation2 + $0xf8] sm:$0xff]
      %v447 = vld [vmem:[#allocation2 + $0x100] sm:$0xff]
      %v448 = vld [vmem:[#allocation2 + $0x108] sm:$0xff]
      %v449 = vld [vmem:[#allocation2 + $0x110] sm:$0xff]
      %v450 = vld [vmem:[#allocation2 + $0x118] sm:$0xff]
      %v451 = vld [vmem:[#allocation2 + $0x120] sm:$0xff]
      %v452 = vld [vmem:[#allocation2 + $0x128] sm:$0xff]
      %v453 = vld [vmem:[#allocation2 + $0x130] sm:$0xff]
      %v454 = vld [vmem:[#allocation2 + $0x138] sm:$0xff]
      %v455 = vrot.slane %v415, 7
      %v456 = vrot.slane %v417, 7
      %v457 = vrot.slane %v419, 7
      %v458 = vrot.slane %v421, 7
      %v459 = vrot.slane %v423, 7
      %v460 = vrot.slane %v425, 7
      %v461 = vrot.slane %v427, 7
      %v462 = vrot.slane %v429, 7
      %v463 = vrot.slane %v431, 7
      %v464 = vrot.slane %v433, 7
      %v465 = vrot.slane %v435, 7
      %v466 = vrot.slane %v437, 7
      %v467 = vrot.slane %v439, 7
      %v468 = vrot.slane %v441, 7
      %v469 = vrot.slane %v443, 7
      %v470 = vrot.slane %v445, 7
      %v471 = vrot.slane %v447, 7
      %v472 = vrot.slane %v449, 7
      %v473 = vrot.slane %v451, 7
      %v474 = vrot.slane %v453, 7
      %v475 = vrot.slane %v416, 7
      %v476 = vrot.slane %v418, 7
      %v477 = vrot.slane %v420, 7
      %v478 = vrot.slane %v422, 7
      %v479 = vrot.slane %v424, 7
      %v480 = vrot.slane %v426, 7
      %v481 = vrot.slane %v428, 7
      %v482 = vrot.slane %v430, 7
      %v483 = vrot.slane %v432, 7
      %v484 = vrot.slane %v434, 7
      %v485 = vrot.slane %v436, 7
      %v486 = vrot.slane %v438, 7
      %v487 = vrot.slane %v440, 7
      %v488 = vrot.slane %v442, 7
      %v489 = vrot.slane %v444, 7
      %v490 = vrot.slane %v446, 7
      %v491 = vrot.slane %v448, 7
      %v492 = vrot.slane %v450, 7
      %v493 = vrot.slane %v452, 7
      %v494 = vrot.slane %v454, 7
      %v495 = vlaneseq
      %v496 = vshrl.u32 %v495, 7
      %vm497 = vcmp.lt.s32.totalorder %v496, 1
      %v498 = vsel %vm497, %v455, %v475
      %v499 = vsel %vm497, %v456, %v476
      %v500 = vsel %vm497, %v457, %v477
      %v501 = vsel %vm497, %v458, %v478
      %v502 = vsel %vm497, %v459, %v479
      %v503 = vsel %vm497, %v460, %v480
      %v504 = vsel %vm497, %v461, %v481
      %v505 = vsel %vm497, %v462, %v482
      %v506 = vsel %vm497, %v463, %v483
      %v507 = vsel %vm497, %v464, %v484
      %v508 = vsel %vm497, %v465, %v485
      %v509 = vsel %vm497, %v466, %v486
      %v510 = vsel %vm497, %v467, %v487
      %v511 = vsel %vm497, %v468, %v488
      %v512 = vsel %vm497, %v469, %v489
      %v513 = vsel %vm497, %v470, %v490
      %v514 = vsel %vm497, %v471, %v491
      %v515 = vsel %vm497, %v472, %v492
      %v516 = vsel %vm497, %v473, %v493
      %v517 = vsel %vm497, %v474, %v494
      %v518 = vsel %vm497, %v475, %v455
      %v519 = vsel %vm497, %v476, %v456
      %v520 = vsel %vm497, %v477, %v457
      %v521 = vsel %vm497, %v478, %v458
      %v522 = vsel %vm497, %v479, %v459
      %v523 = vsel %vm497, %v480, %v460
      %v524 = vsel %vm497, %v481, %v461
      %v525 = vsel %vm497, %v482, %v462
      %v526 = vsel %vm497, %v483, %v463
      %v527 = vsel %vm497, %v484, %v464
      %v528 = vsel %vm497, %v485, %v465
      %v529 = vsel %vm497, %v486, %v466
      %v530 = vsel %vm497, %v487, %v467
      %v531 = vsel %vm497, %v488, %v468
      %v532 = vsel %vm497, %v489, %v469
      %v533 = vsel %vm497, %v490, %v470
      %v534 = vsel %vm497, %v491, %v471
      %v535 = vsel %vm497, %v492, %v472
      %v536 = vsel %vm497, %v493, %v473
      %v537 = vsel %vm497, %v494, %v474
      %v538 = vadd.s32 %v496, 8
      %vm539 = vcmp.eq.s32.totalorder %v496, 0
      %vm540 = vcmp.eq.s32.totalorder %v538, 0
      %v541 = vsel %vm539, 0.0, %v518
      %v542 = vsel %vm540, 0.0, %v498
      %v543 = vsel %vm539, 0.0, %v519
      %v544 = vsel %vm540, 0.0, %v499
      %v545 = vsel %vm539, 0.0, %v520
      %v546 = vsel %vm540, 0.0, %v500
      %v547 = vsel %vm539, 0.0, %v521
      %v548 = vsel %vm540, 0.0, %v501
      %v549 = vsel %vm539, 0.0, %v522
      %v550 = vsel %vm540, 0.0, %v502
      %v551 = vsel %vm539, 0.0, %v523
      %v552 = vsel %vm540, 0.0, %v503
      %v553 = vsel %vm539, 0.0, %v524
      %v554 = vsel %vm540, 0.0, %v504
      %v555 = vsel %vm539, 0.0, %v525
      %v556 = vsel %vm540, 0.0, %v505
      %v557 = vsel %vm539, 0.0, %v526
      %v558 = vsel %vm540, 0.0, %v506
      %v559 = vsel %vm539, 0.0, %v527
      %v560 = vsel %vm540, 0.0, %v507
      %v561 = vsel %vm539, 0.0, %v528
      %v562 = vsel %vm540, 0.0, %v508
      %v563 = vsel %vm539, 0.0, %v529
      %v564 = vsel %vm540, 0.0, %v509
      %v565 = vsel %vm539, 0.0, %v530
      %v566 = vsel %vm540, 0.0, %v510
      %v567 = vsel %vm539, 0.0, %v531
      %v568 = vsel %vm540, 0.0, %v511
      %v569 = vsel %vm539, 0.0, %v532
      %v570 = vsel %vm540, 0.0, %v512
      %v571 = vsel %vm539, 0.0, %v533
      %v572 = vsel %vm540, 0.0, %v513
      %v573 = vsel %vm539, 0.0, %v534
      %v574 = vsel %vm540, 0.0, %v514
      %v575 = vsel %vm539, 0.0, %v535
      %v576 = vsel %vm540, 0.0, %v515
      %v577 = vsel %vm539, 0.0, %v536
      %v578 = vsel %vm540, 0.0, %v516
      %v579 = vsel %vm539, 0.0, %v537
      %v580 = vsel %vm540, 0.0, %v517
      %v581 = vpack.c.bf16 %v542, %v541
      %v582 = vpack.c.bf16 %v544, %v543
      %v583 = vpack.c.bf16 %v546, %v545
      %v584 = vpack.c.bf16 %v548, %v547
      %v585 = vpack.c.bf16 %v550, %v549
      %v586 = vpack.c.bf16 %v552, %v551
      %v587 = vpack.c.bf16 %v554, %v553
      %v588 = vpack.c.bf16 %v556, %v555
      %v589 = vpack.c.bf16 %v558, %v557
      %v590 = vpack.c.bf16 %v560, %v559
      %v591 = vpack.c.bf16 %v562, %v561
      %v592 = vpack.c.bf16 %v564, %v563
      %v593 = vpack.c.bf16 %v566, %v565
      %v594 = vpack.c.bf16 %v568, %v567
      %v595 = vpack.c.bf16 %v570, %v569
      %v596 = vpack.c.bf16 %v572, %v571
      %v597 = vpack.c.bf16 %v574, %v573
      %v598 = vpack.c.bf16 %v576, %v575
      %599 = vst.msk [vmem:[#allocation4] sm:$0xff] %vm335, %v581
      %600 = vst.msk [vmem:[#allocation4 + $0x8] sm:$0xff] %vm335, %v582
      %601 = vst.msk [vmem:[#allocation4 + $0x10] sm:$0xff] %vm335, %v583
      %602 = vst.msk [vmem:[#allocation4 + $0x18] sm:$0xff] %vm335, %v584
      %603 = vst.msk [vmem:[#allocation4 + $0x20] sm:$0xff] %vm335, %v585
      %604 = vst.msk [vmem:[#allocation4 + $0x28] sm:$0xff] %vm335, %v586
      %605 = vst.msk [vmem:[#allocation4 + $0x30] sm:$0xff] %vm335, %v587
      %606 = vst.msk [vmem:[#allocation4 + $0x38] sm:$0xff] %vm335, %v588
      %607 = vst.msk [vmem:[#allocation4 + $0x40] sm:$0xff] %vm335, %v589
      %608 = vst.msk [vmem:[#allocation4 + $0x48] sm:$0xff] %vm335, %v590
      %609 = vst.msk [vmem:[#allocation4 + $0x50] sm:$0xff] %vm335, %v591
      %610 = vst.msk [vmem:[#allocation4 + $0x58] sm:$0xff] %vm335, %v592
      %611 = vst.msk [vmem:[#allocation4 + $0x60] sm:$0xff] %vm335, %v593
      %612 = vst.msk [vmem:[#allocation4 + $0x68] sm:$0xff] %vm335, %v594
      %613 = vst.msk [vmem:[#allocation4 + $0x70] sm:$0xff] %vm335, %v595
      %614 = vst.msk [vmem:[#allocation4 + $0x78] sm:$0xff] %vm335, %v596
      %615 = vst.msk [vmem:[#allocation4 + $0x80] sm:$0xff] %vm335, %v597
      %616 = vst.msk [vmem:[#allocation4 + $0x88] sm:$0xff] %vm335, %v598
      %v617 = vpack.c.bf16 %v578, %v577
      %636 = vrot.lane.b32.xlu0 %v582, 12
      %v637 = vpop.permute.xlu0 %636
      %638 = vrot.lane.b32.xlu0 %v583, 12
      %v639 = vpop.permute.xlu0 %638
      %640 = vrot.lane.b32.xlu0 %v584, 12
      %v641 = vpop.permute.xlu0 %640
      %642 = vrot.lane.b32.xlu0 %v585, 12
      %v643 = vpop.permute.xlu0 %642
      %644 = vrot.lane.b32.xlu0 %v586, 12
      %v645 = vpop.permute.xlu0 %644
      %646 = vrot.lane.b32.xlu0 %v587, 12
      %v647 = vpop.permute.xlu0 %646
      %648 = vrot.lane.b32.xlu0 %v588, 12
      %v649 = vpop.permute.xlu0 %648
      %650 = vrot.lane.b32.xlu0 %v589, 12
      %v651 = vpop.permute.xlu0 %650
      %652 = vrot.lane.b32.xlu0 %v590, 12
      %v653 = vpop.permute.xlu0 %652
      %654 = vrot.lane.b32.xlu0 %v591, 12
      %v655 = vpop.permute.xlu0 %654
      %656 = vrot.lane.b32.xlu0 %v592, 12
      %v657 = vpop.permute.xlu0 %656
      %658 = vrot.lane.b32.xlu0 %v593, 12
      %v659 = vpop.permute.xlu0 %658
      %660 = vrot.lane.b32.xlu0 %v594, 12
      %v661 = vpop.permute.xlu0 %660
      %662 = vrot.lane.b32.xlu0 %v595, 12
      %v663 = vpop.permute.xlu0 %662
      %664 = vrot.lane.b32.xlu0 %v596, 12
      %v665 = vpop.permute.xlu0 %664
      %666 = vrot.lane.b32.xlu0 %v597, 12
      %v667 = vpop.permute.xlu0 %666
      %668 = vrot.lane.b32.xlu0 %v598, 12
      %v669 = vpop.permute.xlu0 %668
      %670 = vrot.lane.b32.xlu0 %v617, 12
      %v671 = vpop.permute.xlu0 %670
      %vm690 = vcmask 130144
      %691 = vst.msk [vmem:[#allocation4] sm:$0xff] %vm690, %v637
      %692 = vst.msk [vmem:[#allocation4 + $0x8] sm:$0xff] %vm690, %v639
      %693 = vst.msk [vmem:[#allocation4 + $0x10] sm:$0xff] %vm690, %v641
      %694 = vst.msk [vmem:[#allocation4 + $0x18] sm:$0xff] %vm690, %v643
      %695 = vst.msk [vmem:[#allocation4 + $0x20] sm:$0xff] %vm690, %v645
      %696 = vst.msk [vmem:[#allocation4 + $0x28] sm:$0xff] %vm690, %v647
      %697 = vst.msk [vmem:[#allocation4 + $0x30] sm:$0xff] %vm690, %v649
      %698 = vst.msk [vmem:[#allocation4 + $0x38] sm:$0xff] %vm690, %v651
      %699 = vst.msk [vmem:[#allocation4 + $0x40] sm:$0xff] %vm690, %v653
      %700 = vst.msk [vmem:[#allocation4 + $0x48] sm:$0xff] %vm690, %v655
      %701 = vst.msk [vmem:[#allocation4 + $0x50] sm:$0xff] %vm690, %v657
      %702 = vst.msk [vmem:[#allocation4 + $0x58] sm:$0xff] %vm690, %v659
      %703 = vst.msk [vmem:[#allocation4 + $0x60] sm:$0xff] %vm690, %v661
      %704 = vst.msk [vmem:[#allocation4 + $0x68] sm:$0xff] %vm690, %v663
      %705 = vst.msk [vmem:[#allocation4 + $0x70] sm:$0xff] %vm690, %v665
      %706 = vst.msk [vmem:[#allocation4 + $0x78] sm:$0xff] %vm690, %v667
      %707 = vst.msk [vmem:[#allocation4 + $0x80] sm:$0xff] %vm690, %v669
      %708 = vst.msk [vmem:[#allocation4 + $0x88] sm:$0xff] %vm690, %v671
      %v709 = vpack.c.bf16 %v580, %v579
      %711 = vrot.lane.b32.xlu0 %v583, 24
      %v712 = vpop.permute.xlu0 %711
      %713 = vrot.lane.b32.xlu0 %v584, 24
      %v714 = vpop.permute.xlu0 %713
      %715 = vrot.lane.b32.xlu0 %v585, 24
      %v716 = vpop.permute.xlu0 %715
      %717 = vrot.lane.b32.xlu0 %v586, 24
      %v718 = vpop.permute.xlu0 %717
      %719 = vrot.lane.b32.xlu0 %v587, 24
      %v720 = vpop.permute.xlu0 %719
      %721 = vrot.lane.b32.xlu0 %v588, 24
      %v722 = vpop.permute.xlu0 %721
      %723 = vrot.lane.b32.xlu0 %v589, 24
      %v724 = vpop.permute.xlu0 %723
      %725 = vrot.lane.b32.xlu0 %v590, 24
      %v726 = vpop.permute.xlu0 %725
      %727 = vrot.lane.b32.xlu0 %v591, 24
      %v728 = vpop.permute.xlu0 %727
      %729 = vrot.lane.b32.xlu0 %v592, 24
      %v730 = vpop.permute.xlu0 %729
      %731 = vrot.lane.b32.xlu0 %v593, 24
      %v732 = vpop.permute.xlu0 %731
      %733 = vrot.lane.b32.xlu0 %v594, 24
      %v734 = vpop.permute.xlu0 %733
      %735 = vrot.lane.b32.xlu0 %v595, 24
      %v736 = vpop.permute.xlu0 %735
      %737 = vrot.lane.b32.xlu0 %v596, 24
      %v738 = vpop.permute.xlu0 %737
      %739 = vrot.lane.b32.xlu0 %v597, 24
      %v740 = vpop.permute.xlu0 %739
      %741 = vrot.lane.b32.xlu0 %v598, 24
      %v742 = vpop.permute.xlu0 %741
      %743 = vrot.lane.b32.xlu0 %v617, 24
      %v744 = vpop.permute.xlu0 %743
      %745 = vrot.lane.b32.xlu0 %v709, 24
      %v746 = vpop.permute.xlu0 %745
      %vm765 = vcmask 228544
      %766 = vst.msk [vmem:[#allocation4] sm:$0xff] %vm765, %v712
      %767 = vst.msk [vmem:[#allocation4 + $0x8] sm:$0xff] %vm765, %v714
      %768 = vst.msk [vmem:[#allocation4 + $0x10] sm:$0xff] %vm765, %v716
      %769 = vst.msk [vmem:[#allocation4 + $0x18] sm:$0xff] %vm765, %v718
      %770 = vst.msk [vmem:[#allocation4 + $0x20] sm:$0xff] %vm765, %v720
      %771 = vst.msk [vmem:[#allocation4 + $0x28] sm:$0xff] %vm765, %v722
      %772 = vst.msk [vmem:[#allocation4 + $0x30] sm:$0xff] %vm765, %v724
      %773 = vst.msk [vmem:[#allocation4 + $0x38] sm:$0xff] %vm765, %v726
      %774 = vst.msk [vmem:[#allocation4 + $0x40] sm:$0xff] %vm765, %v728
      %775 = vst.msk [vmem:[#allocation4 + $0x48] sm:$0xff] %vm765, %v730
      %776 = vst.msk [vmem:[#allocation4 + $0x50] sm:$0xff] %vm765, %v732
      %777 = vst.msk [vmem:[#allocation4 + $0x58] sm:$0xff] %vm765, %v734
      %778 = vst.msk [vmem:[#allocation4 + $0x60] sm:$0xff] %vm765, %v736
      %779 = vst.msk [vmem:[#allocation4 + $0x68] sm:$0xff] %vm765, %v738
      %780 = vst.msk [vmem:[#allocation4 + $0x70] sm:$0xff] %vm765, %v740
      %781 = vst.msk [vmem:[#allocation4 + $0x78] sm:$0xff] %vm765, %v742
      %782 = vst.msk [vmem:[#allocation4 + $0x80] sm:$0xff] %vm765, %v744
      %783 = vst.msk [vmem:[#allocation4 + $0x88] sm:$0xff] %vm765, %v746
      %v784 = vpack.c.bf16 %v416, %v415
      %v785 = vpack.c.bf16 %v418, %v417
      %v786 = vpack.c.bf16 %v420, %v419
      %v787 = vpack.c.bf16 %v422, %v421
      %v788 = vpack.c.bf16 %v424, %v423
      %v789 = vpack.c.bf16 %v426, %v425
      %v790 = vpack.c.bf16 %v428, %v427
      %v791 = vpack.c.bf16 %v430, %v429
      %v792 = vpack.c.bf16 %v432, %v431
      %v793 = vpack.c.bf16 %v434, %v433
      %v794 = vpack.c.bf16 %v436, %v435
      %v795 = vpack.c.bf16 %v438, %v437
      %v796 = vpack.c.bf16 %v440, %v439
      %v797 = vpack.c.bf16 %v442, %v441
      %v798 = vpack.c.bf16 %v444, %v443
      %v799 = vpack.c.bf16 %v446, %v445
      %v800 = vpack.c.bf16 %v448, %v447
      %v801 = vpack.c.bf16 %v450, %v449
      %820 = vrot.lane.b32.xlu0 %v784, 4
      %v821 = vpop.permute.xlu0 %820
      %822 = vrot.lane.b32.xlu0 %v785, 4
      %v823 = vpop.permute.xlu0 %822
      %824 = vrot.lane.b32.xlu0 %v786, 4
      %v825 = vpop.permute.xlu0 %824
      %826 = vrot.lane.b32.xlu0 %v787, 4
      %v827 = vpop.permute.xlu0 %826
      %828 = vrot.lane.b32.xlu0 %v788, 4
      %v829 = vpop.permute.xlu0 %828
      %830 = vrot.lane.b32.xlu0 %v789, 4
      %v831 = vpop.permute.xlu0 %830
      %832 = vrot.lane.b32.xlu0 %v790, 4
      %v833 = vpop.permute.xlu0 %832
      %834 = vrot.lane.b32.xlu0 %v791, 4
      %v835 = vpop.permute.xlu0 %834
      %836 = vrot.lane.b32.xlu0 %v792, 4
      %v837 = vpop.permute.xlu0 %836
      %838 = vrot.lane.b32.xlu0 %v793, 4
      %v839 = vpop.permute.xlu0 %838
      %840 = vrot.lane.b32.xlu0 %v794, 4
      %v841 = vpop.permute.xlu0 %840
      %842 = vrot.lane.b32.xlu0 %v795, 4
      %v843 = vpop.permute.xlu0 %842
      %844 = vrot.lane.b32.xlu0 %v796, 4
      %v845 = vpop.permute.xlu0 %844
      %846 = vrot.lane.b32.xlu0 %v797, 4
      %v847 = vpop.permute.xlu0 %846
      %848 = vrot.lane.b32.xlu0 %v798, 4
      %v849 = vpop.permute.xlu0 %848
      %850 = vrot.lane.b32.xlu0 %v799, 4
      %v851 = vpop.permute.xlu0 %850
      %852 = vrot.lane.b32.xlu0 %v800, 4
      %v853 = vpop.permute.xlu0 %852
      %854 = vrot.lane.b32.xlu0 %v801, 4
      %v855 = vpop.permute.xlu0 %854
      %vm874 = vcmask 64544
      %875 = vst.msk [vmem:[#allocation4] sm:$0xff] %vm874, %v821
      %876 = vst.msk [vmem:[#allocation4 + $0x8] sm:$0xff] %vm874, %v823
      %877 = vst.msk [vmem:[#allocation4 + $0x10] sm:$0xff] %vm874, %v825
      %878 = vst.msk [vmem:[#allocation4 + $0x18] sm:$0xff] %vm874, %v827
      %879 = vst.msk [vmem:[#allocation4 + $0x20] sm:$0xff] %vm874, %v829
      %880 = vst.msk [vmem:[#allocation4 + $0x28] sm:$0xff] %vm874, %v831
      %881 = vst.msk [vmem:[#allocation4 + $0x30] sm:$0xff] %vm874, %v833
      %882 = vst.msk [vmem:[#allocation4 + $0x38] sm:$0xff] %vm874, %v835
      %883 = vst.msk [vmem:[#allocation4 + $0x40] sm:$0xff] %vm874, %v837
      %884 = vst.msk [vmem:[#allocation4 + $0x48] sm:$0xff] %vm874, %v839
      %885 = vst.msk [vmem:[#allocation4 + $0x50] sm:$0xff] %vm874, %v841
      %886 = vst.msk [vmem:[#allocation4 + $0x58] sm:$0xff] %vm874, %v843
      %887 = vst.msk [vmem:[#allocation4 + $0x60] sm:$0xff] %vm874, %v845
      %888 = vst.msk [vmem:[#allocation4 + $0x68] sm:$0xff] %vm874, %v847
      %889 = vst.msk [vmem:[#allocation4 + $0x70] sm:$0xff] %vm874, %v849
      %890 = vst.msk [vmem:[#allocation4 + $0x78] sm:$0xff] %vm874, %v851
      %891 = vst.msk [vmem:[#allocation4 + $0x80] sm:$0xff] %vm874, %v853
      %892 = vst.msk [vmem:[#allocation4 + $0x88] sm:$0xff] %vm874, %v855
      %v893 = vpack.c.bf16 %v452, %v451
      %895 = vrot.lane.b32.xlu0 %v785, 16
      %v896 = vpop.permute.xlu0 %895
      %897 = vrot.lane.b32.xlu0 %v786, 16
      %v898 = vpop.permute.xlu0 %897
      %899 = vrot.lane.b32.xlu0 %v787, 16
      %v900 = vpop.permute.xlu0 %899
      %901 = vrot.lane.b32.xlu0 %v788, 16
      %v902 = vpop.permute.xlu0 %901
      %903 = vrot.lane.b32.xlu0 %v789, 16
      %v904 = vpop.permute.xlu0 %903
      %905 = vrot.lane.b32.xlu0 %v790, 16
      %v906 = vpop.permute.xlu0 %905
      %907 = vrot.lane.b32.xlu0 %v791, 16
      %v908 = vpop.permute.xlu0 %907
      %909 = vrot.lane.b32.xlu0 %v792, 16
      %v910 = vpop.permute.xlu0 %909
      %911 = vrot.lane.b32.xlu0 %v793, 16
      %v912 = vpop.permute.xlu0 %911
      %913 = vrot.lane.b32.xlu0 %v794, 16
      %v914 = vpop.permute.xlu0 %913
      %915 = vrot.lane.b32.xlu0 %v795, 16
      %v916 = vpop.permute.xlu0 %915
      %917 = vrot.lane.b32.xlu0 %v796, 16
      %v918 = vpop.permute.xlu0 %917
      %919 = vrot.lane.b32.xlu0 %v797, 16
      %v920 = vpop.permute.xlu0 %919
      %921 = vrot.lane.b32.xlu0 %v798, 16
      %v922 = vpop.permute.xlu0 %921
      %923 = vrot.lane.b32.xlu0 %v799, 16
      %v924 = vpop.permute.xlu0 %923
      %925 = vrot.lane.b32.xlu0 %v800, 16
      %v926 = vpop.permute.xlu0 %925
      %927 = vrot.lane.b32.xlu0 %v801, 16
      %v928 = vpop.permute.xlu0 %927
      %929 = vrot.lane.b32.xlu0 %v893, 16
      %v930 = vpop.permute.xlu0 %929
      %vm949 = vcmask 162944
      %950 = vst.msk [vmem:[#allocation4] sm:$0xff] %vm949, %v896
      %951 = vst.msk [vmem:[#allocation4 + $0x8] sm:$0xff] %vm949, %v898
      %952 = vst.msk [vmem:[#allocation4 + $0x10] sm:$0xff] %vm949, %v900
      %953 = vst.msk [vmem:[#allocation4 + $0x18] sm:$0xff] %vm949, %v902
      %954 = vst.msk [vmem:[#allocation4 + $0x20] sm:$0xff] %vm949, %v904
      %955 = vst.msk [vmem:[#allocation4 + $0x28] sm:$0xff] %vm949, %v906
      %956 = vst.msk [vmem:[#allocation4 + $0x30] sm:$0xff] %vm949, %v908
      %957 = vst.msk [vmem:[#allocation4 + $0x38] sm:$0xff] %vm949, %v910
      %958 = vst.msk [vmem:[#allocation4 + $0x40] sm:$0xff] %vm949, %v912
      %959 = vst.msk [vmem:[#allocation4 + $0x48] sm:$0xff] %vm949, %v914
      %960 = vst.msk [vmem:[#allocation4 + $0x50] sm:$0xff] %vm949, %v916
      %961 = vst.msk [vmem:[#allocation4 + $0x58] sm:$0xff] %vm949, %v918
      %962 = vst.msk [vmem:[#allocation4 + $0x60] sm:$0xff] %vm949, %v920
      %963 = vst.msk [vmem:[#allocation4 + $0x68] sm:$0xff] %vm949, %v922
      %964 = vst.msk [vmem:[#allocation4 + $0x70] sm:$0xff] %vm949, %v924
      %965 = vst.msk [vmem:[#allocation4 + $0x78] sm:$0xff] %vm949, %v926
      %966 = vst.msk [vmem:[#allocation4 + $0x80] sm:$0xff] %vm949, %v928
      %967 = vst.msk [vmem:[#allocation4 + $0x88] sm:$0xff] %vm949, %v930
      %v968 = vpack.c.bf16 %v454, %v453
      %970 = vrot.lane.b32.xlu0 %v786, 28
      %v971 = vpop.permute.xlu0 %970
      %972 = vrot.lane.b32.xlu0 %v787, 28
      %v973 = vpop.permute.xlu0 %972
      %974 = vrot.lane.b32.xlu0 %v788, 28
      %v975 = vpop.permute.xlu0 %974
      %976 = vrot.lane.b32.xlu0 %v789, 28
      %v977 = vpop.permute.xlu0 %976
      %978 = vrot.lane.b32.xlu0 %v790, 28
      %v979 = vpop.permute.xlu0 %978
      %980 = vrot.lane.b32.xlu0 %v791, 28
      %v981 = vpop.permute.xlu0 %980
      %982 = vrot.lane.b32.xlu0 %v792, 28
      %v983 = vpop.permute.xlu0 %982
      %984 = vrot.lane.b32.xlu0 %v793, 28
      %v985 = vpop.permute.xlu0 %984
      %986 = vrot.lane.b32.xlu0 %v794, 28
      %v987 = vpop.permute.xlu0 %986
      %988 = vrot.lane.b32.xlu0 %v795, 28
      %v989 = vpop.permute.xlu0 %988
      %990 = vrot.lane.b32.xlu0 %v796, 28
      %v991 = vpop.permute.xlu0 %990
      %992 = vrot.lane.b32.xlu0 %v797, 28
      %v993 = vpop.permute.xlu0 %992
      %994 = vrot.lane.b32.xlu0 %v798, 28
      %v995 = vpop.permute.xlu0 %994
      %996 = vrot.lane.b32.xlu0 %v799, 28
      %v997 = vpop.permute.xlu0 %996
      %998 = vrot.lane.b32.xlu0 %v800, 28
      %v999 = vpop.permute.xlu0 %998
      %1000 = vrot.lane.b32.xlu0 %v801, 28
      %v1001 = vpop.permute.xlu0 %1000
      %1002 = vrot.lane.b32.xlu0 %v893, 28
      %v1003 = vpop.permute.xlu0 %1002
      %1004 = vrot.lane.b32.xlu0 %v968, 28
      %v1005 = vpop.permute.xlu0 %1004
      %vm1024 = vcmask 261344
      %1025 = vst.msk [vmem:[#allocation4] sm:$0xff] %vm1024, %v971
      %1026 = vst.msk [vmem:[#allocation4 + $0x8] sm:$0xff] %vm1024, %v973
      %1027 = vst.msk [vmem:[#allocation4 + $0x10] sm:$0xff] %vm1024, %v975
      %1028 = vst.msk [vmem:[#allocation4 + $0x18] sm:$0xff] %vm1024, %v977
      %1029 = vst.msk [vmem:[#allocation4 + $0x20] sm:$0xff] %vm1024, %v979
      %1030 = vst.msk [vmem:[#allocation4 + $0x28] sm:$0xff] %vm1024, %v981
      %1031 = vst.msk [vmem:[#allocation4 + $0x30] sm:$0xff] %vm1024, %v983
      %1032 = vst.msk [vmem:[#allocation4 + $0x38] sm:$0xff] %vm1024, %v985
      %1033 = vst.msk [vmem:[#allocation4 + $0x40] sm:$0xff] %vm1024, %v987
      %1034 = vst.msk [vmem:[#allocation4 + $0x48] sm:$0xff] %vm1024, %v989
      %1035 = vst.msk [vmem:[#allocation4 + $0x50] sm:$0xff] %vm1024, %v991
      %1036 = vst.msk [vmem:[#allocation4 + $0x58] sm:$0xff] %vm1024, %v993
      %1037 = vst.msk [vmem:[#allocation4 + $0x60] sm:$0xff] %vm1024, %v995
      %1038 = vst.msk [vmem:[#allocation4 + $0x68] sm:$0xff] %vm1024, %v997
      %1039 = vst.msk [vmem:[#allocation4 + $0x70] sm:$0xff] %vm1024, %v999
      %1040 = vst.msk [vmem:[#allocation4 + $0x78] sm:$0xff] %vm1024, %v1001
      %1041 = vst.msk [vmem:[#allocation4 + $0x80] sm:$0xff] %vm1024, %v1003
      %1042 = vst.msk [vmem:[#allocation4 + $0x88] sm:$0xff] %vm1024, %v1005
      %v1043 = vrot.slane %v415, 1
      %v1044 = vrot.slane %v417, 1
      %v1045 = vrot.slane %v419, 1
      %v1046 = vrot.slane %v421, 1
      %v1047 = vrot.slane %v423, 1
      %v1048 = vrot.slane %v425, 1
      %v1049 = vrot.slane %v427, 1
      %v1050 = vrot.slane %v429, 1
      %v1051 = vrot.slane %v431, 1
      %v1052 = vrot.slane %v433, 1
      %v1053 = vrot.slane %v435, 1
      %v1054 = vrot.slane %v437, 1
      %v1055 = vrot.slane %v439, 1
      %v1056 = vrot.slane %v441, 1
      %v1057 = vrot.slane %v443, 1
      %v1058 = vrot.slane %v445, 1
      %v1059 = vrot.slane %v447, 1
      %v1060 = vrot.slane %v449, 1
      %v1061 = vrot.slane %v451, 1
      %v1062 = vrot.slane %v453, 1
      %v1063 = vrot.slane %v416, 1
      %v1064 = vrot.slane %v418, 1
      %v1065 = vrot.slane %v420, 1
      %v1066 = vrot.slane %v422, 1
      %v1067 = vrot.slane %v424, 1
      %v1068 = vrot.slane %v426, 1
      %v1069 = vrot.slane %v428, 1
      %v1070 = vrot.slane %v430, 1
      %v1071 = vrot.slane %v432, 1
      %v1072 = vrot.slane %v434, 1
      %v1073 = vrot.slane %v436, 1
      %v1074 = vrot.slane %v438, 1
      %v1075 = vrot.slane %v440, 1
      %v1076 = vrot.slane %v442, 1
      %v1077 = vrot.slane %v444, 1
      %v1078 = vrot.slane %v446, 1
      %v1079 = vrot.slane %v448, 1
      %v1080 = vrot.slane %v450, 1
      %v1081 = vrot.slane %v452, 1
      %v1082 = vrot.slane %v454, 1
      %vm1083 = vcmp.lt.s32.totalorder %v496, 7
      %v1084 = vsel %vm1083, %v1043, %v1063
      %v1085 = vsel %vm1083, %v1044, %v1064
      %v1086 = vsel %vm1083, %v1045, %v1065
      %v1087 = vsel %vm1083, %v1046, %v1066
      %v1088 = vsel %vm1083, %v1047, %v1067
      %v1089 = vsel %vm1083, %v1048, %v1068
      %v1090 = vsel %vm1083, %v1049, %v1069
      %v1091 = vsel %vm1083, %v1050, %v1070
      %v1092 = vsel %vm1083, %v1051, %v1071
      %v1093 = vsel %vm1083, %v1052, %v1072
      %v1094 = vsel %vm1083, %v1053, %v1073
      %v1095 = vsel %vm1083, %v1054, %v1074
      %v1096 = vsel %vm1083, %v1055, %v1075
      %v1097 = vsel %vm1083, %v1056, %v1076
      %v1098 = vsel %vm1083, %v1057, %v1077
      %v1099 = vsel %vm1083, %v1058, %v1078
      %v1100 = vsel %vm1083, %v1059, %v1079
      %v1101 = vsel %vm1083, %v1060, %v1080
      %v1102 = vsel %vm1083, %v1061, %v1081
      %v1103 = vsel %vm1083, %v1062, %v1082
      %v1104 = vsel %vm1083, %v1063, %v1043
      %v1105 = vsel %vm1083, %v1064, %v1044
      %v1106 = vsel %vm1083, %v1065, %v1045
      %v1107 = vsel %vm1083, %v1066, %v1046
      %v1108 = vsel %vm1083, %v1067, %v1047
      %v1109 = vsel %vm1083, %v1068, %v1048
      %v1110 = vsel %vm1083, %v1069, %v1049
      %v1111 = vsel %vm1083, %v1070, %v1050
      %v1112 = vsel %vm1083, %v1071, %v1051
      %v1113 = vsel %vm1083, %v1072, %v1052
      %v1114 = vsel %vm1083, %v1073, %v1053
      %v1115 = vsel %vm1083, %v1074, %v1054
      %v1116 = vsel %vm1083, %v1075, %v1055
      %v1117 = vsel %vm1083, %v1076, %v1056
      %v1118 = vsel %vm1083, %v1077, %v1057
      %v1119 = vsel %vm1083, %v1078, %v1058
      %v1120 = vsel %vm1083, %v1079, %v1059
      %v1121 = vsel %vm1083, %v1080, %v1060
      %v1122 = vsel %vm1083, %v1081, %v1061
      %v1123 = vsel %vm1083, %v1082, %v1062
      %vm1124 = vcmp.eq.s32.totalorder %v496, 15
      %vm1125 = vcmp.eq.s32.totalorder %v538, 15
      %v1126 = vsel %vm1124, 0.0, %v1084
      %v1127 = vsel %vm1125, 0.0, %v1104
      %v1128 = vsel %vm1124, 0.0, %v1085
      %v1129 = vsel %vm1125, 0.0, %v1105
      %v1130 = vsel %vm1124, 0.0, %v1086
      %v1131 = vsel %vm1125, 0.0, %v1106
      %v1132 = vsel %vm1124, 0.0, %v1087
      %v1133 = vsel %vm1125, 0.0, %v1107
      %v1134 = vsel %vm1124, 0.0, %v1088
      %v1135 = vsel %vm1125, 0.0, %v1108
      %v1136 = vsel %vm1124, 0.0, %v1089
      %v1137 = vsel %vm1125, 0.0, %v1109
      %v1138 = vsel %vm1124, 0.0, %v1090
      %v1139 = vsel %vm1125, 0.0, %v1110
      %v1140 = vsel %vm1124, 0.0, %v1091
      %v1141 = vsel %vm1125, 0.0, %v1111
      %v1142 = vsel %vm1124, 0.0, %v1092
      %v1143 = vsel %vm1125, 0.0, %v1112
      %v1144 = vsel %vm1124, 0.0, %v1093
      %v1145 = vsel %vm1125, 0.0, %v1113
      %v1146 = vsel %vm1124, 0.0, %v1094
      %v1147 = vsel %vm1125, 0.0, %v1114
      %v1148 = vsel %vm1124, 0.0, %v1095
      %v1149 = vsel %vm1125, 0.0, %v1115
      %v1150 = vsel %vm1124, 0.0, %v1096
      %v1151 = vsel %vm1125, 0.0, %v1116
      %v1152 = vsel %vm1124, 0.0, %v1097
      %v1153 = vsel %vm1125, 0.0, %v1117
      %v1154 = vsel %vm1124, 0.0, %v1098
      %v1155 = vsel %vm1125, 0.0, %v1118
      %v1156 = vsel %vm1124, 0.0, %v1099
      %v1157 = vsel %vm1125, 0.0, %v1119
      %v1158 = vsel %vm1124, 0.0, %v1100
      %v1159 = vsel %vm1125, 0.0, %v1120
      %v1160 = vsel %vm1124, 0.0, %v1101
      %v1161 = vsel %vm1125, 0.0, %v1121
      %v1162 = vsel %vm1124, 0.0, %v1102
      %v1163 = vsel %vm1125, 0.0, %v1122
      %v1164 = vsel %vm1124, 0.0, %v1103
      %v1165 = vsel %vm1125, 0.0, %v1123
      %v1166 = vpack.c.bf16 %v1127, %v1126
      %v1167 = vpack.c.bf16 %v1129, %v1128
      %v1168 = vpack.c.bf16 %v1131, %v1130
      %v1169 = vpack.c.bf16 %v1133, %v1132
      %v1170 = vpack.c.bf16 %v1135, %v1134
      %v1171 = vpack.c.bf16 %v1137, %v1136
      %v1172 = vpack.c.bf16 %v1139, %v1138
      %v1173 = vpack.c.bf16 %v1141, %v1140
      %v1174 = vpack.c.bf16 %v1143, %v1142
      %v1175 = vpack.c.bf16 %v1145, %v1144
      %v1176 = vpack.c.bf16 %v1147, %v1146
      %v1177 = vpack.c.bf16 %v1149, %v1148
      %v1178 = vpack.c.bf16 %v1151, %v1150
      %v1179 = vpack.c.bf16 %v1153, %v1152
      %v1180 = vpack.c.bf16 %v1155, %v1154
      %v1181 = vpack.c.bf16 %v1157, %v1156
      %v1182 = vpack.c.bf16 %v1159, %v1158
      %v1183 = vpack.c.bf16 %v1161, %v1160
      %1202 = vrot.lane.b32.xlu0 %v1166, 8
      %v1203 = vpop.permute.xlu0 %1202
      %1204 = vrot.lane.b32.xlu0 %v1167, 8
      %v1205 = vpop.permute.xlu0 %1204
      %1206 = vrot.lane.b32.xlu0 %v1168, 8
      %v1207 = vpop.permute.xlu0 %1206
      %1208 = vrot.lane.b32.xlu0 %v1169, 8
      %v1209 = vpop.permute.xlu0 %1208
      %1210 = vrot.lane.b32.xlu0 %v1170, 8
      %v1211 = vpop.permute.xlu0 %1210
      %1212 = vrot.lane.b32.xlu0 %v1171, 8
      %v1213 = vpop.permute.xlu0 %1212
      %1214 = vrot.lane.b32.xlu0 %v1172, 8
      %v1215 = vpop.permute.xlu0 %1214
      %1216 = vrot.lane.b32.xlu0 %v1173, 8
      %v1217 = vpop.permute.xlu0 %1216
      %1218 = vrot.lane.b32.xlu0 %v1174, 8
      %v1219 = vpop.permute.xlu0 %1218
      %1220 = vrot.lane.b32.xlu0 %v1175, 8
      %v1221 = vpop.permute.xlu0 %1220
      %1222 = vrot.lane.b32.xlu0 %v1176, 8
      %v1223 = vpop.permute.xlu0 %1222
      %1224 = vrot.lane.b32.xlu0 %v1177, 8
      %v1225 = vpop.permute.xlu0 %1224
      %1226 = vrot.lane.b32.xlu0 %v1178, 8
      %v1227 = vpop.permute.xlu0 %1226
      %1228 = vrot.lane.b32.xlu0 %v1179, 8
      %v1229 = vpop.permute.xlu0 %1228
      %1230 = vrot.lane.b32.xlu0 %v1180, 8
      %v1231 = vpop.permute.xlu0 %1230
      %1232 = vrot.lane.b32.xlu0 %v1181, 8
      %v1233 = vpop.permute.xlu0 %1232
      %1234 = vrot.lane.b32.xlu0 %v1182, 8
      %v1235 = vpop.permute.xlu0 %1234
      %1236 = vrot.lane.b32.xlu0 %v1183, 8
      %v1237 = vpop.permute.xlu0 %1236
      %vm1256 = vcmask 97344
      %1257 = vst.msk [vmem:[#allocation4] sm:$0xff] %vm1256, %v1203
      %1258 = vst.msk [vmem:[#allocation4 + $0x8] sm:$0xff] %vm1256, %v1205
      %1259 = vst.msk [vmem:[#allocation4 + $0x10] sm:$0xff] %vm1256, %v1207
      %1260 = vst.msk [vmem:[#allocation4 + $0x18] sm:$0xff] %vm1256, %v1209
      %1261 = vst.msk [vmem:[#allocation4 + $0x20] sm:$0xff] %vm1256, %v1211
      %1262 = vst.msk [vmem:[#allocation4 + $0x28] sm:$0xff] %vm1256, %v1213
      %1263 = vst.msk [vmem:[#allocation4 + $0x30] sm:$0xff] %vm1256, %v1215
      %1264 = vst.msk [vmem:[#allocation4 + $0x38] sm:$0xff] %vm1256, %v1217
      %1265 = vst.msk [vmem:[#allocation4 + $0x40] sm:$0xff] %vm1256, %v1219
      %1266 = vst.msk [vmem:[#allocation4 + $0x48] sm:$0xff] %vm1256, %v1221
      %1267 = vst.msk [vmem:[#allocation4 + $0x50] sm:$0xff] %vm1256, %v1223
      %1268 = vst.msk [vmem:[#allocation4 + $0x58] sm:$0xff] %vm1256, %v1225
      %1269 = vst.msk [vmem:[#allocation4 + $0x60] sm:$0xff] %vm1256, %v1227
      %1270 = vst.msk [vmem:[#allocation4 + $0x68] sm:$0xff] %vm1256, %v1229
      %1271 = vst.msk [vmem:[#allocation4 + $0x70] sm:$0xff] %vm1256, %v1231
      %1272 = vst.msk [vmem:[#allocation4 + $0x78] sm:$0xff] %vm1256, %v1233
      %1273 = vst.msk [vmem:[#allocation4 + $0x80] sm:$0xff] %vm1256, %v1235
      %1274 = vst.msk [vmem:[#allocation4 + $0x88] sm:$0xff] %vm1256, %v1237
      %v1275 = vpack.c.bf16 %v1163, %v1162
      %1277 = vrot.lane.b32.xlu0 %v1167, 20
      %v1278 = vpop.permute.xlu0 %1277
      %1279 = vrot.lane.b32.xlu0 %v1168, 20
      %v1280 = vpop.permute.xlu0 %1279
      %1281 = vrot.lane.b32.xlu0 %v1169, 20
      %v1282 = vpop.permute.xlu0 %1281
      %1283 = vrot.lane.b32.xlu0 %v1170, 20
      %v1284 = vpop.permute.xlu0 %1283
      %1285 = vrot.lane.b32.xlu0 %v1171, 20
      %v1286 = vpop.permute.xlu0 %1285
      %1287 = vrot.lane.b32.xlu0 %v1172, 20
      %v1288 = vpop.permute.xlu0 %1287
      %1289 = vrot.lane.b32.xlu0 %v1173, 20
      %v1290 = vpop.permute.xlu0 %1289
      %1291 = vrot.lane.b32.xlu0 %v1174, 20
      %v1292 = vpop.permute.xlu0 %1291
      %1293 = vrot.lane.b32.xlu0 %v1175, 20
      %v1294 = vpop.permute.xlu0 %1293
      %1295 = vrot.lane.b32.xlu0 %v1176, 20
      %v1296 = vpop.permute.xlu0 %1295
      %1297 = vrot.lane.b32.xlu0 %v1177, 20
      %v1298 = vpop.permute.xlu0 %1297
      %1299 = vrot.lane.b32.xlu0 %v1178, 20
      %v1300 = vpop.permute.xlu0 %1299
      %1301 = vrot.lane.b32.xlu0 %v1179, 20
      %v1302 = vpop.permute.xlu0 %1301
      %1303 = vrot.lane.b32.xlu0 %v1180, 20
      %v1304 = vpop.permute.xlu0 %1303
      %1305 = vrot.lane.b32.xlu0 %v1181, 20
      %v1306 = vpop.permute.xlu0 %1305
      %1307 = vrot.lane.b32.xlu0 %v1182, 20
      %v1308 = vpop.permute.xlu0 %1307
      %1309 = vrot.lane.b32.xlu0 %v1183, 20
      %v1310 = vpop.permute.xlu0 %1309
      %1311 = vrot.lane.b32.xlu0 %v1275, 20
      %v1312 = vpop.permute.xlu0 %1311
      %vm1331 = vcmask 195744
      %1332 = vst.msk [vmem:[#allocation4] sm:$0xff] %vm1331, %v1278
      %1333 = vst.msk [vmem:[#allocation4 + $0x8] sm:$0xff] %vm1331, %v1280
      %1334 = vst.msk [vmem:[#allocation4 + $0x10] sm:$0xff] %vm1331, %v1282
      %1335 = vst.msk [vmem:[#allocation4 + $0x18] sm:$0xff] %vm1331, %v1284
      %1336 = vst.msk [vmem:[#allocation4 + $0x20] sm:$0xff] %vm1331, %v1286
      %1337 = vst.msk [vmem:[#allocation4 + $0x28] sm:$0xff] %vm1331, %v1288
      %1338 = vst.msk [vmem:[#allocation4 + $0x30] sm:$0xff] %vm1331, %v1290
      %1339 = vst.msk [vmem:[#allocation4 + $0x38] sm:$0xff] %vm1331, %v1292
      %1340 = vst.msk [vmem:[#allocation4 + $0x40] sm:$0xff] %vm1331, %v1294
      %1341 = vst.msk [vmem:[#allocation4 + $0x48] sm:$0xff] %vm1331, %v1296
      %1342 = vst.msk [vmem:[#allocation4 + $0x50] sm:$0xff] %vm1331, %v1298
      %1343 = vst.msk [vmem:[#allocation4 + $0x58] sm:$0xff] %vm1331, %v1300
      %1344 = vst.msk [vmem:[#allocation4 + $0x60] sm:$0xff] %vm1331, %v1302
      %1345 = vst.msk [vmem:[#allocation4 + $0x68] sm:$0xff] %vm1331, %v1304
      %1346 = vst.msk [vmem:[#allocation4 + $0x70] sm:$0xff] %vm1331, %v1306
      %1347 = vst.msk [vmem:[#allocation4 + $0x78] sm:$0xff] %vm1331, %v1308
      %1348 = vst.msk [vmem:[#allocation4 + $0x80] sm:$0xff] %vm1331, %v1310
      %1349 = vst.msk [vmem:[#allocation4 + $0x88] sm:$0xff] %vm1331, %v1312
      %v1350 = vpack.c.bf16 %v1165, %v1164
      %1352 = vrot.lane.b32.xlu0 %v1168, 32
      %v1353 = vpop.permute.xlu0 %1352
      %1354 = vrot.lane.b32.xlu0 %v1169, 32
      %v1355 = vpop.permute.xlu0 %1354
      %1356 = vrot.lane.b32.xlu0 %v1170, 32
      %v1357 = vpop.permute.xlu0 %1356
      %1358 = vrot.lane.b32.xlu0 %v1171, 32
      %v1359 = vpop.permute.xlu0 %1358
      %1360 = vrot.lane.b32.xlu0 %v1172, 32
      %v1361 = vpop.permute.xlu0 %1360
      %1362 = vrot.lane.b32.xlu0 %v1173, 32
      %v1363 = vpop.permute.xlu0 %1362
      %1364 = vrot.lane.b32.xlu0 %v1174, 32
      %v1365 = vpop.permute.xlu0 %1364
      %1366 = vrot.lane.b32.xlu0 %v1175, 32
      %v1367 = vpop.permute.xlu0 %1366
      %1368 = vrot.lane.b32.xlu0 %v1176, 32
      %v1369 = vpop.permute.xlu0 %1368
      %1370 = vrot.lane.b32.xlu0 %v1177, 32
      %v1371 = vpop.permute.xlu0 %1370
      %1372 = vrot.lane.b32.xlu0 %v1178, 32
      %v1373 = vpop.permute.xlu0 %1372
      %1374 = vrot.lane.b32.xlu0 %v1179, 32
      %v1375 = vpop.permute.xlu0 %1374
      %1376 = vrot.lane.b32.xlu0 %v1180, 32
      %v1377 = vpop.permute.xlu0 %1376
      %1378 = vrot.lane.b32.xlu0 %v1181, 32
      %v1379 = vpop.permute.xlu0 %1378
      %1380 = vrot.lane.b32.xlu0 %v1182, 32
      %v1381 = vpop.permute.xlu0 %1380
      %1382 = vrot.lane.b32.xlu0 %v1183, 32
      %v1383 = vpop.permute.xlu0 %1382
      %1384 = vrot.lane.b32.xlu0 %v1275, 32
      %v1385 = vpop.permute.xlu0 %1384
      %1386 = vrot.lane.b32.xlu0 %v1350, 32
      %v1387 = vpop.permute.xlu0 %1386
      %vm1406 = vcmask 294144
      %1407 = vst.msk [vmem:[#allocation4] sm:$0xff] %vm1406, %v1353
      %1408 = vst.msk [vmem:[#allocation4 + $0x8] sm:$0xff] %vm1406, %v1355
      %1409 = vst.msk [vmem:[#allocation4 + $0x10] sm:$0xff] %vm1406, %v1357
      %1410 = vst.msk [vmem:[#allocation4 + $0x18] sm:$0xff] %vm1406, %v1359
      %1411 = vst.msk [vmem:[#allocation4 + $0x20] sm:$0xff] %vm1406, %v1361
      %1412 = vst.msk [vmem:[#allocation4 + $0x28] sm:$0xff] %vm1406, %v1363
      %1413 = vst.msk [vmem:[#allocation4 + $0x30] sm:$0xff] %vm1406, %v1365
      %1414 = vst.msk [vmem:[#allocation4 + $0x38] sm:$0xff] %vm1406, %v1367
      %1415 = vst.msk [vmem:[#allocation4 + $0x40] sm:$0xff] %vm1406, %v1369
      %1416 = vst.msk [vmem:[#allocation4 + $0x48] sm:$0xff] %vm1406, %v1371
      %1417 = vst.msk [vmem:[#allocation4 + $0x50] sm:$0xff] %vm1406, %v1373
      %1418 = vst.msk [vmem:[#allocation4 + $0x58] sm:$0xff] %vm1406, %v1375
      %1419 = vst.msk [vmem:[#allocation4 + $0x60] sm:$0xff] %vm1406, %v1377
      %1420 = vst.msk [vmem:[#allocation4 + $0x68] sm:$0xff] %vm1406, %v1379
      %1421 = vst.msk [vmem:[#allocation4 + $0x70] sm:$0xff] %vm1406, %v1381
      %1422 = vst.msk [vmem:[#allocation4 + $0x78] sm:$0xff] %vm1406, %v1383
      %1423 = vst.msk [vmem:[#allocation4 + $0x80] sm:$0xff] %vm1406, %v1385
      %1424 = vst.msk [vmem:[#allocation4 + $0x88] sm:$0xff] %vm1406, %v1387
      %v1425 = vld [vmem:[#allocation4] sm:$0xff]
      %v1426 = vld [vmem:[#allocation4 + $0x8] sm:$0xff]
      %v1427 = vld [vmem:[#allocation4 + $0x10] sm:$0xff]
      %v1428 = vld [vmem:[#allocation4 + $0x18] sm:$0xff]
      %v1429 = vld [vmem:[#allocation4 + $0x20] sm:$0xff]
      %v1430 = vld [vmem:[#allocation4 + $0x28] sm:$0xff]
      %v1431 = vld [vmem:[#allocation4 + $0x30] sm:$0xff]
      %v1432 = vld [vmem:[#allocation4 + $0x38] sm:$0xff]
      %v1433 = vld [vmem:[#allocation4 + $0x40] sm:$0xff]
      %v1434 = vld [vmem:[#allocation4 + $0x48] sm:$0xff]
      %v1435 = vld [vmem:[#allocation4 + $0x50] sm:$0xff]
      %v1436 = vld [vmem:[#allocation4 + $0x58] sm:$0xff]
      %v1437 = vld [vmem:[#allocation4 + $0x60] sm:$0xff]
      %v1438 = vld [vmem:[#allocation4 + $0x68] sm:$0xff]
      %v1439 = vld [vmem:[#allocation4 + $0x70] sm:$0xff]
      %v1440 = vld [vmem:[#allocation4 + $0x78] sm:$0xff]
      %v1441 = vld [vmem:[#allocation4 + $0x80] sm:$0xff]
      %v1442 = vld [vmem:[#allocation4 + $0x88] sm:$0xff]
      %v1443 = vld [vmem:[%s2] sm:$0xf]
      %v1444 = vld [vmem:[%s2 + $0x4] sm:$0xf]
      %v1445 = vld [vmem:[%s2 + $0x8] sm:$0xf]
      %v1446 = vld [vmem:[%s2 + $0xc] sm:$0xf]
      %v1447 = vld [vmem:[%s2 + $0x10] sm:$0x3]
      %v1448 = vld [vmem:[%s3] sm:$0x1]
      %v1450 = vlaneseq
      %v1451 = vshrl.u32 %v1450, 7
      %v1452 = vsub.s32 0, %v1451
      %v1453 = vrot.slane %v1448, %v1452
      %v1460 = vunpack.c.l.b16 %v1443
      %v1461 = vunpack.c.l.b16 %v1444
      %v1462 = vunpack.c.l.b16 %v1445
      %v1463 = vunpack.c.l.b16 %v1446
      %v1464 = vunpack.c.l.b16 %v1447
      %v1465 = vpack.c.b16 %v1461, %v1460
      %v1466 = vpack.c.b16 %v1463, %v1462
      %v1467 = vpack.c.b16 %v1464, %v1464
      %vm1470 = vcmask 293888
      %v1472 = vsel %vm1470, %v1425, 0
      %v1475 = vsel %vm1470, %v1426, 0
      %v1478 = vsel %vm1470, %v1427, 0
      %v1481 = vsel %vm1470, %v1428, 0
      %v1484 = vsel %vm1470, %v1429, 0
      %v1487 = vsel %vm1470, %v1430, 0
      %v1490 = vsel %vm1470, %v1431, 0
      %v1493 = vsel %vm1470, %v1432, 0
      %v1496 = vsel %vm1470, %v1433, 0
      %v1499 = vsel %vm1470, %v1434, 0
      %v1502 = vsel %vm1470, %v1435, 0
      %v1505 = vsel %vm1470, %v1436, 0
      %v1508 = vsel %vm1470, %v1437, 0
      %v1511 = vsel %vm1470, %v1438, 0
      %v1514 = vsel %vm1470, %v1439, 0
      %v1517 = vsel %vm1470, %v1440, 0
      %v1520 = vsel %vm1470, %v1441, 0
      %v1523 = vsel %vm1470, %v1442, 0
      %vm1525 = vcmask 1041408
      %v1527 = vsel %vm1525, %v1467, 0
      %1529 = vmatprep.subr.bf16.mxu0 0
      %1530 = vmatpush1.bf16.msra.mxu0 %v1465
      %1531 = vmatprep.subr.bf16.mxu0 0
      %1532 = vmatpush1.bf16.msra.mxu0 %v1466
      %1533 = vmatprep.subr.bf16.mxu0 0
      %1534 = vmatpush1.bf16.msra.mxu0 %v1527
      %1535 = vmatprep.subr.bf16.mxu0 0
      %1536 = vmatpush1.bf16.msra.mxu0 0
      %1537 = vmatprep.subr.bf16.mxu0 0
      %1538 = vmatpush1.bf16.msra.mxu0 0
      %1539 = vmatprep.subr.bf16.mxu0 0
      %1540 = vmatpush1.bf16.msra.mxu0 0
      %1541 = vmatprep.subr.bf16.mxu0 0
      %1542 = vmatpush1.bf16.msra.mxu0 0
      %1543 = vmatprep.subr.bf16.mxu0 0
      %1544 = vmatpush1.bf16.msra.mxu0 0
      %1545 = vmatprep.subr.bf16.mxu0 0
      %1546 = vmatpush1.bf16.msra.mxu0 0
      %1547 = vmatprep.subr.bf16.mxu0 0
      %1548 = vmatpush1.bf16.msra.mxu0 0
      %1549 = vmatprep.subr.bf16.mxu0 0
      %1550 = vmatpush1.bf16.msra.mxu0 0
      %1551 = vmatprep.subr.bf16.mxu0 0
      %1552 = vmatpush1.bf16.msra.mxu0 0
      %1553 = vmatprep.subr.bf16.mxu0 0
      %1554 = vmatpush1.bf16.msra.mxu0 0
      %1555 = vmatprep.subr.bf16.mxu0 0
      %1556 = vmatpush1.bf16.msra.mxu0 0
      %1557 = vmatprep.subr.bf16.mxu0 0
      %1558 = vmatpush1.bf16.msra.mxu0 0
      %1559 = vmatprep.subr.bf16.mxu0 0
      %1560 = vmatpush1.bf16.msra.mxu0 0
      %1561 = vmatprep.mubr.bf16.mxu0 0
      %1562 = vmatmul.mubr.bf16.gmra.mrb[0].mxu0 %v1472
      %v1563 = vpop.f32.mrb[0].mxu0
      %v1564 = vadd.f32 %v1453, %v1563
      %v1565 = vpop.f32.mrb[0].mxu0
      %v1566 = vpop.f32.mrb[0].mxu0
      %v1567 = vadd.f32 %v1453, %v1566
      %v1568 = vpop.f32.mrb[0].mxu0
      %1569 = vmatprep.mubr.bf16.mxu0 0
      %1570 = vmatmul.mubr.bf16.gmra.mrb[0].mxu0 %v1475
      %v1571 = vpop.f32.mrb[0].mxu0
      %v1572 = vadd.f32 %v1453, %v1571
      %v1573 = vpop.f32.mrb[0].mxu0
      %v1574 = vpop.f32.mrb[0].mxu0
      %v1575 = vadd.f32 %v1453, %v1574
      %v1576 = vpop.f32.mrb[0].mxu0
      %1577 = vmatprep.mubr.bf16.mxu0 0
      %1578 = vmatmul.mubr.bf16.gmra.mrb[0].mxu0 %v1478
      %v1579 = vpop.f32.mrb[0].mxu0
      %v1580 = vadd.f32 %v1453, %v1579
      %v1581 = vpop.f32.mrb[0].mxu0
      %v1582 = vpop.f32.mrb[0].mxu0
      %v1583 = vadd.f32 %v1453, %v1582
      %v1584 = vpop.f32.mrb[0].mxu0
      %1585 = vmatprep.mubr.bf16.mxu0 0
      %1586 = vmatmul.mubr.bf16.gmra.mrb[0].mxu0 %v1481
      %v1587 = vpop.f32.mrb[0].mxu0
      %v1588 = vadd.f32 %v1453, %v1587
      %v1589 = vpop.f32.mrb[0].mxu0
      %v1590 = vpop.f32.mrb[0].mxu0
      %v1591 = vadd.f32 %v1453, %v1590
      %v1592 = vpop.f32.mrb[0].mxu0
      %1593 = vmatprep.mubr.bf16.mxu0 0
      %1594 = vmatmul.mubr.bf16.gmra.mrb[0].mxu0 %v1484
      %v1595 = vpop.f32.mrb[0].mxu0
      %v1596 = vadd.f32 %v1453, %v1595
      %v1597 = vpop.f32.mrb[0].mxu0
      %v1598 = vpop.f32.mrb[0].mxu0
      %v1599 = vadd.f32 %v1453, %v1598
      %v1600 = vpop.f32.mrb[0].mxu0
      %1601 = vmatprep.mubr.bf16.mxu0 0
      %1602 = vmatmul.mubr.bf16.gmra.mrb[0].mxu0 %v1487
      %v1603 = vpop.f32.mrb[0].mxu0
      %v1604 = vadd.f32 %v1453, %v1603
      %v1605 = vpop.f32.mrb[0].mxu0
      %v1606 = vpop.f32.mrb[0].mxu0
      %v1607 = vadd.f32 %v1453, %v1606
      %v1608 = vpop.f32.mrb[0].mxu0
      %1609 = vmatprep.mubr.bf16.mxu0 0
      %1610 = vmatmul.mubr.bf16.gmra.mrb[0].mxu0 %v1490
      %v1611 = vpop.f32.mrb[0].mxu0
      %v1612 = vadd.f32 %v1453, %v1611
      %v1613 = vpop.f32.mrb[0].mxu0
      %v1614 = vpop.f32.mrb[0].mxu0
      %v1615 = vadd.f32 %v1453, %v1614
      %v1616 = vpop.f32.mrb[0].mxu0
      %1617 = vmatprep.mubr.bf16.mxu0 0
      %1618 = vmatmul.mubr.bf16.gmra.mrb[0].mxu0 %v1493
      %v1619 = vpop.f32.mrb[0].mxu0
      %v1620 = vadd.f32 %v1453, %v1619
      %v1621 = vpop.f32.mrb[0].mxu0
      %v1622 = vpop.f32.mrb[0].mxu0
      %v1623 = vadd.f32 %v1453, %v1622
      %v1624 = vpop.f32.mrb[0].mxu0
      %1625 = vmatprep.mubr.bf16.mxu0 0
      %1626 = vmatmul.mubr.bf16.gmra.mrb[0].mxu0 %v1496
      %v1627 = vpop.f32.mrb[0].mxu0
      %v1628 = vadd.f32 %v1453, %v1627
      %v1629 = vpop.f32.mrb[0].mxu0
      %v1630 = vpop.f32.mrb[0].mxu0
      %v1631 = vadd.f32 %v1453, %v1630
      %v1632 = vpop.f32.mrb[0].mxu0
      %1633 = vmatprep.mubr.bf16.mxu0 0
      %1634 = vmatmul.mubr.bf16.gmra.mrb[0].mxu0 %v1499
      %v1635 = vpop.f32.mrb[0].mxu0
      %v1636 = vadd.f32 %v1453, %v1635
      %v1637 = vpop.f32.mrb[0].mxu0
      %v1638 = vpop.f32.mrb[0].mxu0
      %v1639 = vadd.f32 %v1453, %v1638
      %v1640 = vpop.f32.mrb[0].mxu0
      %1641 = vmatprep.mubr.bf16.mxu0 0
      %1642 = vmatmul.mubr.bf16.gmra.mrb[0].mxu0 %v1502
      %v1643 = vpop.f32.mrb[0].mxu0
      %v1644 = vadd.f32 %v1453, %v1643
      %v1645 = vpop.f32.mrb[0].mxu0
      %v1646 = vpop.f32.mrb[0].mxu0
      %v1647 = vadd.f32 %v1453, %v1646
      %v1648 = vpop.f32.mrb[0].mxu0
      %1649 = vmatprep.mubr.bf16.mxu0 0
      %1650 = vmatmul.mubr.bf16.gmra.mrb[0].mxu0 %v1505
      %v1651 = vpop.f32.mrb[0].mxu0
      %v1652 = vadd.f32 %v1453, %v1651
      %v1653 = vpop.f32.mrb[0].mxu0
      %v1654 = vpop.f32.mrb[0].mxu0
      %v1655 = vadd.f32 %v1453, %v1654
      %v1656 = vpop.f32.mrb[0].mxu0
      %1657 = vmatprep.mubr.bf16.mxu0 0
      %1658 = vmatmul.mubr.bf16.gmra.mrb[0].mxu0 %v1508
      %v1659 = vpop.f32.mrb[0].mxu0
      %v1660 = vadd.f32 %v1453, %v1659
      %v1661 = vpop.f32.mrb[0].mxu0
      %v1662 = vpop.f32.mrb[0].mxu0
      %v1663 = vadd.f32 %v1453, %v1662
      %v1664 = vpop.f32.mrb[0].mxu0
      %1665 = vmatprep.mubr.bf16.mxu0 0
      %1666 = vmatmul.mubr.bf16.gmra.mrb[0].mxu0 %v1511
      %v1667 = vpop.f32.mrb[0].mxu0
      %v1668 = vadd.f32 %v1453, %v1667
      %v1669 = vpop.f32.mrb[0].mxu0
      %v1670 = vpop.f32.mrb[0].mxu0
      %v1671 = vadd.f32 %v1453, %v1670
      %v1672 = vpop.f32.mrb[0].mxu0
      %1673 = vmatprep.mubr.bf16.mxu0 0
      %1674 = vmatmul.mubr.bf16.gmra.mrb[0].mxu0 %v1514
      %v1675 = vpop.f32.mrb[0].mxu0
      %v1676 = vadd.f32 %v1453, %v1675
      %v1677 = vpop.f32.mrb[0].mxu0
      %v1678 = vpop.f32.mrb[0].mxu0
      %v1679 = vadd.f32 %v1453, %v1678
      %v1680 = vpop.f32.mrb[0].mxu0
      %1681 = vmatprep.mubr.bf16.mxu0 0
      %1682 = vmatmul.mubr.bf16.gmra.mrb[0].mxu0 %v1517
      %v1683 = vpop.f32.mrb[0].mxu0
      %v1684 = vadd.f32 %v1453, %v1683
      %v1685 = vpop.f32.mrb[0].mxu0
      %v1686 = vpop.f32.mrb[0].mxu0
      %v1687 = vadd.f32 %v1453, %v1686
      %v1688 = vpop.f32.mrb[0].mxu0
      %1689 = vmatprep.mubr.bf16.mxu0 0
      %1690 = vmatmul.mubr.bf16.gmra.mrb[0].mxu0 %v1520
      %v1691 = vpop.f32.mrb[0].mxu0
      %v1692 = vadd.f32 %v1453, %v1691
      %v1693 = vpop.f32.mrb[0].mxu0
      %v1694 = vpop.f32.mrb[0].mxu0
      %v1695 = vadd.f32 %v1453, %v1694
      %v1696 = vpop.f32.mrb[0].mxu0
      %1697 = vmatprep.mubr.bf16.mxu0 0
      %1698 = vmatmul.mubr.bf16.gmra.mrb[0].mxu0 %v1523
      %v1699 = vpop.f32.mrb[0].mxu0
      %v1700 = vadd.f32 %v1453, %v1699
      %v1701 = vpop.f32.mrb[0].mxu0
      %v1702 = vpop.f32.mrb[0].mxu0
      %v1703 = vadd.f32 %v1453, %v1702
      %v1704 = vpop.f32.mrb[0].mxu0
      %1705 = vdwg.mxu0
      %vm1706 = vcmp.ge.f32.partialorder %v1564, 0.0
      %vm1707 = vcmp.ge.f32.partialorder %v1567, 0.0
      %vm1708 = vcmp.ge.f32.partialorder %v1572, 0.0
      %vm1709 = vcmp.ge.f32.partialorder %v1575, 0.0
      %vm1710 = vcmp.ge.f32.partialorder %v1580, 0.0
      %vm1711 = vcmp.ge.f32.partialorder %v1583, 0.0
      %vm1712 = vcmp.ge.f32.partialorder %v1588, 0.0
      %vm1713 = vcmp.ge.f32.partialorder %v1591, 0.0
      %vm1714 = vcmp.ge.f32.partialorder %v1596, 0.0
      %vm1715 = vcmp.ge.f32.partialorder %v1599, 0.0
      %vm1716 = vcmp.ge.f32.partialorder %v1604, 0.0
      %vm1717 = vcmp.ge.f32.partialorder %v1607, 0.0
      %vm1718 = vcmp.ge.f32.partialorder %v1612, 0.0
      %vm1719 = vcmp.ge.f32.partialorder %v1615, 0.0
      %vm1720 = vcmp.ge.f32.partialorder %v1620, 0.0
      %vm1721 = vcmp.ge.f32.partialorder %v1623, 0.0
      %vm1722 = vcmp.ge.f32.partialorder %v1628, 0.0
      %vm1723 = vcmp.ge.f32.partialorder %v1631, 0.0
      %vm1724 = vcmp.ge.f32.partialorder %v1636, 0.0
      %vm1725 = vcmp.ge.f32.partialorder %v1639, 0.0
      %vm1726 = vcmp.ge.f32.partialorder %v1644, 0.0
      %vm1727 = vcmp.ge.f32.partialorder %v1647, 0.0
      %vm1728 = vcmp.ge.f32.partialorder %v1652, 0.0
      %vm1729 = vcmp.ge.f32.partialorder %v1655, 0.0
      %vm1730 = vcmp.ge.f32.partialorder %v1660, 0.0
      %vm1731 = vcmp.ge.f32.partialorder %v1663, 0.0
      %vm1732 = vcmp.ge.f32.partialorder %v1668, 0.0
      %vm1733 = vcmp.ge.f32.partialorder %v1671, 0.0
      %vm1734 = vcmp.ge.f32.partialorder %v1676, 0.0
      %vm1735 = vcmp.ge.f32.partialorder %v1679, 0.0
      %vm1736 = vcmp.ge.f32.partialorder %v1684, 0.0
      %vm1737 = vcmp.ge.f32.partialorder %v1687, 0.0
      %vm1738 = vcmp.ge.f32.partialorder %v1692, 0.0
      %vm1739 = vcmp.ge.f32.partialorder %v1695, 0.0
      %vm1740 = vcmp.ge.f32.partialorder %v1700, 0.0
      %vm1741 = vcmp.ge.f32.partialorder %v1703, 0.0
      %v1742 = vmul.f32 %v1564, 0.1
      %v1743 = vmul.f32 %v1567, 0.1
      %v1744 = vmul.f32 %v1572, 0.1
      %v1745 = vmul.f32 %v1575, 0.1
      %v1746 = vmul.f32 %v1580, 0.1
      %v1747 = vmul.f32 %v1583, 0.1
      %v1748 = vmul.f32 %v1588, 0.1
      %v1749 = vmul.f32 %v1591, 0.1
      %v1750 = vmul.f32 %v1596, 0.1
      %v1751 = vmul.f32 %v1599, 0.1
      %v1752 = vmul.f32 %v1604, 0.1
      %v1753 = vmul.f32 %v1607, 0.1
      %v1754 = vmul.f32 %v1612, 0.1
      %v1755 = vmul.f32 %v1615, 0.1
      %v1756 = vmul.f32 %v1620, 0.1
      %v1757 = vmul.f32 %v1623, 0.1
      %v1758 = vmul.f32 %v1628, 0.1
      %v1759 = vmul.f32 %v1631, 0.1
      %v1760 = vmul.f32 %v1636, 0.1
      %v1761 = vmul.f32 %v1639, 0.1
      %v1762 = vmul.f32 %v1644, 0.1
      %v1763 = vmul.f32 %v1647, 0.1
      %v1764 = vmul.f32 %v1652, 0.1
      %v1765 = vmul.f32 %v1655, 0.1
      %v1766 = vmul.f32 %v1660, 0.1
      %v1767 = vmul.f32 %v1663, 0.1
      %v1768 = vmul.f32 %v1668, 0.1
      %v1769 = vmul.f32 %v1671, 0.1
      %v1770 = vmul.f32 %v1676, 0.1
      %v1771 = vmul.f32 %v1679, 0.1
      %v1772 = vmul.f32 %v1684, 0.1
      %v1773 = vmul.f32 %v1687, 0.1
      %v1774 = vmul.f32 %v1692, 0.1
      %v1775 = vmul.f32 %v1695, 0.1
      %v1776 = vmul.f32 %v1700, 0.1
      %v1777 = vmul.f32 %v1703, 0.1
      %v1778 = vsel %vm1706, %v1564, %v1742
      %v1779 = vsel %vm1707, %v1567, %v1743
      %v1780 = vsel %vm1708, %v1572, %v1744
      %v1781 = vsel %vm1709, %v1575, %v1745
      %v1782 = vsel %vm1710, %v1580, %v1746
      %v1783 = vsel %vm1711, %v1583, %v1747
      %v1784 = vsel %vm1712, %v1588, %v1748
      %v1785 = vsel %vm1713, %v1591, %v1749
      %v1786 = vsel %vm1714, %v1596, %v1750
      %v1787 = vsel %vm1715, %v1599, %v1751
      %v1788 = vsel %vm1716, %v1604, %v1752
      %v1789 = vsel %vm1717, %v1607, %v1753
      %v1790 = vsel %vm1718, %v1612, %v1754
      %v1791 = vsel %vm1719, %v1615, %v1755
      %v1792 = vsel %vm1720, %v1620, %v1756
      %v1793 = vsel %vm1721, %v1623, %v1757
      %v1794 = vsel %vm1722, %v1628, %v1758
      %v1795 = vsel %vm1723, %v1631, %v1759
      %v1796 = vsel %vm1724, %v1636, %v1760
      %v1797 = vsel %vm1725, %v1639, %v1761
      %v1798 = vsel %vm1726, %v1644, %v1762
      %v1799 = vsel %vm1727, %v1647, %v1763
      %v1800 = vsel %vm1728, %v1652, %v1764
      %v1801 = vsel %vm1729, %v1655, %v1765
      %v1802 = vsel %vm1730, %v1660, %v1766
      %v1803 = vsel %vm1731, %v1663, %v1767
      %v1804 = vsel %vm1732, %v1668, %v1768
      %v1805 = vsel %vm1733, %v1671, %v1769
      %v1806 = vsel %vm1734, %v1676, %v1770
      %v1807 = vsel %vm1735, %v1679, %v1771
      %v1808 = vsel %vm1736, %v1684, %v1772
      %v1809 = vsel %vm1737, %v1687, %v1773
      %v1810 = vsel %vm1738, %v1692, %v1774
      %v1811 = vsel %vm1739, %v1695, %v1775
      %v1812 = vsel %vm1740, %v1700, %v1776
      %v1813 = vsel %vm1741, %v1703, %v1777
      %1814 = vst.msk [vmem:[#allocation3] sm:$0xff] %vm335, %v1778
      %1815 = vst.msk [vmem:[#allocation3 + $0x8] sm:$0xff] %vm335, %v1779
      %1816 = vst.msk [vmem:[#allocation3 + $0x10] sm:$0xff] %vm335, %v1780
      %1817 = vst.msk [vmem:[#allocation3 + $0x18] sm:$0xff] %vm335, %v1781
      %1818 = vst.msk [vmem:[#allocation3 + $0x20] sm:$0xff] %vm335, %v1782
      %1819 = vst.msk [vmem:[#allocation3 + $0x28] sm:$0xff] %vm335, %v1783
      %1820 = vst.msk [vmem:[#allocation3 + $0x30] sm:$0xff] %vm335, %v1784
      %1821 = vst.msk [vmem:[#allocation3 + $0x38] sm:$0xff] %vm335, %v1785
      %1822 = vst.msk [vmem:[#allocation3 + $0x40] sm:$0xff] %vm335, %v1786
      %1823 = vst.msk [vmem:[#allocation3 + $0x48] sm:$0xff] %vm335, %v1787
      %1824 = vst.msk [vmem:[#allocation3 + $0x50] sm:$0xff] %vm335, %v1788
      %1825 = vst.msk [vmem:[#allocation3 + $0x58] sm:$0xff] %vm335, %v1789
      %1826 = vst.msk [vmem:[#allocation3 + $0x60] sm:$0xff] %vm335, %v1790
      %1827 = vst.msk [vmem:[#allocation3 + $0x68] sm:$0xff] %vm335, %v1791
      %1828 = vst.msk [vmem:[#allocation3 + $0x70] sm:$0xff] %vm335, %v1792
      %1829 = vst.msk [vmem:[#allocation3 + $0x78] sm:$0xff] %vm335, %v1793
      %1830 = vst.msk [vmem:[#allocation3 + $0x80] sm:$0xff] %vm335, %v1794
      %1831 = vst.msk [vmem:[#allocation3 + $0x88] sm:$0xff] %vm335, %v1795
      %1832 = vst.msk [vmem:[#allocation3 + $0x90] sm:$0xff] %vm335, %v1796
      %1833 = vst.msk [vmem:[#allocation3 + $0x98] sm:$0xff] %vm335, %v1797
      %1834 = vst.msk [vmem:[#allocation3 + $0xa0] sm:$0xff] %vm335, %v1798
      %1835 = vst.msk [vmem:[#allocation3 + $0xa8] sm:$0xff] %vm335, %v1799
      %1836 = vst.msk [vmem:[#allocation3 + $0xb0] sm:$0xff] %vm335, %v1800
      %1837 = vst.msk [vmem:[#allocation3 + $0xb8] sm:$0xff] %vm335, %v1801
      %1838 = vst.msk [vmem:[#allocation3 + $0xc0] sm:$0xff] %vm335, %v1802
      %1839 = vst.msk [vmem:[#allocation3 + $0xc8] sm:$0xff] %vm335, %v1803
      %1840 = vst.msk [vmem:[#allocation3 + $0xd0] sm:$0xff] %vm335, %v1804
      %1841 = vst.msk [vmem:[#allocation3 + $0xd8] sm:$0xff] %vm335, %v1805
      %1842 = vst.msk [vmem:[#allocation3 + $0xe0] sm:$0xff] %vm335, %v1806
      %1843 = vst.msk [vmem:[#allocation3 + $0xe8] sm:$0xff] %vm335, %v1807
      %1844 = vst.msk [vmem:[#allocation3 + $0xf0] sm:$0xff] %vm335, %v1808
      %1845 = vst.msk [vmem:[#allocation3 + $0xf8] sm:$0xff] %vm335, %v1809
      %1846 = vst.msk [vmem:[#allocation3 + $0x100] sm:$0xff] %vm335, %v1810
      %1847 = vst.msk [vmem:[#allocation3 + $0x108] sm:$0xff] %vm335, %v1811
      %1848 = vst.msk [vmem:[#allocation3 + $0x110] sm:$0xff] %vm335, %v1812
      %1849 = vst.msk [vmem:[#allocation3 + $0x118] sm:$0xff] %vm335, %v1813
      %p1850 = scmp.eq.s32.totalorder %s22, 0
      // Predicated region
      $region45: #{tpu_custom_call.1} parent=43 // pred_check
        %p1851 = pneg %p1850
      $region46: #{tpu_custom_call.1} parent=43 // pred_check_branch
        %1853 = sbr.rel (%p1851) target = $region48
      $region47: #{tpu_custom_call.1} parent=43 // pred_region
        %1854 = vst.msk [vmem:[#allocation3] sm:$0xff] %vm335, 0.0
        %1855 = vst.msk [vmem:[#allocation3 + $0x8] sm:$0xff] %vm335, 0.0
        %s1856 = scalar_lea.vmem [#allocation3], 272
        %1857 = vst.msk [vmem:[%s1856] sm:$0xff] %vm335, 0.0
        %1858 = vst.msk [vmem:[%s1856 + $0x8] sm:$0xff] %vm335, 0.0
      $region48: #{tpu_custom_call.1} parent=43 // pred_fallthru
        _
      %v1859 = vld [vmem:[#allocation3] sm:$0xff]
      %v1860 = vld [vmem:[#allocation3 + $0x8] sm:$0xff]
      %v1861 = vld [vmem:[#allocation3 + $0x10] sm:$0xff]
      %v1862 = vld [vmem:[#allocation3 + $0x18] sm:$0xff]
      %v1863 = vld [vmem:[#allocation3 + $0x20] sm:$0xff]
      %v1864 = vld [vmem:[#allocation3 + $0x28] sm:$0xff]
      %v1865 = vld [vmem:[#allocation3 + $0x30] sm:$0xff]
      %v1866 = vld [vmem:[#allocation3 + $0x38] sm:$0xff]
      %v1867 = vld [vmem:[#allocation3 + $0x40] sm:$0xff]
      %v1868 = vld [vmem:[#allocation3 + $0x48] sm:$0xff]
      %v1869 = vld [vmem:[#allocation3 + $0x50] sm:$0xff]
      %v1870 = vld [vmem:[#allocation3 + $0x58] sm:$0xff]
      %v1871 = vld [vmem:[#allocation3 + $0x60] sm:$0xff]
      %v1872 = vld [vmem:[#allocation3 + $0x68] sm:$0xff]
      %v1873 = vld [vmem:[#allocation3 + $0x70] sm:$0xff]
      %v1874 = vld [vmem:[#allocation3 + $0x78] sm:$0xff]
      %v1875 = vld [vmem:[#allocation3 + $0x80] sm:$0xff]
      %v1876 = vld [vmem:[#allocation3 + $0x88] sm:$0xff]
      %v1877 = vld [vmem:[#allocation3 + $0x90] sm:$0xff]
      %v1878 = vld [vmem:[#allocation3 + $0x98] sm:$0xff]
      %v1879 = vld [vmem:[#allocation3 + $0xa0] sm:$0xff]
      %v1880 = vld [vmem:[#allocation3 + $0xa8] sm:$0xff]
      %v1881 = vld [vmem:[#allocation3 + $0xb0] sm:$0xff]
      %v1882 = vld [vmem:[#allocation3 + $0xb8] sm:$0xff]
      %v1883 = vld [vmem:[#allocation3 + $0xc0] sm:$0xff]
      %v1884 = vld [vmem:[#allocation3 + $0xc8] sm:$0xff]
      %v1885 = vld [vmem:[#allocation3 + $0xd0] sm:$0xff]
      %v1886 = vld [vmem:[#allocation3 + $0xd8] sm:$0xff]
      %v1887 = vld [vmem:[#allocation3 + $0xe0] sm:$0xff]
      %v1888 = vld [vmem:[#allocation3 + $0xe8] sm:$0xff]
      %v1889 = vld [vmem:[#allocation3 + $0xf0] sm:$0xff]
      %v1890 = vld [vmem:[#allocation3 + $0xf8] sm:$0xff]
      %v1891 = vld [vmem:[#allocation3 + $0x100] sm:$0xff]
      %v1892 = vld [vmem:[#allocation3 + $0x108] sm:$0xff]
      %v1893 = vld [vmem:[#allocation3 + $0x110] sm:$0xff]
      %v1894 = vld [vmem:[#allocation3 + $0x118] sm:$0xff]
      %v1895 = vrot.slane %v1859, 7
      %v1896 = vrot.slane %v1861, 7
      %v1897 = vrot.slane %v1863, 7
      %v1898 = vrot.slane %v1865, 7
      %v1899 = vrot.slane %v1867, 7
      %v1900 = vrot.slane %v1869, 7
      %v1901 = vrot.slane %v1871, 7
      %v1902 = vrot.slane %v1873, 7
      %v1903 = vrot.slane %v1875, 7
      %v1904 = vrot.slane %v1877, 7
      %v1905 = vrot.slane %v1879, 7
      %v1906 = vrot.slane %v1881, 7
      %v1907 = vrot.slane %v1883, 7
      %v1908 = vrot.slane %v1885, 7
      %v1909 = vrot.slane %v1887, 7
      %v1910 = vrot.slane %v1889, 7
      %v1911 = vrot.slane %v1891, 7
      %v1912 = vrot.slane %v1893, 7
      %v1913 = vrot.slane %v1860, 7
      %v1914 = vrot.slane %v1862, 7
      %v1915 = vrot.slane %v1864, 7
      %v1916 = vrot.slane %v1866, 7
      %v1917 = vrot.slane %v1868, 7
      %v1918 = vrot.slane %v1870, 7
      %v1919 = vrot.slane %v1872, 7
      %v1920 = vrot.slane %v1874, 7
      %v1921 = vrot.slane %v1876, 7
      %v1922 = vrot.slane %v1878, 7
      %v1923 = vrot.slane %v1880, 7
      %v1924 = vrot.slane %v1882, 7
      %v1925 = vrot.slane %v1884, 7
      %v1926 = vrot.slane %v1886, 7
      %v1927 = vrot.slane %v1888, 7
      %v1928 = vrot.slane %v1890, 7
      %v1929 = vrot.slane %v1892, 7
      %v1930 = vrot.slane %v1894, 7
      %v1931 = vsel %vm497, %v1895, %v1913
      %v1932 = vsel %vm497, %v1896, %v1914
      %v1933 = vsel %vm497, %v1897, %v1915
      %v1934 = vsel %vm497, %v1898, %v1916
      %v1935 = vsel %vm497, %v1899, %v1917
      %v1936 = vsel %vm497, %v1900, %v1918
      %v1937 = vsel %vm497, %v1901, %v1919
      %v1938 = vsel %vm497, %v1902, %v1920
      %v1939 = vsel %vm497, %v1903, %v1921
      %v1940 = vsel %vm497, %v1904, %v1922
      %v1941 = vsel %vm497, %v1905, %v1923
      %v1942 = vsel %vm497, %v1906, %v1924
      %v1943 = vsel %vm497, %v1907, %v1925
      %v1944 = vsel %vm497, %v1908, %v1926
      %v1945 = vsel %vm497, %v1909, %v1927
      %v1946 = vsel %vm497, %v1910, %v1928
      %v1947 = vsel %vm497, %v1911, %v1929
      %v1948 = vsel %vm497, %v1912, %v1930
      %v1949 = vsel %vm497, %v1913, %v1895
      %v1950 = vsel %vm497, %v1914, %v1896
      %v1951 = vsel %vm497, %v1915, %v1897
      %v1952 = vsel %vm497, %v1916, %v1898
      %v1953 = vsel %vm497, %v1917, %v1899
      %v1954 = vsel %vm497, %v1918, %v1900
      %v1955 = vsel %vm497, %v1919, %v1901
      %v1956 = vsel %vm497, %v1920, %v1902
      %v1957 = vsel %vm497, %v1921, %v1903
      %v1958 = vsel %vm497, %v1922, %v1904
      %v1959 = vsel %vm497, %v1923, %v1905
      %v1960 = vsel %vm497, %v1924, %v1906
      %v1961 = vsel %vm497, %v1925, %v1907
      %v1962 = vsel %vm497, %v1926, %v1908
      %v1963 = vsel %vm497, %v1927, %v1909
      %v1964 = vsel %vm497, %v1928, %v1910
      %v1965 = vsel %vm497, %v1929, %v1911
      %v1966 = vsel %vm497, %v1930, %v1912
      %v1967 = vsel %vm539, 0.0, %v1949
      %v1968 = vsel %vm540, 0.0, %v1931
      %v1969 = vsel %vm539, 0.0, %v1950
      %v1970 = vsel %vm540, 0.0, %v1932
      %v1971 = vsel %vm539, 0.0, %v1951
      %v1972 = vsel %vm540, 0.0, %v1933
      %v1973 = vsel %vm539, 0.0, %v1952
      %v1974 = vsel %vm540, 0.0, %v1934
      %v1975 = vsel %vm539, 0.0, %v1953
      %v1976 = vsel %vm540, 0.0, %v1935
      %v1977 = vsel %vm539, 0.0, %v1954
      %v1978 = vsel %vm540, 0.0, %v1936
      %v1979 = vsel %vm539, 0.0, %v1955
      %v1980 = vsel %vm540, 0.0, %v1937
      %v1981 = vsel %vm539, 0.0, %v1956
      %v1982 = vsel %vm540, 0.0, %v1938
      %v1983 = vsel %vm539, 0.0, %v1957
      %v1984 = vsel %vm540, 0.0, %v1939
      %v1985 = vsel %vm539, 0.0, %v1958
      %v1986 = vsel %vm540, 0.0, %v1940
      %v1987 = vsel %vm539, 0.0, %v1959
      %v1988 = vsel %vm540, 0.0, %v1941
      %v1989 = vsel %vm539, 0.0, %v1960
      %v1990 = vsel %vm540, 0.0, %v1942
      %v1991 = vsel %vm539, 0.0, %v1961
      %v1992 = vsel %vm540, 0.0, %v1943
      %v1993 = vsel %vm539, 0.0, %v1962
      %v1994 = vsel %vm540, 0.0, %v1944
      %v1995 = vsel %vm539, 0.0, %v1963
      %v1996 = vsel %vm540, 0.0, %v1945
      %v1997 = vsel %vm539, 0.0, %v1964
      %v1998 = vsel %vm540, 0.0, %v1946
      %v1999 = vsel %vm539, 0.0, %v1965
      %v2000 = vsel %vm540, 0.0, %v1947
      %v2001 = vsel %vm539, 0.0, %v1966
      %v2002 = vsel %vm540, 0.0, %v1948
      %v2003 = vpack.c.bf16 %v1968, %v1967
      %v2004 = vpack.c.bf16 %v1970, %v1969
      %v2005 = vpack.c.bf16 %v1972, %v1971
      %v2006 = vpack.c.bf16 %v1974, %v1973
      %v2007 = vpack.c.bf16 %v1976, %v1975
      %v2008 = vpack.c.bf16 %v1978, %v1977
      %v2009 = vpack.c.bf16 %v1980, %v1979
      %v2010 = vpack.c.bf16 %v1982, %v1981
      %v2011 = vpack.c.bf16 %v1984, %v1983
      %v2012 = vpack.c.bf16 %v1986, %v1985
      %v2013 = vpack.c.bf16 %v1988, %v1987
      %v2014 = vpack.c.bf16 %v1990, %v1989
      %v2015 = vpack.c.bf16 %v1992, %v1991
      %v2016 = vpack.c.bf16 %v1994, %v1993
      %v2017 = vpack.c.bf16 %v1996, %v1995
      %v2018 = vpack.c.bf16 %v1998, %v1997
      %2019 = vst.msk [vmem:[#allocation4] sm:$0xff] %vm335, %v2003
      %2020 = vst.msk [vmem:[#allocation4 + $0x8] sm:$0xff] %vm335, %v2004
      %2021 = vst.msk [vmem:[#allocation4 + $0x10] sm:$0xff] %vm335, %v2005
      %2022 = vst.msk [vmem:[#allocation4 + $0x18] sm:$0xff] %vm335, %v2006
      %2023 = vst.msk [vmem:[#allocation4 + $0x20] sm:$0xff] %vm335, %v2007
      %2024 = vst.msk [vmem:[#allocation4 + $0x28] sm:$0xff] %vm335, %v2008
      %2025 = vst.msk [vmem:[#allocation4 + $0x30] sm:$0xff] %vm335, %v2009
      %2026 = vst.msk [vmem:[#allocation4 + $0x38] sm:$0xff] %vm335, %v2010
      %2027 = vst.msk [vmem:[#allocation4 + $0x40] sm:$0xff] %vm335, %v2011
      %2028 = vst.msk [vmem:[#allocation4 + $0x48] sm:$0xff] %vm335, %v2012
      %2029 = vst.msk [vmem:[#allocation4 + $0x50] sm:$0xff] %vm335, %v2013
      %2030 = vst.msk [vmem:[#allocation4 + $0x58] sm:$0xff] %vm335, %v2014
      %2031 = vst.msk [vmem:[#allocation4 + $0x60] sm:$0xff] %vm335, %v2015
      %2032 = vst.msk [vmem:[#allocation4 + $0x68] sm:$0xff] %vm335, %v2016
      %2033 = vst.msk [vmem:[#allocation4 + $0x70] sm:$0xff] %vm335, %v2017
      %2034 = vst.msk [vmem:[#allocation4 + $0x78] sm:$0xff] %vm335, %v2018
      %v2035 = vpack.c.bf16 %v2000, %v1999
      %2052 = vrot.lane.b32.xlu0 %v2004, 12
      %v2053 = vpop.permute.xlu0 %2052
      %2054 = vrot.lane.b32.xlu0 %v2005, 12
      %v2055 = vpop.permute.xlu0 %2054
      %2056 = vrot.lane.b32.xlu0 %v2006, 12
      %v2057 = vpop.permute.xlu0 %2056
      %2058 = vrot.lane.b32.xlu0 %v2007, 12
      %v2059 = vpop.permute.xlu0 %2058
      %2060 = vrot.lane.b32.xlu0 %v2008, 12
      %v2061 = vpop.permute.xlu0 %2060
      %2062 = vrot.lane.b32.xlu0 %v2009, 12
      %v2063 = vpop.permute.xlu0 %2062
      %2064 = vrot.lane.b32.xlu0 %v2010, 12
      %v2065 = vpop.permute.xlu0 %2064
      %2066 = vrot.lane.b32.xlu0 %v2011, 12
      %v2067 = vpop.permute.xlu0 %2066
      %2068 = vrot.lane.b32.xlu0 %v2012, 12
      %v2069 = vpop.permute.xlu0 %2068
      %2070 = vrot.lane.b32.xlu0 %v2013, 12
      %v2071 = vpop.permute.xlu0 %2070
      %2072 = vrot.lane.b32.xlu0 %v2014, 12
      %v2073 = vpop.permute.xlu0 %2072
      %2074 = vrot.lane.b32.xlu0 %v2015, 12
      %v2075 = vpop.permute.xlu0 %2074
      %2076 = vrot.lane.b32.xlu0 %v2016, 12
      %v2077 = vpop.permute.xlu0 %2076
      %2078 = vrot.lane.b32.xlu0 %v2017, 12
      %v2079 = vpop.permute.xlu0 %2078
      %2080 = vrot.lane.b32.xlu0 %v2018, 12
      %v2081 = vpop.permute.xlu0 %2080
      %2082 = vrot.lane.b32.xlu0 %v2035, 12
      %v2083 = vpop.permute.xlu0 %2082
      %2100 = vst.msk [vmem:[#allocation4] sm:$0xff] %vm690, %v2053
      %2101 = vst.msk [vmem:[#allocation4 + $0x8] sm:$0xff] %vm690, %v2055
      %2102 = vst.msk [vmem:[#allocation4 + $0x10] sm:$0xff] %vm690, %v2057
      %2103 = vst.msk [vmem:[#allocation4 + $0x18] sm:$0xff] %vm690, %v2059
      %2104 = vst.msk [vmem:[#allocation4 + $0x20] sm:$0xff] %vm690, %v2061
      %2105 = vst.msk [vmem:[#allocation4 + $0x28] sm:$0xff] %vm690, %v2063
      %2106 = vst.msk [vmem:[#allocation4 + $0x30] sm:$0xff] %vm690, %v2065
      %2107 = vst.msk [vmem:[#allocation4 + $0x38] sm:$0xff] %vm690, %v2067
      %2108 = vst.msk [vmem:[#allocation4 + $0x40] sm:$0xff] %vm690, %v2069
      %2109 = vst.msk [vmem:[#allocation4 + $0x48] sm:$0xff] %vm690, %v2071
      %2110 = vst.msk [vmem:[#allocation4 + $0x50] sm:$0xff] %vm690, %v2073
      %2111 = vst.msk [vmem:[#allocation4 + $0x58] sm:$0xff] %vm690, %v2075
      %2112 = vst.msk [vmem:[#allocation4 + $0x60] sm:$0xff] %vm690, %v2077
      %2113 = vst.msk [vmem:[#allocation4 + $0x68] sm:$0xff] %vm690, %v2079
      %2114 = vst.msk [vmem:[#allocation4 + $0x70] sm:$0xff] %vm690, %v2081
      %2115 = vst.msk [vmem:[#allocation4 + $0x78] sm:$0xff] %vm690, %v2083
      %v2116 = vpack.c.bf16 %v2002, %v2001
      %2118 = vrot.lane.b32.xlu0 %v2005, 24
      %v2119 = vpop.permute.xlu0 %2118
      %2120 = vrot.lane.b32.xlu0 %v2006, 24
      %v2121 = vpop.permute.xlu0 %2120
      %2122 = vrot.lane.b32.xlu0 %v2007, 24
      %v2123 = vpop.permute.xlu0 %2122
      %2124 = vrot.lane.b32.xlu0 %v2008, 24
      %v2125 = vpop.permute.xlu0 %2124
      %2126 = vrot.lane.b32.xlu0 %v2009, 24
      %v2127 = vpop.permute.xlu0 %2126
      %2128 = vrot.lane.b32.xlu0 %v2010, 24
      %v2129 = vpop.permute.xlu0 %2128
      %2130 = vrot.lane.b32.xlu0 %v2011, 24
      %v2131 = vpop.permute.xlu0 %2130
      %2132 = vrot.lane.b32.xlu0 %v2012, 24
      %v2133 = vpop.permute.xlu0 %2132
      %2134 = vrot.lane.b32.xlu0 %v2013, 24
      %v2135 = vpop.permute.xlu0 %2134
      %2136 = vrot.lane.b32.xlu0 %v2014, 24
      %v2137 = vpop.permute.xlu0 %2136
      %2138 = vrot.lane.b32.xlu0 %v2015, 24
      %v2139 = vpop.permute.xlu0 %2138
      %2140 = vrot.lane.b32.xlu0 %v2016, 24
      %v2141 = vpop.permute.xlu0 %2140
      %2142 = vrot.lane.b32.xlu0 %v2017, 24
      %v2143 = vpop.permute.xlu0 %2142
      %2144 = vrot.lane.b32.xlu0 %v2018, 24
      %v2145 = vpop.permute.xlu0 %2144
      %2146 = vrot.lane.b32.xlu0 %v2035, 24
      %v2147 = vpop.permute.xlu0 %2146
      %2148 = vrot.lane.b32.xlu0 %v2116, 24
      %v2149 = vpop.permute.xlu0 %2148
      %2166 = vst.msk [vmem:[#allocation4] sm:$0xff] %vm765, %v2119
      %2167 = vst.msk [vmem:[#allocation4 + $0x8] sm:$0xff] %vm765, %v2121
      %2168 = vst.msk [vmem:[#allocation4 + $0x10] sm:$0xff] %vm765, %v2123
      %2169 = vst.msk [vmem:[#allocation4 + $0x18] sm:$0xff] %vm765, %v2125
      %2170 = vst.msk [vmem:[#allocation4 + $0x20] sm:$0xff] %vm765, %v2127
      %2171 = vst.msk [vmem:[#allocation4 + $0x28] sm:$0xff] %vm765, %v2129
      %2172 = vst.msk [vmem:[#allocation4 + $0x30] sm:$0xff] %vm765, %v2131
      %2173 = vst.msk [vmem:[#allocation4 + $0x38] sm:$0xff] %vm765, %v2133
      %2174 = vst.msk [vmem:[#allocation4 + $0x40] sm:$0xff] %vm765, %v2135
      %2175 = vst.msk [vmem:[#allocation4 + $0x48] sm:$0xff] %vm765, %v2137
      %2176 = vst.msk [vmem:[#allocation4 + $0x50] sm:$0xff] %vm765, %v2139
      %2177 = vst.msk [vmem:[#allocation4 + $0x58] sm:$0xff] %vm765, %v2141
      %2178 = vst.msk [vmem:[#allocation4 + $0x60] sm:$0xff] %vm765, %v2143
      %2179 = vst.msk [vmem:[#allocation4 + $0x68] sm:$0xff] %vm765, %v2145
      %2180 = vst.msk [vmem:[#allocation4 + $0x70] sm:$0xff] %vm765, %v2147
      %2181 = vst.msk [vmem:[#allocation4 + $0x78] sm:$0xff] %vm765, %v2149
      %v2182 = vpack.c.bf16 %v1860, %v1859
      %v2183 = vpack.c.bf16 %v1862, %v1861
      %v2184 = vpack.c.bf16 %v1864, %v1863
      %v2185 = vpack.c.bf16 %v1866, %v1865
      %v2186 = vpack.c.bf16 %v1868, %v1867
      %v2187 = vpack.c.bf16 %v1870, %v1869
      %v2188 = vpack.c.bf16 %v1872, %v1871
      %v2189 = vpack.c.bf16 %v1874, %v1873
      %v2190 = vpack.c.bf16 %v1876, %v1875
      %v2191 = vpack.c.bf16 %v1878, %v1877
      %v2192 = vpack.c.bf16 %v1880, %v1879
      %v2193 = vpack.c.bf16 %v1882, %v1881
      %v2194 = vpack.c.bf16 %v1884, %v1883
      %v2195 = vpack.c.bf16 %v1886, %v1885
      %v2196 = vpack.c.bf16 %v1888, %v1887
      %v2197 = vpack.c.bf16 %v1890, %v1889
      %2214 = vrot.lane.b32.xlu0 %v2182, 4
      %v2215 = vpop.permute.xlu0 %2214
      %2216 = vrot.lane.b32.xlu0 %v2183, 4
      %v2217 = vpop.permute.xlu0 %2216
      %2218 = vrot.lane.b32.xlu0 %v2184, 4
      %v2219 = vpop.permute.xlu0 %2218
      %2220 = vrot.lane.b32.xlu0 %v2185, 4
      %v2221 = vpop.permute.xlu0 %2220
      %2222 = vrot.lane.b32.xlu0 %v2186, 4
      %v2223 = vpop.permute.xlu0 %2222
      %2224 = vrot.lane.b32.xlu0 %v2187, 4
      %v2225 = vpop.permute.xlu0 %2224
      %2226 = vrot.lane.b32.xlu0 %v2188, 4
      %v2227 = vpop.permute.xlu0 %2226
      %2228 = vrot.lane.b32.xlu0 %v2189, 4
      %v2229 = vpop.permute.xlu0 %2228
      %2230 = vrot.lane.b32.xlu0 %v2190, 4
      %v2231 = vpop.permute.xlu0 %2230
      %2232 = vrot.lane.b32.xlu0 %v2191, 4
      %v2233 = vpop.permute.xlu0 %2232
      %2234 = vrot.lane.b32.xlu0 %v2192, 4
      %v2235 = vpop.permute.xlu0 %2234
      %2236 = vrot.lane.b32.xlu0 %v2193, 4
      %v2237 = vpop.permute.xlu0 %2236
      %2238 = vrot.lane.b32.xlu0 %v2194, 4
      %v2239 = vpop.permute.xlu0 %2238
      %2240 = vrot.lane.b32.xlu0 %v2195, 4
      %v2241 = vpop.permute.xlu0 %2240
      %2242 = vrot.lane.b32.xlu0 %v2196, 4
      %v2243 = vpop.permute.xlu0 %2242
      %2244 = vrot.lane.b32.xlu0 %v2197, 4
      %v2245 = vpop.permute.xlu0 %2244
      %2262 = vst.msk [vmem:[#allocation4] sm:$0xff] %vm874, %v2215
      %2263 = vst.msk [vmem:[#allocation4 + $0x8] sm:$0xff] %vm874, %v2217
      %2264 = vst.msk [vmem:[#allocation4 + $0x10] sm:$0xff] %vm874, %v2219
      %2265 = vst.msk [vmem:[#allocation4 + $0x18] sm:$0xff] %vm874, %v2221
      %2266 = vst.msk [vmem:[#allocation4 + $0x20] sm:$0xff] %vm874, %v2223
      %2267 = vst.msk [vmem:[#allocation4 + $0x28] sm:$0xff] %vm874, %v2225
      %2268 = vst.msk [vmem:[#allocation4 + $0x30] sm:$0xff] %vm874, %v2227
      %2269 = vst.msk [vmem:[#allocation4 + $0x38] sm:$0xff] %vm874, %v2229
      %2270 = vst.msk [vmem:[#allocation4 + $0x40] sm:$0xff] %vm874, %v2231
      %2271 = vst.msk [vmem:[#allocation4 + $0x48] sm:$0xff] %vm874, %v2233
      %2272 = vst.msk [vmem:[#allocation4 + $0x50] sm:$0xff] %vm874, %v2235
      %2273 = vst.msk [vmem:[#allocation4 + $0x58] sm:$0xff] %vm874, %v2237
      %2274 = vst.msk [vmem:[#allocation4 + $0x60] sm:$0xff] %vm874, %v2239
      %2275 = vst.msk [vmem:[#allocation4 + $0x68] sm:$0xff] %vm874, %v2241
      %2276 = vst.msk [vmem:[#allocation4 + $0x70] sm:$0xff] %vm874, %v2243
      %2277 = vst.msk [vmem:[#allocation4 + $0x78] sm:$0xff] %vm874, %v2245
      %v2278 = vpack.c.bf16 %v1892, %v1891
      %2280 = vrot.lane.b32.xlu0 %v2183, 16
      %v2281 = vpop.permute.xlu0 %2280
      %2282 = vrot.lane.b32.xlu0 %v2184, 16
      %v2283 = vpop.permute.xlu0 %2282
      %2284 = vrot.lane.b32.xlu0 %v2185, 16
      %v2285 = vpop.permute.xlu0 %2284
      %2286 = vrot.lane.b32.xlu0 %v2186, 16
      %v2287 = vpop.permute.xlu0 %2286
      %2288 = vrot.lane.b32.xlu0 %v2187, 16
      %v2289 = vpop.permute.xlu0 %2288
      %2290 = vrot.lane.b32.xlu0 %v2188, 16
      %v2291 = vpop.permute.xlu0 %2290
      %2292 = vrot.lane.b32.xlu0 %v2189, 16
      %v2293 = vpop.permute.xlu0 %2292
      %2294 = vrot.lane.b32.xlu0 %v2190, 16
      %v2295 = vpop.permute.xlu0 %2294
      %2296 = vrot.lane.b32.xlu0 %v2191, 16
      %v2297 = vpop.permute.xlu0 %2296
      %2298 = vrot.lane.b32.xlu0 %v2192, 16
      %v2299 = vpop.permute.xlu0 %2298
      %2300 = vrot.lane.b32.xlu0 %v2193, 16
      %v2301 = vpop.permute.xlu0 %2300
      %2302 = vrot.lane.b32.xlu0 %v2194, 16
      %v2303 = vpop.permute.xlu0 %2302
      %2304 = vrot.lane.b32.xlu0 %v2195, 16
      %v2305 = vpop.permute.xlu0 %2304
      %2306 = vrot.lane.b32.xlu0 %v2196, 16
      %v2307 = vpop.permute.xlu0 %2306
      %2308 = vrot.lane.b32.xlu0 %v2197, 16
      %v2309 = vpop.permute.xlu0 %2308
      %2310 = vrot.lane.b32.xlu0 %v2278, 16
      %v2311 = vpop.permute.xlu0 %2310
      %2328 = vst.msk [vmem:[#allocation4] sm:$0xff] %vm949, %v2281
      %2329 = vst.msk [vmem:[#allocation4 + $0x8] sm:$0xff] %vm949, %v2283
      %2330 = vst.msk [vmem:[#allocation4 + $0x10] sm:$0xff] %vm949, %v2285
      %2331 = vst.msk [vmem:[#allocation4 + $0x18] sm:$0xff] %vm949, %v2287
      %2332 = vst.msk [vmem:[#allocation4 + $0x20] sm:$0xff] %vm949, %v2289
      %2333 = vst.msk [vmem:[#allocation4 + $0x28] sm:$0xff] %vm949, %v2291
      %2334 = vst.msk [vmem:[#allocation4 + $0x30] sm:$0xff] %vm949, %v2293
      %2335 = vst.msk [vmem:[#allocation4 + $0x38] sm:$0xff] %vm949, %v2295
      %2336 = vst.msk [vmem:[#allocation4 + $0x40] sm:$0xff] %vm949, %v2297
      %2337 = vst.msk [vmem:[#allocation4 + $0x48] sm:$0xff] %vm949, %v2299
      %2338 = vst.msk [vmem:[#allocation4 + $0x50] sm:$0xff] %vm949, %v2301
      %2339 = vst.msk [vmem:[#allocation4 + $0x58] sm:$0xff] %vm949, %v2303
      %2340 = vst.msk [vmem:[#allocation4 + $0x60] sm:$0xff] %vm949, %v2305
      %2341 = vst.msk [vmem:[#allocation4 + $0x68] sm:$0xff] %vm949, %v2307
      %2342 = vst.msk [vmem:[#allocation4 + $0x70] sm:$0xff] %vm949, %v2309
      %2343 = vst.msk [vmem:[#allocation4 + $0x78] sm:$0xff] %vm949, %v2311
      %v2344 = vpack.c.bf16 %v1894, %v1893
      %2346 = vrot.lane.b32.xlu0 %v2184, 28
      %v2347 = vpop.permute.xlu0 %2346
      %2348 = vrot.lane.b32.xlu0 %v2185, 28
      %v2349 = vpop.permute.xlu0 %2348
      %2350 = vrot.lane.b32.xlu0 %v2186, 28
      %v2351 = vpop.permute.xlu0 %2350
      %2352 = vrot.lane.b32.xlu0 %v2187, 28
      %v2353 = vpop.permute.xlu0 %2352
      %2354 = vrot.lane.b32.xlu0 %v2188, 28
      %v2355 = vpop.permute.xlu0 %2354
      %2356 = vrot.lane.b32.xlu0 %v2189, 28
      %v2357 = vpop.permute.xlu0 %2356
      %2358 = vrot.lane.b32.xlu0 %v2190, 28
      %v2359 = vpop.permute.xlu0 %2358
      %2360 = vrot.lane.b32.xlu0 %v2191, 28
      %v2361 = vpop.permute.xlu0 %2360
      %2362 = vrot.lane.b32.xlu0 %v2192, 28
      %v2363 = vpop.permute.xlu0 %2362
      %2364 = vrot.lane.b32.xlu0 %v2193, 28
      %v2365 = vpop.permute.xlu0 %2364
      %2366 = vrot.lane.b32.xlu0 %v2194, 28
      %v2367 = vpop.permute.xlu0 %2366
      %2368 = vrot.lane.b32.xlu0 %v2195, 28
      %v2369 = vpop.permute.xlu0 %2368
      %2370 = vrot.lane.b32.xlu0 %v2196, 28
      %v2371 = vpop.permute.xlu0 %2370
      %2372 = vrot.lane.b32.xlu0 %v2197, 28
      %v2373 = vpop.permute.xlu0 %2372
      %2374 = vrot.lane.b32.xlu0 %v2278, 28
      %v2375 = vpop.permute.xlu0 %2374
      %2376 = vrot.lane.b32.xlu0 %v2344, 28
      %v2377 = vpop.permute.xlu0 %2376
      %2394 = vst.msk [vmem:[#allocation4] sm:$0xff] %vm1024, %v2347
      %2395 = vst.msk [vmem:[#allocation4 + $0x8] sm:$0xff] %vm1024, %v2349
      %2396 = vst.msk [vmem:[#allocation4 + $0x10] sm:$0xff] %vm1024, %v2351
      %2397 = vst.msk [vmem:[#allocation4 + $0x18] sm:$0xff] %vm1024, %v2353
      %2398 = vst.msk [vmem:[#allocation4 + $0x20] sm:$0xff] %vm1024, %v2355
      %2399 = vst.msk [vmem:[#allocation4 + $0x28] sm:$0xff] %vm1024, %v2357
      %2400 = vst.msk [vmem:[#allocation4 + $0x30] sm:$0xff] %vm1024, %v2359
      %2401 = vst.msk [vmem:[#allocation4 + $0x38] sm:$0xff] %vm1024, %v2361
      %2402 = vst.msk [vmem:[#allocation4 + $0x40] sm:$0xff] %vm1024, %v2363
      %2403 = vst.msk [vmem:[#allocation4 + $0x48] sm:$0xff] %vm1024, %v2365
      %2404 = vst.msk [vmem:[#allocation4 + $0x50] sm:$0xff] %vm1024, %v2367
      %2405 = vst.msk [vmem:[#allocation4 + $0x58] sm:$0xff] %vm1024, %v2369
      %2406 = vst.msk [vmem:[#allocation4 + $0x60] sm:$0xff] %vm1024, %v2371
      %2407 = vst.msk [vmem:[#allocation4 + $0x68] sm:$0xff] %vm1024, %v2373
      %2408 = vst.msk [vmem:[#allocation4 + $0x70] sm:$0xff] %vm1024, %v2375
      %2409 = vst.msk [vmem:[#allocation4 + $0x78] sm:$0xff] %vm1024, %v2377
      %v2410 = vrot.slane %v1859, 1
      %v2411 = vrot.slane %v1861, 1
      %v2412 = vrot.slane %v1863, 1
      %v2413 = vrot.slane %v1865, 1
      %v2414 = vrot.slane %v1867, 1
      %v2415 = vrot.slane %v1869, 1
      %v2416 = vrot.slane %v1871, 1
      %v2417 = vrot.slane %v1873, 1
      %v2418 = vrot.slane %v1875, 1
      %v2419 = vrot.slane %v1877, 1
      %v2420 = vrot.slane %v1879, 1
      %v2421 = vrot.slane %v1881, 1
      %v2422 = vrot.slane %v1883, 1
      %v2423 = vrot.slane %v1885, 1
      %v2424 = vrot.slane %v1887, 1
      %v2425 = vrot.slane %v1889, 1
      %v2426 = vrot.slane %v1891, 1
      %v2427 = vrot.slane %v1893, 1
      %v2428 = vrot.slane %v1860, 1
      %v2429 = vrot.slane %v1862, 1
      %v2430 = vrot.slane %v1864, 1
      %v2431 = vrot.slane %v1866, 1
      %v2432 = vrot.slane %v1868, 1
      %v2433 = vrot.slane %v1870, 1
      %v2434 = vrot.slane %v1872, 1
      %v2435 = vrot.slane %v1874, 1
      %v2436 = vrot.slane %v1876, 1
      %v2437 = vrot.slane %v1878, 1
      %v2438 = vrot.slane %v1880, 1
      %v2439 = vrot.slane %v1882, 1
      %v2440 = vrot.slane %v1884, 1
      %v2441 = vrot.slane %v1886, 1
      %v2442 = vrot.slane %v1888, 1
      %v2443 = vrot.slane %v1890, 1
      %v2444 = vrot.slane %v1892, 1
      %v2445 = vrot.slane %v1894, 1
      %v2446 = vsel %vm1083, %v2410, %v2428
      %v2447 = vsel %vm1083, %v2411, %v2429
      %v2448 = vsel %vm1083, %v2412, %v2430
      %v2449 = vsel %vm1083, %v2413, %v2431
      %v2450 = vsel %vm1083, %v2414, %v2432
      %v2451 = vsel %vm1083, %v2415, %v2433
      %v2452 = vsel %vm1083, %v2416, %v2434
      %v2453 = vsel %vm1083, %v2417, %v2435
      %v2454 = vsel %vm1083, %v2418, %v2436
      %v2455 = vsel %vm1083, %v2419, %v2437
      %v2456 = vsel %vm1083, %v2420, %v2438
      %v2457 = vsel %vm1083, %v2421, %v2439
      %v2458 = vsel %vm1083, %v2422, %v2440
      %v2459 = vsel %vm1083, %v2423, %v2441
      %v2460 = vsel %vm1083, %v2424, %v2442
      %v2461 = vsel %vm1083, %v2425, %v2443
      %v2462 = vsel %vm1083, %v2426, %v2444
      %v2463 = vsel %vm1083, %v2427, %v2445
      %v2464 = vsel %vm1083, %v2428, %v2410
      %v2465 = vsel %vm1083, %v2429, %v2411
      %v2466 = vsel %vm1083, %v2430, %v2412
      %v2467 = vsel %vm1083, %v2431, %v2413
      %v2468 = vsel %vm1083, %v2432, %v2414
      %v2469 = vsel %vm1083, %v2433, %v2415
      %v2470 = vsel %vm1083, %v2434, %v2416
      %v2471 = vsel %vm1083, %v2435, %v2417
      %v2472 = vsel %vm1083, %v2436, %v2418
      %v2473 = vsel %vm1083, %v2437, %v2419
      %v2474 = vsel %vm1083, %v2438, %v2420
      %v2475 = vsel %vm1083, %v2439, %v2421
      %v2476 = vsel %vm1083, %v2440, %v2422
      %v2477 = vsel %vm1083, %v2441, %v2423
      %v2478 = vsel %vm1083, %v2442, %v2424
      %v2479 = vsel %vm1083, %v2443, %v2425
      %v2480 = vsel %vm1083, %v2444, %v2426
      %v2481 = vsel %vm1083, %v2445, %v2427
      %v2482 = vsel %vm1124, 0.0, %v2446
      %v2483 = vsel %vm1125, 0.0, %v2464
      %v2484 = vsel %vm1124, 0.0, %v2447
      %v2485 = vsel %vm1125, 0.0, %v2465
      %v2486 = vsel %vm1124, 0.0, %v2448
      %v2487 = vsel %vm1125, 0.0, %v2466
      %v2488 = vsel %vm1124, 0.0, %v2449
      %v2489 = vsel %vm1125, 0.0, %v2467
      %v2490 = vsel %vm1124, 0.0, %v2450
      %v2491 = vsel %vm1125, 0.0, %v2468
      %v2492 = vsel %vm1124, 0.0, %v2451
      %v2493 = vsel %vm1125, 0.0, %v2469
      %v2494 = vsel %vm1124, 0.0, %v2452
      %v2495 = vsel %vm1125, 0.0, %v2470
      %v2496 = vsel %vm1124, 0.0, %v2453
      %v2497 = vsel %vm1125, 0.0, %v2471
      %v2498 = vsel %vm1124, 0.0, %v2454
      %v2499 = vsel %vm1125, 0.0, %v2472
      %v2500 = vsel %vm1124, 0.0, %v2455
      %v2501 = vsel %vm1125, 0.0, %v2473
      %v2502 = vsel %vm1124, 0.0, %v2456
      %v2503 = vsel %vm1125, 0.0, %v2474
      %v2504 = vsel %vm1124, 0.0, %v2457
      %v2505 = vsel %vm1125, 0.0, %v2475
      %v2506 = vsel %vm1124, 0.0, %v2458
      %v2507 = vsel %vm1125, 0.0, %v2476
      %v2508 = vsel %vm1124, 0.0, %v2459
      %v2509 = vsel %vm1125, 0.0, %v2477
      %v2510 = vsel %vm1124, 0.0, %v2460
      %v2511 = vsel %vm1125, 0.0, %v2478
      %v2512 = vsel %vm1124, 0.0, %v2461
      %v2513 = vsel %vm1125, 0.0, %v2479
      %v2514 = vsel %vm1124, 0.0, %v2462
      %v2515 = vsel %vm1125, 0.0, %v2480
      %v2516 = vsel %vm1124, 0.0, %v2463
      %v2517 = vsel %vm1125, 0.0, %v2481
      %v2518 = vpack.c.bf16 %v2483, %v2482
      %v2519 = vpack.c.bf16 %v2485, %v2484
      %v2520 = vpack.c.bf16 %v2487, %v2486
      %v2521 = vpack.c.bf16 %v2489, %v2488
      %v2522 = vpack.c.bf16 %v2491, %v2490
      %v2523 = vpack.c.bf16 %v2493, %v2492
      %v2524 = vpack.c.bf16 %v2495, %v2494
      %v2525 = vpack.c.bf16 %v2497, %v2496
      %v2526 = vpack.c.bf16 %v2499, %v2498
      %v2527 = vpack.c.bf16 %v2501, %v2500
      %v2528 = vpack.c.bf16 %v2503, %v2502
      %v2529 = vpack.c.bf16 %v2505, %v2504
      %v2530 = vpack.c.bf16 %v2507, %v2506
      %v2531 = vpack.c.bf16 %v2509, %v2508
      %v2532 = vpack.c.bf16 %v2511, %v2510
      %v2533 = vpack.c.bf16 %v2513, %v2512
      %2550 = vrot.lane.b32.xlu0 %v2518, 8
      %v2551 = vpop.permute.xlu0 %2550
      %2552 = vrot.lane.b32.xlu0 %v2519, 8
      %v2553 = vpop.permute.xlu0 %2552
      %2554 = vrot.lane.b32.xlu0 %v2520, 8
      %v2555 = vpop.permute.xlu0 %2554
      %2556 = vrot.lane.b32.xlu0 %v2521, 8
      %v2557 = vpop.permute.xlu0 %2556
      %2558 = vrot.lane.b32.xlu0 %v2522, 8
      %v2559 = vpop.permute.xlu0 %2558
      %2560 = vrot.lane.b32.xlu0 %v2523, 8
      %v2561 = vpop.permute.xlu0 %2560
      %2562 = vrot.lane.b32.xlu0 %v2524, 8
      %v2563 = vpop.permute.xlu0 %2562
      %2564 = vrot.lane.b32.xlu0 %v2525, 8
      %v2565 = vpop.permute.xlu0 %2564
      %2566 = vrot.lane.b32.xlu0 %v2526, 8
      %v2567 = vpop.permute.xlu0 %2566
      %2568 = vrot.lane.b32.xlu0 %v2527, 8
      %v2569 = vpop.permute.xlu0 %2568
      %2570 = vrot.lane.b32.xlu0 %v2528, 8
      %v2571 = vpop.permute.xlu0 %2570
      %2572 = vrot.lane.b32.xlu0 %v2529, 8
      %v2573 = vpop.permute.xlu0 %2572
      %2574 = vrot.lane.b32.xlu0 %v2530, 8
      %v2575 = vpop.permute.xlu0 %2574
      %2576 = vrot.lane.b32.xlu0 %v2531, 8
      %v2577 = vpop.permute.xlu0 %2576
      %2578 = vrot.lane.b32.xlu0 %v2532, 8
      %v2579 = vpop.permute.xlu0 %2578
      %2580 = vrot.lane.b32.xlu0 %v2533, 8
      %v2581 = vpop.permute.xlu0 %2580
      %2598 = vst.msk [vmem:[#allocation4] sm:$0xff] %vm1256, %v2551
      %2599 = vst.msk [vmem:[#allocation4 + $0x8] sm:$0xff] %vm1256, %v2553
      %2600 = vst.msk [vmem:[#allocation4 + $0x10] sm:$0xff] %vm1256, %v2555
      %2601 = vst.msk [vmem:[#allocation4 + $0x18] sm:$0xff] %vm1256, %v2557
      %2602 = vst.msk [vmem:[#allocation4 + $0x20] sm:$0xff] %vm1256, %v2559
      %2603 = vst.msk [vmem:[#allocation4 + $0x28] sm:$0xff] %vm1256, %v2561
      %2604 = vst.msk [vmem:[#allocation4 + $0x30] sm:$0xff] %vm1256, %v2563
      %2605 = vst.msk [vmem:[#allocation4 + $0x38] sm:$0xff] %vm1256, %v2565
      %2606 = vst.msk [vmem:[#allocation4 + $0x40] sm:$0xff] %vm1256, %v2567
      %2607 = vst.msk [vmem:[#allocation4 + $0x48] sm:$0xff] %vm1256, %v2569
      %2608 = vst.msk [vmem:[#allocation4 + $0x50] sm:$0xff] %vm1256, %v2571
      %2609 = vst.msk [vmem:[#allocation4 + $0x58] sm:$0xff] %vm1256, %v2573
      %2610 = vst.msk [vmem:[#allocation4 + $0x60] sm:$0xff] %vm1256, %v2575
      %2611 = vst.msk [vmem:[#allocation4 + $0x68] sm:$0xff] %vm1256, %v2577
      %2612 = vst.msk [vmem:[#allocation4 + $0x70] sm:$0xff] %vm1256, %v2579
      %2613 = vst.msk [vmem:[#allocation4 + $0x78] sm:$0xff] %vm1256, %v2581
      %v2614 = vpack.c.bf16 %v2515, %v2514
      %2616 = vrot.lane.b32.xlu0 %v2519, 20
      %v2617 = vpop.permute.xlu0 %2616
      %2618 = vrot.lane.b32.xlu0 %v2520, 20
      %v2619 = vpop.permute.xlu0 %2618
      %2620 = vrot.lane.b32.xlu0 %v2521, 20
      %v2621 = vpop.permute.xlu0 %2620
      %2622 = vrot.lane.b32.xlu0 %v2522, 20
      %v2623 = vpop.permute.xlu0 %2622
      %2624 = vrot.lane.b32.xlu0 %v2523, 20
      %v2625 = vpop.permute.xlu0 %2624
      %2626 = vrot.lane.b32.xlu0 %v2524, 20
      %v2627 = vpop.permute.xlu0 %2626
      %2628 = vrot.lane.b32.xlu0 %v2525, 20
      %v2629 = vpop.permute.xlu0 %2628
      %2630 = vrot.lane.b32.xlu0 %v2526, 20
      %v2631 = vpop.permute.xlu0 %2630
      %2632 = vrot.lane.b32.xlu0 %v2527, 20
      %v2633 = vpop.permute.xlu0 %2632
      %2634 = vrot.lane.b32.xlu0 %v2528, 20
      %v2635 = vpop.permute.xlu0 %2634
      %2636 = vrot.lane.b32.xlu0 %v2529, 20
      %v2637 = vpop.permute.xlu0 %2636
      %2638 = vrot.lane.b32.xlu0 %v2530, 20
      %v2639 = vpop.permute.xlu0 %2638
      %2640 = vrot.lane.b32.xlu0 %v2531, 20
      %v2641 = vpop.permute.xlu0 %2640
      %2642 = vrot.lane.b32.xlu0 %v2532, 20
      %v2643 = vpop.permute.xlu0 %2642
      %2644 = vrot.lane.b32.xlu0 %v2533, 20
      %v2645 = vpop.permute.xlu0 %2644
      %2646 = vrot.lane.b32.xlu0 %v2614, 20
      %v2647 = vpop.permute.xlu0 %2646
      %2664 = vst.msk [vmem:[#allocation4] sm:$0xff] %vm1331, %v2617
      %2665 = vst.msk [vmem:[#allocation4 + $0x8] sm:$0xff] %vm1331, %v2619
      %2666 = vst.msk [vmem:[#allocation4 + $0x10] sm:$0xff] %vm1331, %v2621
      %2667 = vst.msk [vmem:[#allocation4 + $0x18] sm:$0xff] %vm1331, %v2623
      %2668 = vst.msk [vmem:[#allocation4 + $0x20] sm:$0xff] %vm1331, %v2625
      %2669 = vst.msk [vmem:[#allocation4 + $0x28] sm:$0xff] %vm1331, %v2627
      %2670 = vst.msk [vmem:[#allocation4 + $0x30] sm:$0xff] %vm1331, %v2629
      %2671 = vst.msk [vmem:[#allocation4 + $0x38] sm:$0xff] %vm1331, %v2631
      %2672 = vst.msk [vmem:[#allocation4 + $0x40] sm:$0xff] %vm1331, %v2633
      %2673 = vst.msk [vmem:[#allocation4 + $0x48] sm:$0xff] %vm1331, %v2635
      %2674 = vst.msk [vmem:[#allocation4 + $0x50] sm:$0xff] %vm1331, %v2637
      %2675 = vst.msk [vmem:[#allocation4 + $0x58] sm:$0xff] %vm1331, %v2639
      %2676 = vst.msk [vmem:[#allocation4 + $0x60] sm:$0xff] %vm1331, %v2641
      %2677 = vst.msk [vmem:[#allocation4 + $0x68] sm:$0xff] %vm1331, %v2643
      %2678 = vst.msk [vmem:[#allocation4 + $0x70] sm:$0xff] %vm1331, %v2645
      %2679 = vst.msk [vmem:[#allocation4 + $0x78] sm:$0xff] %vm1331, %v2647
      %v2680 = vpack.c.bf16 %v2517, %v2516
      %2682 = vrot.lane.b32.xlu0 %v2520, 32
      %v2683 = vpop.permute.xlu0 %2682
      %2684 = vrot.lane.b32.xlu0 %v2521, 32
      %v2685 = vpop.permute.xlu0 %2684
      %2686 = vrot.lane.b32.xlu0 %v2522, 32
      %v2687 = vpop.permute.xlu0 %2686
      %2688 = vrot.lane.b32.xlu0 %v2523, 32
      %v2689 = vpop.permute.xlu0 %2688
      %2690 = vrot.lane.b32.xlu0 %v2524, 32
      %v2691 = vpop.permute.xlu0 %2690
      %2692 = vrot.lane.b32.xlu0 %v2525, 32
      %v2693 = vpop.permute.xlu0 %2692
      %2694 = vrot.lane.b32.xlu0 %v2526, 32
      %v2695 = vpop.permute.xlu0 %2694
      %2696 = vrot.lane.b32.xlu0 %v2527, 32
      %v2697 = vpop.permute.xlu0 %2696
      %2698 = vrot.lane.b32.xlu0 %v2528, 32
      %v2699 = vpop.permute.xlu0 %2698
      %2700 = vrot.lane.b32.xlu0 %v2529, 32
      %v2701 = vpop.permute.xlu0 %2700
      %2702 = vrot.lane.b32.xlu0 %v2530, 32
      %v2703 = vpop.permute.xlu0 %2702
      %2704 = vrot.lane.b32.xlu0 %v2531, 32
      %v2705 = vpop.permute.xlu0 %2704
      %2706 = vrot.lane.b32.xlu0 %v2532, 32
      %v2707 = vpop.permute.xlu0 %2706
      %2708 = vrot.lane.b32.xlu0 %v2533, 32
      %v2709 = vpop.permute.xlu0 %2708
      %2710 = vrot.lane.b32.xlu0 %v2614, 32
      %v2711 = vpop.permute.xlu0 %2710
      %2712 = vrot.lane.b32.xlu0 %v2680, 32
      %v2713 = vpop.permute.xlu0 %2712
      %2730 = vst.msk [vmem:[#allocation4] sm:$0xff] %vm1406, %v2683
      %2731 = vst.msk [vmem:[#allocation4 + $0x8] sm:$0xff] %vm1406, %v2685
      %2732 = vst.msk [vmem:[#allocation4 + $0x10] sm:$0xff] %vm1406, %v2687
      %2733 = vst.msk [vmem:[#allocation4 + $0x18] sm:$0xff] %vm1406, %v2689
      %2734 = vst.msk [vmem:[#allocation4 + $0x20] sm:$0xff] %vm1406, %v2691
      %2735 = vst.msk [vmem:[#allocation4 + $0x28] sm:$0xff] %vm1406, %v2693
      %2736 = vst.msk [vmem:[#allocation4 + $0x30] sm:$0xff] %vm1406, %v2695
      %2737 = vst.msk [vmem:[#allocation4 + $0x38] sm:$0xff] %vm1406, %v2697
      %2738 = vst.msk [vmem:[#allocation4 + $0x40] sm:$0xff] %vm1406, %v2699
      %2739 = vst.msk [vmem:[#allocation4 + $0x48] sm:$0xff] %vm1406, %v2701
      %2740 = vst.msk [vmem:[#allocation4 + $0x50] sm:$0xff] %vm1406, %v2703
      %2741 = vst.msk [vmem:[#allocation4 + $0x58] sm:$0xff] %vm1406, %v2705
      %2742 = vst.msk [vmem:[#allocation4 + $0x60] sm:$0xff] %vm1406, %v2707
      %2743 = vst.msk [vmem:[#allocation4 + $0x68] sm:$0xff] %vm1406, %v2709
      %2744 = vst.msk [vmem:[#allocation4 + $0x70] sm:$0xff] %vm1406, %v2711
      %2745 = vst.msk [vmem:[#allocation4 + $0x78] sm:$0xff] %vm1406, %v2713
      %v2746 = vld [vmem:[#allocation4] sm:$0xff]
      %v2747 = vld [vmem:[#allocation4 + $0x8] sm:$0xff]
      %v2748 = vld [vmem:[#allocation4 + $0x10] sm:$0xff]
      %v2749 = vld [vmem:[#allocation4 + $0x18] sm:$0xff]
      %v2750 = vld [vmem:[#allocation4 + $0x20] sm:$0xff]
      %v2751 = vld [vmem:[#allocation4 + $0x28] sm:$0xff]
      %v2752 = vld [vmem:[#allocation4 + $0x30] sm:$0xff]
      %v2753 = vld [vmem:[#allocation4 + $0x38] sm:$0xff]
      %v2754 = vld [vmem:[#allocation4 + $0x40] sm:$0xff]
      %v2755 = vld [vmem:[#allocation4 + $0x48] sm:$0xff]
      %v2756 = vld [vmem:[#allocation4 + $0x50] sm:$0xff]
      %v2757 = vld [vmem:[#allocation4 + $0x58] sm:$0xff]
      %v2758 = vld [vmem:[#allocation4 + $0x60] sm:$0xff]
      %v2759 = vld [vmem:[#allocation4 + $0x68] sm:$0xff]
      %v2760 = vld [vmem:[#allocation4 + $0x70] sm:$0xff]
      %v2761 = vld [vmem:[#allocation4 + $0x78] sm:$0xff]
      %v2762 = vld [vmem:[%s4] sm:$0xf]
      %v2763 = vld [vmem:[%s4 + $0x4] sm:$0xf]
      %v2764 = vld [vmem:[%s4 + $0x8] sm:$0xf]
      %v2765 = vld [vmem:[%s4 + $0xc] sm:$0xf]
      %v2766 = vld [vmem:[%s4 + $0x10] sm:$0x3]
      %v2767 = vld [vmem:[%s5] sm:$0x1]
      %v2769 = vlaneseq
      %v2770 = vshrl.u32 %v2769, 7
      %v2771 = vsub.s32 0, %v2770
      %v2772 = vrot.slane %v2767, %v2771
      %v2779 = vunpack.c.l.b16 %v2762
      %v2780 = vunpack.c.l.b16 %v2763
      %v2781 = vunpack.c.l.b16 %v2764
      %v2782 = vunpack.c.l.b16 %v2765
      %v2783 = vunpack.c.l.b16 %v2766
      %v2784 = vpack.c.b16 %v2780, %v2779
      %v2785 = vpack.c.b16 %v2782, %v2781
      %v2786 = vpack.c.b16 %v2783, %v2783
      %v2790 = vsel %vm1470, %v2746, 0
      %v2793 = vsel %vm1470, %v2747, 0
      %v2796 = vsel %vm1470, %v2748, 0
      %v2799 = vsel %vm1470, %v2749, 0
      %v2802 = vsel %vm1470, %v2750, 0
      %v2805 = vsel %vm1470, %v2751, 0
      %v2808 = vsel %vm1470, %v2752, 0
      %v2811 = vsel %vm1470, %v2753, 0
      %v2814 = vsel %vm1470, %v2754, 0
      %v2817 = vsel %vm1470, %v2755, 0
      %v2820 = vsel %vm1470, %v2756, 0
      %v2823 = vsel %vm1470, %v2757, 0
      %v2826 = vsel %vm1470, %v2758, 0
      %v2829 = vsel %vm1470, %v2759, 0
      %v2832 = vsel %vm1470, %v2760, 0
      %v2835 = vsel %vm1470, %v2761, 0
      %v2838 = vsel %vm1525, %v2786, 0
      %2840 = vmatprep.subr.bf16.mxu0 0
      %2841 = vmatpush1.bf16.msra.mxu0 %v2784
      %2842 = vmatprep.subr.bf16.mxu0 0
      %2843 = vmatpush1.bf16.msra.mxu0 %v2785
      %2844 = vmatprep.subr.bf16.mxu0 0
      %2845 = vmatpush1.bf16.msra.mxu0 %v2838
      %2846 = vmatprep.subr.bf16.mxu0 0
      %2847 = vmatpush1.bf16.msra.mxu0 0
      %2848 = vmatprep.subr.bf16.mxu0 0
      %2849 = vmatpush1.bf16.msra.mxu0 0
      %2850 = vmatprep.subr.bf16.mxu0 0
      %2851 = vmatpush1.bf16.msra.mxu0 0
      %2852 = vmatprep.subr.bf16.mxu0 0
      %2853 = vmatpush1.bf16.msra.mxu0 0
      %2854 = vmatprep.subr.bf16.mxu0 0
      %2855 = vmatpush1.bf16.msra.mxu0 0
      %2856 = vmatprep.subr.bf16.mxu0 0
      %2857 = vmatpush1.bf16.msra.mxu0 0
      %2858 = vmatprep.subr.bf16.mxu0 0
      %2859 = vmatpush1.bf16.msra.mxu0 0
      %2860 = vmatprep.subr.bf16.mxu0 0
      %2861 = vmatpush1.bf16.msra.mxu0 0
      %2862 = vmatprep.subr.bf16.mxu0 0
      %2863 = vmatpush1.bf16.msra.mxu0 0
      %2864 = vmatprep.subr.bf16.mxu0 0
      %2865 = vmatpush1.bf16.msra.mxu0 0
      %2866 = vmatprep.subr.bf16.mxu0 0
      %2867 = vmatpush1.bf16.msra.mxu0 0
      %2868 = vmatprep.subr.bf16.mxu0 0
      %2869 = vmatpush1.bf16.msra.mxu0 0
      %2870 = vmatprep.subr.bf16.mxu0 0
      %2871 = vmatpush1.bf16.msra.mxu0 0
      %2872 = vmatprep.mubr.bf16.mxu0 0
      %2873 = vmatmul.mubr.bf16.gmra.mrb[0].mxu0 %v2790
      %v2874 = vpop.f32.mrb[0].mxu0
      %v2875 = vadd.f32 %v2772, %v2874
      %v2876 = vpop.f32.mrb[0].mxu0
      %v2877 = vpop.f32.mrb[0].mxu0
      %v2878 = vadd.f32 %v2772, %v2877
      %v2879 = vpop.f32.mrb[0].mxu0
      %2880 = vmatprep.mubr.bf16.mxu0 0
      %2881 = vmatmul.mubr.bf16.gmra.mrb[0].mxu0 %v2793
      %v2882 = vpop.f32.mrb[0].mxu0
      %v2883 = vadd.f32 %v2772, %v2882
      %v2884 = vpop.f32.mrb[0].mxu0
      %v2885 = vpop.f32.mrb[0].mxu0
      %v2886 = vadd.f32 %v2772, %v2885
      %v2887 = vpop.f32.mrb[0].mxu0
      %2888 = vmatprep.mubr.bf16.mxu0 0
      %2889 = vmatmul.mubr.bf16.gmra.mrb[0].mxu0 %v2796
      %v2890 = vpop.f32.mrb[0].mxu0
      %v2891 = vadd.f32 %v2772, %v2890
      %v2892 = vpop.f32.mrb[0].mxu0
      %v2893 = vpop.f32.mrb[0].mxu0
      %v2894 = vadd.f32 %v2772, %v2893
      %v2895 = vpop.f32.mrb[0].mxu0
      %2896 = vmatprep.mubr.bf16.mxu0 0
      %2897 = vmatmul.mubr.bf16.gmra.mrb[0].mxu0 %v2799
      %v2898 = vpop.f32.mrb[0].mxu0
      %v2899 = vadd.f32 %v2772, %v2898
      %v2900 = vpop.f32.mrb[0].mxu0
      %v2901 = vpop.f32.mrb[0].mxu0
      %v2902 = vadd.f32 %v2772, %v2901
      %v2903 = vpop.f32.mrb[0].mxu0
      %2904 = vmatprep.mubr.bf16.mxu0 0
      %2905 = vmatmul.mubr.bf16.gmra.mrb[0].mxu0 %v2802
      %v2906 = vpop.f32.mrb[0].mxu0
      %v2907 = vadd.f32 %v2772, %v2906
      %v2908 = vpop.f32.mrb[0].mxu0
      %v2909 = vpop.f32.mrb[0].mxu0
      %v2910 = vadd.f32 %v2772, %v2909
      %v2911 = vpop.f32.mrb[0].mxu0
      %2912 = vmatprep.mubr.bf16.mxu0 0
      %2913 = vmatmul.mubr.bf16.gmra.mrb[0].mxu0 %v2805
      %v2914 = vpop.f32.mrb[0].mxu0
      %v2915 = vadd.f32 %v2772, %v2914
      %v2916 = vpop.f32.mrb[0].mxu0
      %v2917 = vpop.f32.mrb[0].mxu0
      %v2918 = vadd.f32 %v2772, %v2917
      %v2919 = vpop.f32.mrb[0].mxu0
      %2920 = vmatprep.mubr.bf16.mxu0 0
      %2921 = vmatmul.mubr.bf16.gmra.mrb[0].mxu0 %v2808
      %v2922 = vpop.f32.mrb[0].mxu0
      %v2923 = vadd.f32 %v2772, %v2922
      %v2924 = vpop.f32.mrb[0].mxu0
      %v2925 = vpop.f32.mrb[0].mxu0
      %v2926 = vadd.f32 %v2772, %v2925
      %v2927 = vpop.f32.mrb[0].mxu0
      %2928 = vmatprep.mubr.bf16.mxu0 0
      %2929 = vmatmul.mubr.bf16.gmra.mrb[0].mxu0 %v2811
      %v2930 = vpop.f32.mrb[0].mxu0
      %v2931 = vadd.f32 %v2772, %v2930
      %v2932 = vpop.f32.mrb[0].mxu0
      %v2933 = vpop.f32.mrb[0].mxu0
      %v2934 = vadd.f32 %v2772, %v2933
      %v2935 = vpop.f32.mrb[0].mxu0
      %2936 = vmatprep.mubr.bf16.mxu0 0
      %2937 = vmatmul.mubr.bf16.gmra.mrb[0].mxu0 %v2814
      %v2938 = vpop.f32.mrb[0].mxu0
      %v2939 = vadd.f32 %v2772, %v2938
      %v2940 = vpop.f32.mrb[0].mxu0
      %v2941 = vpop.f32.mrb[0].mxu0
      %v2942 = vadd.f32 %v2772, %v2941
      %v2943 = vpop.f32.mrb[0].mxu0
      %2944 = vmatprep.mubr.bf16.mxu0 0
      %2945 = vmatmul.mubr.bf16.gmra.mrb[0].mxu0 %v2817
      %v2946 = vpop.f32.mrb[0].mxu0
      %v2947 = vadd.f32 %v2772, %v2946
      %v2948 = vpop.f32.mrb[0].mxu0
      %v2949 = vpop.f32.mrb[0].mxu0
      %v2950 = vadd.f32 %v2772, %v2949
      %v2951 = vpop.f32.mrb[0].mxu0
      %2952 = vmatprep.mubr.bf16.mxu0 0
      %2953 = vmatmul.mubr.bf16.gmra.mrb[0].mxu0 %v2820
      %v2954 = vpop.f32.mrb[0].mxu0
      %v2955 = vadd.f32 %v2772, %v2954
      %v2956 = vpop.f32.mrb[0].mxu0
      %v2957 = vpop.f32.mrb[0].mxu0
      %v2958 = vadd.f32 %v2772, %v2957
      %v2959 = vpop.f32.mrb[0].mxu0
      %2960 = vmatprep.mubr.bf16.mxu0 0
      %2961 = vmatmul.mubr.bf16.gmra.mrb[0].mxu0 %v2823
      %v2962 = vpop.f32.mrb[0].mxu0
      %v2963 = vadd.f32 %v2772, %v2962
      %v2964 = vpop.f32.mrb[0].mxu0
      %v2965 = vpop.f32.mrb[0].mxu0
      %v2966 = vadd.f32 %v2772, %v2965
      %v2967 = vpop.f32.mrb[0].mxu0
      %2968 = vmatprep.mubr.bf16.mxu0 0
      %2969 = vmatmul.mubr.bf16.gmra.mrb[0].mxu0 %v2826
      %v2970 = vpop.f32.mrb[0].mxu0
      %v2971 = vadd.f32 %v2772, %v2970
      %v2972 = vpop.f32.mrb[0].mxu0
      %v2973 = vpop.f32.mrb[0].mxu0
      %v2974 = vadd.f32 %v2772, %v2973
      %v2975 = vpop.f32.mrb[0].mxu0
      %2976 = vmatprep.mubr.bf16.mxu0 0
      %2977 = vmatmul.mubr.bf16.gmra.mrb[0].mxu0 %v2829
      %v2978 = vpop.f32.mrb[0].mxu0
      %v2979 = vadd.f32 %v2772, %v2978
      %v2980 = vpop.f32.mrb[0].mxu0
      %v2981 = vpop.f32.mrb[0].mxu0
      %v2982 = vadd.f32 %v2772, %v2981
      %v2983 = vpop.f32.mrb[0].mxu0
      %2984 = vmatprep.mubr.bf16.mxu0 0
      %2985 = vmatmul.mubr.bf16.gmra.mrb[0].mxu0 %v2832
      %v2986 = vpop.f32.mrb[0].mxu0
      %v2987 = vadd.f32 %v2772, %v2986
      %v2988 = vpop.f32.mrb[0].mxu0
      %v2989 = vpop.f32.mrb[0].mxu0
      %v2990 = vadd.f32 %v2772, %v2989
      %v2991 = vpop.f32.mrb[0].mxu0
      %2992 = vmatprep.mubr.bf16.mxu0 0
      %2993 = vmatmul.mubr.bf16.gmra.mrb[0].mxu0 %v2835
      %v2994 = vpop.f32.mrb[0].mxu0
      %v2995 = vadd.f32 %v2772, %v2994
      %v2996 = vpop.f32.mrb[0].mxu0
      %v2997 = vpop.f32.mrb[0].mxu0
      %v2998 = vadd.f32 %v2772, %v2997
      %v2999 = vpop.f32.mrb[0].mxu0
      %3000 = vdwg.mxu0
      %v3001 = vld [vmem:[%s308] sm:$0xff]
      %v3002 = vld [vmem:[%s308 + $0x8] sm:$0xff]
      %v3003 = vld [vmem:[%s308 + $0x10] sm:$0xff]
      %v3004 = vld [vmem:[%s308 + $0x18] sm:$0xff]
      %v3005 = vld [vmem:[%s308 + $0x20] sm:$0xff]
      %v3006 = vld [vmem:[%s308 + $0x28] sm:$0xff]
      %v3007 = vld [vmem:[%s308 + $0x30] sm:$0xff]
      %v3008 = vld [vmem:[%s308 + $0x38] sm:$0xff]
      %v3009 = vld [vmem:[%s308 + $0x40] sm:$0xff]
      %v3010 = vld [vmem:[%s308 + $0x48] sm:$0xff]
      %v3011 = vld [vmem:[%s308 + $0x50] sm:$0xff]
      %v3012 = vld [vmem:[%s308 + $0x58] sm:$0xff]
      %v3013 = vld [vmem:[%s308 + $0x60] sm:$0xff]
      %v3014 = vld [vmem:[%s308 + $0x68] sm:$0xff]
      %v3015 = vld [vmem:[%s308 + $0x70] sm:$0xff]
      %v3016 = vld [vmem:[%s308 + $0x78] sm:$0xff]
      %v3017 = vld [vmem:[%s308 + $0x80] sm:$0xff]
      %v3018 = vld [vmem:[%s308 + $0x88] sm:$0xff]
      %v3019 = vld [vmem:[%s308 + $0x90] sm:$0xff]
      %v3020 = vld [vmem:[%s308 + $0x98] sm:$0xff]
      %v3021 = vld [vmem:[%s308 + $0xa0] sm:$0xff]
      %v3022 = vld [vmem:[%s308 + $0xa8] sm:$0xff]
      %v3023 = vld [vmem:[%s308 + $0xb0] sm:$0xff]
      %v3024 = vld [vmem:[%s308 + $0xb8] sm:$0xff]
      %v3025 = vld [vmem:[%s308 + $0xc0] sm:$0xff]
      %v3026 = vld [vmem:[%s308 + $0xc8] sm:$0xff]
      %v3027 = vld [vmem:[%s308 + $0xd0] sm:$0xff]
      %v3028 = vld [vmem:[%s308 + $0xd8] sm:$0xff]
      %v3029 = vld [vmem:[%s308 + $0xe0] sm:$0xff]
      %v3030 = vld [vmem:[%s308 + $0xe8] sm:$0xff]
      %v3031 = vld [vmem:[%s308 + $0xf0] sm:$0xff]
      %v3032 = vld [vmem:[%s308 + $0xf8] sm:$0xff]
      %v3033 = vadd.f32 %v3001, %v2875
      %v3034 = vadd.f32 %v3002, %v2878
      %v3035 = vadd.f32 %v3003, %v2883
      %v3036 = vadd.f32 %v3004, %v2886
      %v3037 = vadd.f32 %v3005, %v2891
      %v3038 = vadd.f32 %v3006, %v2894
      %v3039 = vadd.f32 %v3007, %v2899
      %v3040 = vadd.f32 %v3008, %v2902
      %v3041 = vadd.f32 %v3009, %v2907
      %v3042 = vadd.f32 %v3010, %v2910
      %v3043 = vadd.f32 %v3011, %v2915
      %v3044 = vadd.f32 %v3012, %v2918
      %v3045 = vadd.f32 %v3013, %v2923
      %v3046 = vadd.f32 %v3014, %v2926
      %v3047 = vadd.f32 %v3015, %v2931
      %v3048 = vadd.f32 %v3016, %v2934
      %v3049 = vadd.f32 %v3017, %v2939
      %v3050 = vadd.f32 %v3018, %v2942
      %v3051 = vadd.f32 %v3019, %v2947
      %v3052 = vadd.f32 %v3020, %v2950
      %v3053 = vadd.f32 %v3021, %v2955
      %v3054 = vadd.f32 %v3022, %v2958
      %v3055 = vadd.f32 %v3023, %v2963
      %v3056 = vadd.f32 %v3024, %v2966
      %v3057 = vadd.f32 %v3025, %v2971
      %v3058 = vadd.f32 %v3026, %v2974
      %v3059 = vadd.f32 %v3027, %v2979
      %v3060 = vadd.f32 %v3028, %v2982
      %v3061 = vadd.f32 %v3029, %v2987
      %v3062 = vadd.f32 %v3030, %v2990
      %v3063 = vadd.f32 %v3031, %v2995
      %v3064 = vadd.f32 %v3032, %v2998
      %3065 = vst.msk [vmem:[%s328] sm:$0xff] %vm335, %v3033
      %3066 = vst.msk [vmem:[%s328 + $0x8] sm:$0xff] %vm335, %v3034
      %3067 = vst.msk [vmem:[%s328 + $0x10] sm:$0xff] %vm335, %v3035
      %3068 = vst.msk [vmem:[%s328 + $0x18] sm:$0xff] %vm335, %v3036
      %3069 = vst.msk [vmem:[%s328 + $0x20] sm:$0xff] %vm335, %v3037
      %3070 = vst.msk [vmem:[%s328 + $0x28] sm:$0xff] %vm335, %v3038
      %3071 = vst.msk [vmem:[%s328 + $0x30] sm:$0xff] %vm335, %v3039
      %3072 = vst.msk [vmem:[%s328 + $0x38] sm:$0xff] %vm335, %v3040
      %3073 = vst.msk [vmem:[%s328 + $0x40] sm:$0xff] %vm335, %v3041
      %3074 = vst.msk [vmem:[%s328 + $0x48] sm:$0xff] %vm335, %v3042
      %3075 = vst.msk [vmem:[%s328 + $0x50] sm:$0xff] %vm335, %v3043
      %3076 = vst.msk [vmem:[%s328 + $0x58] sm:$0xff] %vm335, %v3044
      %3077 = vst.msk [vmem:[%s328 + $0x60] sm:$0xff] %vm335, %v3045
      %3078 = vst.msk [vmem:[%s328 + $0x68] sm:$0xff] %vm335, %v3046
      %3079 = vst.msk [vmem:[%s328 + $0x70] sm:$0xff] %vm335, %v3047
      %3080 = vst.msk [vmem:[%s328 + $0x78] sm:$0xff] %vm335, %v3048
      %3081 = vst.msk [vmem:[%s328 + $0x80] sm:$0xff] %vm335, %v3049
      %3082 = vst.msk [vmem:[%s328 + $0x88] sm:$0xff] %vm335, %v3050
      %3083 = vst.msk [vmem:[%s328 + $0x90] sm:$0xff] %vm335, %v3051
      %3084 = vst.msk [vmem:[%s328 + $0x98] sm:$0xff] %vm335, %v3052
      %3085 = vst.msk [vmem:[%s328 + $0xa0] sm:$0xff] %vm335, %v3053
      %3086 = vst.msk [vmem:[%s328 + $0xa8] sm:$0xff] %vm335, %v3054
      %3087 = vst.msk [vmem:[%s328 + $0xb0] sm:$0xff] %vm335, %v3055
      %3088 = vst.msk [vmem:[%s328 + $0xb8] sm:$0xff] %vm335, %v3056
      %3089 = vst.msk [vmem:[%s328 + $0xc0] sm:$0xff] %vm335, %v3057
      %3090 = vst.msk [vmem:[%s328 + $0xc8] sm:$0xff] %vm335, %v3058
      %3091 = vst.msk [vmem:[%s328 + $0xd0] sm:$0xff] %vm335, %v3059
      %3092 = vst.msk [vmem:[%s328 + $0xd8] sm:$0xff] %vm335, %v3060
      %3093 = vst.msk [vmem:[%s328 + $0xe0] sm:$0xff] %vm335, %v3061
      %3094 = vst.msk [vmem:[%s328 + $0xe8] sm:$0xff] %vm335, %v3062
      %3095 = vst.msk [vmem:[%s328 + $0xf0] sm:$0xff] %vm335, %v3063
      %3096 = vst.msk [vmem:[%s328 + $0xf8] sm:$0xff] %vm335, %v3064
      %s3097 = smul.u32 16, %s22
      %p3098 = scmp.lt.s32.totalorder %s21, 1
      %s3099 = scalar_select %p3098, %s21, 1
      %p3100 = scmp.lt.s32.totalorder %s3097, 15
      %s3101 = scalar_select %p3100, %s3097, 15
      %s3102 = smul.addr %s3101, 2
      %s3103 = smul.addr %s3099, 32
      %s3104 = sadd.s32 %s3102, %s3103
      %s3105 = smul.addr %s3104, 8
      %s3106 = scalar_lea.vmem %s6, %s3105
      // Predicated region
      $region49: #{tpu_custom_call.1} parent=43 // pred_check
        %p3107 = pneg %p189
      $region50: #{tpu_custom_call.1} parent=43 // pred_check_branch
        %3109 = sbr.rel (%p3107) target = $region52
      $region51: #{tpu_custom_call.1} parent=43 // pred_region
        %s3110 = smul.u32 16, %s22
      $region52: #{tpu_custom_call.1} parent=43 // pred_fallthru
        _
    $region44: #{tpu_custom_call.1} parent=5 // pred_fallthru
      _
    %p3111 = scmp.le.s32.totalorder 2, %s12
    // Predicated region
    $region53: #{tpu_custom_call.1} parent=5 // pred_check
      %p3112 = pneg %p3111
    $region54: #{tpu_custom_call.1} parent=5 // pred_check_branch
      %3114 = sbr.rel (%p3112) target = $region56
    $region55: #{tpu_custom_call.1} parent=5 // pred_region
      %s3115 = ssub.s32 %s12, 2
      // Predicated region
      $region57: #{tpu_custom_call.1} parent=55 // pred_check
        %p3116 = pneg %p195
      $region58: #{tpu_custom_call.1} parent=55 // pred_check_branch
        %3118 = sbr.rel (%p3116) target = $region60
      $region59: #{tpu_custom_call.1} parent=55 // pred_region
        %s3119 = smul.u32 16, %s24
        %p3120 = scmp.lt.s32.totalorder %s23, 1
        %s3121 = scalar_select %p3120, %s23, 1
        %p3122 = scmp.lt.s32.totalorder %s3119, 15
        %s3123 = scalar_select %p3122, %s3119, 15
        %s3124 = smul.addr %s3123, 2
        %s3125 = smul.addr %s3121, 32
        %s3126 = sadd.s32 %s3124, %s3125
        %s3127 = smul.addr %s3126, 8
        %s3128 = scalar_lea.vmem %s6, %s3127
      $region60: #{tpu_custom_call.1} parent=55 // pred_fallthru
        _
    $region56: #{tpu_custom_call.1} parent=5 // pred_fallthru
      _
  $region6: #{tpu_custom_call.1} parent=0 // loop_footer
    %s16 = sadd.s32 1, %s12
  $region7: #{tpu_custom_call.1} parent=0 // loop_footer_branch
    %11 = sbr.rel target = $region3
  $region8: #{tpu_custom_call.1} parent=0 // loop_exit
    _

</llo_original>
